<compile_context>
chip_gen: v6e
topology: v6e:2x2x1
jax: 0.10.0
libtpu: 0.0.40
codegen_flags: <defaults>
</compile_context>

<pallas_src>
import math
import numpy as np
import jax
import jax.numpy as jnp
from jax.experimental import pallas as pl
from jax.experimental.pallas import tpu as pltpu

_SQRT1_2 = 0.7071067811865476

# ---- static sizes -----------------------------------------------------------
C1_IN, C1_OUT, K1 = 2, 9, 3
H_IN = 16
H1 = (H_IN - 1) - 2 * 2 + K1              # 14
C2_IN, C2_OUT, K2 = 9, 6, 4
L2_IN = H1 * H1                           # 196 (flattened spatial length)
L2_OUT = (L2_IN - 1) * 2 - 2 * 1 + K2     # 392
C3_IN, C3_OUT, K3 = 6, 2, 2
L3_OUT = (L2_OUT - 1) * 1 - 0 + K3        # 393
S_LANES = H_IN * H_IN                     # 256: input image flattened onto lanes
N_LANES = 512                             # natural-layout lanes for the 1-D stages

XROWS = 8                                 # padded input rows (ch0, ch1, ones, 0...)
C1P = 16                                  # stage-1 out channels padded 9 -> 16
C2P = 8                                   # stage-2 out channels padded 6 -> 8
K1COLS = K1 * K1 * XROWS                  # 72  (9 taps x 8 aligned rows)
K2COLS = K2 * C1P + 8                     # 72  (4 taps x 16 rows + ones block)
K3COLS = K3 * C2P + 8                     # 24  (2 taps x 8 rows + ones block)


# ---- in-kernel math ---------------------------------------------------------
def _erf(x):
    # Abramowitz & Stegun 7.1.26 polynomial (max abs err ~1.5e-7). The divide is
    # an EUP approx-reciprocal; exp() also runs on the EUP.
    a1, a2, a3, a4, a5 = 0.254829592, -0.284496736, 1.421413741, -1.453152027, 1.061405429
    p = 0.3275911
    sign = jnp.where(x >= 0.0, 1.0, -1.0)
    ax = jnp.abs(x)
    t = pl.reciprocal(1.0 + p * ax, approx=True)
    poly = ((((a5 * t + a4) * t + a3) * t + a2) * t + a1) * t
    return sign * (1.0 - poly * jnp.exp(-ax * ax))


def _gelu(x):
    # exactly as written in the PyTorch forward: (x*0.5) * (erf(x/sqrt(2)) + 1)
    return (x * 0.5) * (_erf(x * _SQRT1_2) + 1.0)


def _mxu(a, b):
    # One full-accuracy f32 MXU pass per stage (no manual hi/lo splitting).
    return jnp.dot(a, b, precision=jax.lax.Precision.HIGHEST,
                   preferred_element_type=jnp.float32)


# ---- single fused kernel ----------------------------------------------------
def fused_model_kernel(x_ref, w1_ref, g_ref, w2_ref, w3_ref, o_ref):
    """Whole forward pass in one kernel; every intermediate stays in VMEM/vregs.

    x_ref : (8, 256)   rows 0,1 = input channels, row 2 = ones (bias1 carrier),
                       rows 3..7 = zeros; spatial flattened s = 16*r + c
    w1_ref: (16, 72)   col 8*t + r, t = 3a+b; col 2 = bias1; oc rows 9..15 zero
    g_ref : (256, 512) bf16 0/1 relayout matrix: g[s, 2m] = 1 iff s = m + 2*(m//14)
    w2_ref: (8, 72)    col 16*k + ic; col 64 = bias2; oc rows 6..7 zero
    w3_ref: (2, 24)    col 8*k + ic;  col 16 = bias3
    o_ref : (2, 393)   final output
    """
    f32 = jnp.float32
    x8 = x_ref[...]                                                   # (8, 256)

    # -- stage 1: ConvTranspose2d(2->9, k=3, s=1, p=2) in s = 16*i + j layout:
    #    pre1[oc, 16i+j] = sum_{ic,a,b} x[ic, i+a, j+b] * w1[ic,oc,2-a,2-b] + b1[oc]
    #    (bias rides on x8 row 2 == ones, weighted only in the unshifted tap).
    taps = []
    for a in range(K1):
        for b in range(K1):
            d = H_IN * a + b                                          # lane shift
            taps.append(x8 if d == 0 else pltpu.roll(x8, S_LANES - d, axis=1))
    p_aug = jnp.concatenate(taps, axis=0)                             # (72, 256)
    pre1 = _mxu(w1_ref[...], p_aug)                                   # (16, 256)

    # -- relayout: compact s=16i+j -> m=14i+j AND stride-2 upsample onto 512 lanes
    #    via the precomputed 0/1 selection matrix on the MXU, then GELU.
    g = g_ref[...].astype(f32)                                        # (256, 512)
    y = _gelu(_mxu(pre1, g))                                          # (16, 512)
    # invariant: y[ic, 2m] = gelu(conv1)[ic, m] for m < 196; all other lanes are 0.

    ones8 = jnp.ones((8, N_LANES), f32)                               # bias block
    lane = jax.lax.broadcasted_iota(jnp.int32, (8, N_LANES), 1)

    # -- stage 2: ConvTranspose1d(9->6, k=4, s=2, p=1) directly in the natural
    #    output layout:  z[oc, j] = sum_{ic,k} y[ic, j+1-k]*w2[ic,oc,k] + b2[oc]
    s2 = jnp.concatenate([
        pltpu.roll(y, N_LANES - 1, axis=1),        # k=0 tap: y[j+1]
        y,                                         # k=1 tap: y[j]
        pltpu.roll(y, 1, axis=1),                  # k=2 tap: y[j-1]
        pltpu.roll(y, 2, axis=1),                  # k=3 tap: y[j-2]
        ones8,                                     # bias block
    ], axis=0)                                     # (72, 512)
    z = jnp.where(lane < L2_OUT, _gelu(_mxu(w2_ref[...], s2)), 0.0)   # (8, 512)

    # -- stage 3: ConvTranspose1d(6->2, k=2, s=1, p=0):
    #    out[oc, n] = sum_ic z[ic,n]*w3[ic,oc,0] + z[ic,n-1]*w3[ic,oc,1] + b3[oc]
    s3 = jnp.concatenate([
        z,                                         # k=0 tap: z[n]
        pltpu.roll(z, 1, axis=1),                  # k=1 tap: z[n-1]
        ones8,                                     # bias block
    ], axis=0)                                     # (24, 512)
    out = _mxu(w3_ref[...], s3)                    # (2, 512)
    o_ref[...] = _gelu(out[:, :L3_OUT])            # single (2, 393) store


# ---- host-side, one-time parameter preprocessing ----------------------------
def _selection_matrix_np():
    g = np.zeros((S_LANES, N_LANES), np.float32)
    for m in range(L2_IN):
        s = m + 2 * (m // H1)                      # 16i+j  <-  m = 14i+j
        g[s, 2 * m] = 1.0
    return g


def prepare_params(w1, b1, w2, b2, w3, b3):
    """Fold flips/transposes/biases into MXU-ready weight slabs. Call once."""
    f32 = jnp.float32

    # stage 1: (16, 72); col 8*t + row,  t = 3a+b,  weight = w1[ic, oc, 2-a, 2-b]
    w1f = jnp.flip(w1, axis=(2, 3))                                   # [ic,oc,a,b]
    w1t = jnp.transpose(w1f, (1, 2, 3, 0)).reshape(C1_OUT, K1 * K1, C1_IN)
    w1t = jnp.pad(w1t, ((0, 0), (0, 0), (0, XROWS - C1_IN)))          # (9, 9, 8)
    w1t = w1t.at[:, 0, 2].set(b1)                  # bias rides x8 row 2 (ones), tap 0
    w1m = jnp.zeros((C1P, K1COLS), f32).at[:C1_OUT].set(w1t.reshape(C1_OUT, K1COLS))

    # stage 2: (8, 72); col 16*k + ic; bias at col 64
    w2t = jnp.transpose(w2, (1, 2, 0))                                # (6, 4, 9)
    w2t = jnp.pad(w2t, ((0, 0), (0, 0), (0, C1P - C2_IN)))            # (6, 4, 16)
    w2m = jnp.zeros((C2P, K2COLS), f32)
    w2m = w2m.at[:C2_OUT, :K2 * C1P].set(w2t.reshape(C2_OUT, K2 * C1P))
    w2m = w2m.at[:C2_OUT, K2 * C1P].set(b2)

    # stage 3: (2, 24); col 8*k + ic; bias at col 16
    w3t = jnp.transpose(w3, (1, 2, 0))                                # (2, 2, 6)
    w3t = jnp.pad(w3t, ((0, 0), (0, 0), (0, C2P - C3_IN)))            # (2, 2, 8)
    w3m = jnp.zeros((C3_OUT, K3COLS), f32)
    w3m = w3m.at[:, :K3 * C2P].set(w3t.reshape(C3_OUT, K3 * C2P))
    w3m = w3m.at[:, K3 * C2P].set(b3)

    g = jnp.asarray(_selection_matrix_np(), jnp.bfloat16)             # (256, 512)
    return w1m, w2m, w3m, g


# ---- per-call wrapper --------------------------------------------------------
_VMEM = pl.BlockSpec(memory_space=pltpu.MemorySpace.VMEM)


def model_forward(x, w1m, w2m, w3m, g):
    # channel-major, spatially-flattened input, padded to 8 sublane-aligned rows;
    # row 2 = ones (bias carrier for stage 1).
    x_flat = x.reshape(C1_IN, S_LANES)
    x8 = jnp.concatenate([x_flat,
                          jnp.ones((1, S_LANES), x.dtype),
                          jnp.zeros((XROWS - C1_IN - 1, S_LANES), x.dtype)], axis=0)

    out = pl.pallas_call(
        fused_model_kernel,
        out_shape=jax.ShapeDtypeStruct((C3_OUT, L3_OUT), jnp.float32),
        in_specs=[_VMEM, _VMEM, _VMEM, _VMEM, _VMEM],
        out_specs=_VMEM,
    )(x8, w1m, g, w2m, w3m)
    return out[None]                               # (1, 2, 393)


# ---- numpy reference (float64, explicit loops) ------------------------------
def _ref_forward(x, w1, b1, w2, b2, w3, b3):
    erf_v = np.vectorize(math.erf)
    gelu = lambda v: 0.5 * v * (1.0 + erf_v(v * _SQRT1_2))
    x = np.asarray(x, np.float64)[0]
    w1, b1 = np.asarray(w1, np.float64), np.asarray(b1, np.float64)
    w2, b2 = np.asarray(w2, np.float64), np.asarray(b2, np.float64)
    w3, b3 = np.asarray(w3, np.float64), np.asarray(b3, np.float64)

    t1 = np.zeros((C1_OUT, H1, H1))
    for ic in range(C1_IN):
        for oc in range(C1_OUT):
            for p in range(H_IN):
                for q in range(H_IN):
                    for kh in range(K1):
                        for kw in range(K1):
                            i, j = p - 2 + kh, q - 2 + kw
                            if 0 <= i < H1 and 0 <= j < H1:
                                t1[oc, i, j] += x[ic, p, q] * w1[ic, oc, kh, kw]
    t6 = gelu(t1 + b1[:, None, None]).reshape(C1_OUT, L2_IN)

    t7 = np.zeros((C2_OUT, L2_OUT))
    for ic in range(C2_IN):
        for oc in range(C2_OUT):
            for p in range(L2_IN):
                for k in range(K2):
                    j = p * 2 - 1 + k
                    if 0 <= j < L2_OUT:
                        t7[oc, j] += t6[ic, p] * w2[ic, oc, k]
    t12 = gelu(t7 + b2[:, None])

    t13 = np.zeros((C3_OUT, L3_OUT))
    for ic in range(C3_IN):
        for oc in range(C3_OUT):
            for p in range(L2_OUT):
                for k in range(K3):
                    t13[oc, p + k] += t12[ic, p] * w3[ic, oc, k]
    return gelu(t13 + b3[:, None])[None]


if __name__ == "__main__":
    key = jax.random.PRNGKey(0)
    kx, kw1, kb1, kw2, kb2, kw3, kb3 = jax.random.split(key, 7)
    x = jax.random.normal(kx, (1, 2, 16, 16), jnp.float32)
    w1 = jax.random.uniform(kw1, (2, 9, 3, 3), jnp.float32, -0.3, 0.3)
    b1 = jax.random.uniform(kb1, (9,), jnp.float32, -0.3, 0.3)
    w2 = jax.random.uniform(kw2, (9, 6, 4), jnp.float32, -0.2, 0.2)
    b2 = jax.random.uniform(kb2, (6,), jnp.float32, -0.2, 0.2)
    w3 = jax.random.uniform(kw3, (6, 2, 2), jnp.float32, -0.3, 0.3)
    b3 = jax.random.uniform(kb3, (2,), jnp.float32, -0.3, 0.3)

    params = prepare_params(w1, b1, w2, b2, w3, b3)   # one-time, outside hot path
    fwd = jax.jit(model_forward)
    out = jax.block_until_ready(fwd(x, *params))
    assert out.shape == (1, 2, 393), out.shape

    ref = _ref_forward(x, w1, b1, w2, b2, w3, b3)
    max_err = float(np.max(np.abs(np.asarray(out, np.float64) - ref)))
    assert max_err < 2e-3, f"max abs error {max_err}"
    print("KERNEL_OK")
</pallas_src>

<mosaic_0001>
module attributes {stable_mosaic.version = 11 : i64} {
  func.func @fused_model_kernel(%arg0: memref<8x256xf32, #tpu.memory_space<vmem>>, %arg1: memref<16x72xf32, #tpu.memory_space<vmem>>, %arg2: memref<256x512xbf16, #tpu.memory_space<vmem>>, %arg3: memref<8x72xf32, #tpu.memory_space<vmem>>, %arg4: memref<2x24xf32, #tpu.memory_space<vmem>>, %arg5: memref<2x393xf32, #tpu.memory_space<vmem>>) attributes {dimension_semantics = [], scalar_prefetch = 0 : i64, scratch_operands = 0 : i64, tpu.core_type = #tpu.core_type<tc>} {
    %c0 = arith.constant 0 : index
    %c0_0 = arith.constant 0 : index
    %0 = vector.load %arg0[%c0, %c0_0] : memref<8x256xf32, #tpu.memory_space<vmem>>, vector<8x256xf32>
    %c255_i32 = arith.constant 255 : i32
    %1 = tpu.dynamic_rotate %0 by %c255_i32 dim 1 : vector<8x256xf32>, i32 -> vector<8x256xf32>
    %c254_i32 = arith.constant 254 : i32
    %2 = tpu.dynamic_rotate %0 by %c254_i32 dim 1 : vector<8x256xf32>, i32 -> vector<8x256xf32>
    %c240_i32 = arith.constant 240 : i32
    %3 = tpu.dynamic_rotate %0 by %c240_i32 dim 1 : vector<8x256xf32>, i32 -> vector<8x256xf32>
    %c239_i32 = arith.constant 239 : i32
    %4 = tpu.dynamic_rotate %0 by %c239_i32 dim 1 : vector<8x256xf32>, i32 -> vector<8x256xf32>
    %c238_i32 = arith.constant 238 : i32
    %5 = tpu.dynamic_rotate %0 by %c238_i32 dim 1 : vector<8x256xf32>, i32 -> vector<8x256xf32>
    %c224_i32 = arith.constant 224 : i32
    %6 = tpu.dynamic_rotate %0 by %c224_i32 dim 1 : vector<8x256xf32>, i32 -> vector<8x256xf32>
    %c223_i32 = arith.constant 223 : i32
    %7 = tpu.dynamic_rotate %0 by %c223_i32 dim 1 : vector<8x256xf32>, i32 -> vector<8x256xf32>
    %c222_i32 = arith.constant 222 : i32
    %8 = tpu.dynamic_rotate %0 by %c222_i32 dim 1 : vector<8x256xf32>, i32 -> vector<8x256xf32>
    %9 = tpu.concatenate %0, %1, %2, %3, %4, %5, %6, %7, %8 in 0 : vector<8x256xf32>, vector<8x256xf32>, vector<8x256xf32>, vector<8x256xf32>, vector<8x256xf32>, vector<8x256xf32>, vector<8x256xf32>, vector<8x256xf32>, vector<8x256xf32> -> vector<72x256xf32>
    %c0_1 = arith.constant 0 : index
    %c0_2 = arith.constant 0 : index
    %10 = vector.load %arg1[%c0_1, %c0_2] : memref<16x72xf32, #tpu.memory_space<vmem>>, vector<16x72xf32>
    %cst = arith.constant dense<0.000000e+00> : vector<16x256xf32>
    %11 = tpu.matmul %10, %9, %cst {dimension_numbers = #tpu.dot_dimension_numbers<[1], [0], [0], [1], [0, 0, 1, 1], [], []>, precision = #tpu.contract_precision<fp32>} : vector<16x72xf32>, vector<72x256xf32>, vector<16x256xf32> -> vector<16x256xf32>
    %c0_3 = arith.constant 0 : index
    %c0_4 = arith.constant 0 : index
    %12 = vector.load %arg2[%c0_3, %c0_4] : memref<256x512xbf16, #tpu.memory_space<vmem>>, vector<256x512xbf16>
    %13 = arith.extf %12 : vector<256x512xbf16> to vector<256x512xf32>
    %cst_5 = arith.constant dense<0.000000e+00> : vector<16x512xf32>
    %14 = tpu.matmul %11, %13, %cst_5 {dimension_numbers = #tpu.dot_dimension_numbers<[1], [0], [0], [1], [0, 0, 1, 1], [], []>, precision = #tpu.contract_precision<fp32>} : vector<16x256xf32>, vector<256x512xf32>, vector<16x512xf32> -> vector<16x512xf32>
    %cst_6 = arith.constant 5.000000e-01 : f32
    %15 = vector.broadcast %cst_6 : f32 to vector<16x512xf32>
    %16 = arith.mulf %14, %15 : vector<16x512xf32>
    %cst_7 = arith.constant 0.707106769 : f32
    %17 = vector.broadcast %cst_7 : f32 to vector<16x512xf32>
    %18 = arith.mulf %14, %17 : vector<16x512xf32>
    %cst_8 = arith.constant 0.000000e+00 : f32
    %19 = vector.broadcast %cst_8 : f32 to vector<16x512xf32>
    %20 = arith.cmpf oge, %18, %19 : vector<16x512xf32>
    %cst_9 = arith.constant 1.000000e+00 : f32
    %cst_10 = arith.constant -1.000000e+00 : f32
    %21 = vector.broadcast %cst_9 : f32 to vector<16x512xf32>
    %22 = vector.broadcast %cst_10 : f32 to vector<16x512xf32>
    %23 = arith.select %20, %21, %22 : vector<16x512xi1>, vector<16x512xf32>
    %24 = math.absf %18 : vector<16x512xf32>
    %cst_11 = arith.constant 0.327591091 : f32
    %25 = vector.broadcast %cst_11 : f32 to vector<16x512xf32>
    %26 = arith.mulf %25, %24 : vector<16x512xf32>
    %cst_12 = arith.constant 1.000000e+00 : f32
    %27 = vector.broadcast %cst_12 : f32 to vector<16x512xf32>
    %28 = arith.addf %27, %26 : vector<16x512xf32>
    %29 = tpu.reciprocal %28 {approx = true} : vector<16x512xf32> -> vector<16x512xf32>
    %cst_13 = arith.constant 1.06140542 : f32
    %30 = vector.broadcast %cst_13 : f32 to vector<16x512xf32>
    %31 = arith.mulf %30, %29 : vector<16x512xf32>
    %cst_14 = arith.constant -1.45315206 : f32
    %32 = vector.broadcast %cst_14 : f32 to vector<16x512xf32>
    %33 = arith.addf %31, %32 : vector<16x512xf32>
    %34 = arith.mulf %33, %29 : vector<16x512xf32>
    %cst_15 = arith.constant 1.42141378 : f32
    %35 = vector.broadcast %cst_15 : f32 to vector<16x512xf32>
    %36 = arith.addf %34, %35 : vector<16x512xf32>
    %37 = arith.mulf %36, %29 : vector<16x512xf32>
    %cst_16 = arith.constant -0.284496725 : f32
    %38 = vector.broadcast %cst_16 : f32 to vector<16x512xf32>
    %39 = arith.addf %37, %38 : vector<16x512xf32>
    %40 = arith.mulf %39, %29 : vector<16x512xf32>
    %cst_17 = arith.constant 0.254829586 : f32
    %41 = vector.broadcast %cst_17 : f32 to vector<16x512xf32>
    %42 = arith.addf %40, %41 : vector<16x512xf32>
    %43 = arith.mulf %42, %29 : vector<16x512xf32>
    %cst_18 = arith.constant 0.000000e+00 : f32
    %44 = vector.broadcast %cst_18 : f32 to vector<16x512xf32>
    %45 = arith.subf %44, %24 : vector<16x512xf32>
    %46 = arith.mulf %45, %24 : vector<16x512xf32>
    %47 = math.exp %46 : vector<16x512xf32>
    %48 = arith.mulf %43, %47 : vector<16x512xf32>
    %cst_19 = arith.constant 1.000000e+00 : f32
    %49 = vector.broadcast %cst_19 : f32 to vector<16x512xf32>
    %50 = arith.subf %49, %48 : vector<16x512xf32>
    %51 = arith.mulf %23, %50 : vector<16x512xf32>
    %cst_20 = arith.constant 1.000000e+00 : f32
    %52 = vector.broadcast %cst_20 : f32 to vector<16x512xf32>
    %53 = arith.addf %51, %52 : vector<16x512xf32>
    %54 = arith.mulf %16, %53 : vector<16x512xf32>
    %cst_21 = arith.constant 1.000000e+00 : f32
    %55 = vector.broadcast %cst_21 : f32 to vector<8x512xf32>
    %56 = tpu.iota {dimensions = array<i32: 1>} : vector<8x512xi32>
    %c511_i32 = arith.constant 511 : i32
    %57 = tpu.dynamic_rotate %54 by %c511_i32 dim 1 : vector<16x512xf32>, i32 -> vector<16x512xf32>
    %c1_i32 = arith.constant 1 : i32
    %58 = tpu.dynamic_rotate %54 by %c1_i32 dim 1 : vector<16x512xf32>, i32 -> vector<16x512xf32>
    %c2_i32 = arith.constant 2 : i32
    %59 = tpu.dynamic_rotate %54 by %c2_i32 dim 1 : vector<16x512xf32>, i32 -> vector<16x512xf32>
    %60 = tpu.concatenate %57, %54, %58, %59, %55 in 0 : vector<16x512xf32>, vector<16x512xf32>, vector<16x512xf32>, vector<16x512xf32>, vector<8x512xf32> -> vector<72x512xf32>
    %c392_i32 = arith.constant 392 : i32
    %61 = vector.broadcast %c392_i32 : i32 to vector<8x512xi32>
    %62 = arith.cmpi slt, %56, %61 : vector<8x512xi32>
    %c0_22 = arith.constant 0 : index
    %c0_23 = arith.constant 0 : index
    %63 = vector.load %arg3[%c0_22, %c0_23] : memref<8x72xf32, #tpu.memory_space<vmem>>, vector<8x72xf32>
    %cst_24 = arith.constant dense<0.000000e+00> : vector<8x512xf32>
    %64 = tpu.matmul %63, %60, %cst_24 {dimension_numbers = #tpu.dot_dimension_numbers<[1], [0], [0], [1], [0, 0, 1, 1], [], []>, precision = #tpu.contract_precision<fp32>} : vector<8x72xf32>, vector<72x512xf32>, vector<8x512xf32> -> vector<8x512xf32>
    %cst_25 = arith.constant 5.000000e-01 : f32
    %65 = vector.broadcast %cst_25 : f32 to vector<8x512xf32>
    %66 = arith.mulf %64, %65 : vector<8x512xf32>
    %cst_26 = arith.constant 0.707106769 : f32
    %67 = vector.broadcast %cst_26 : f32 to vector<8x512xf32>
    %68 = arith.mulf %64, %67 : vector<8x512xf32>
    %cst_27 = arith.constant 0.000000e+00 : f32
    %69 = vector.broadcast %cst_27 : f32 to vector<8x512xf32>
    %70 = arith.cmpf oge, %68, %69 : vector<8x512xf32>
    %cst_28 = arith.constant 1.000000e+00 : f32
    %cst_29 = arith.constant -1.000000e+00 : f32
    %71 = vector.broadcast %cst_28 : f32 to vector<8x512xf32>
    %72 = vector.broadcast %cst_29 : f32 to vector<8x512xf32>
    %73 = arith.select %70, %71, %72 : vector<8x512xi1>, vector<8x512xf32>
    %74 = math.absf %68 : vector<8x512xf32>
    %cst_30 = arith.constant 0.327591091 : f32
    %75 = vector.broadcast %cst_30 : f32 to vector<8x512xf32>
    %76 = arith.mulf %75, %74 : vector<8x512xf32>
    %cst_31 = arith.constant 1.000000e+00 : f32
    %77 = vector.broadcast %cst_31 : f32 to vector<8x512xf32>
    %78 = arith.addf %77, %76 : vector<8x512xf32>
    %79 = tpu.reciprocal %78 {approx = true} : vector<8x512xf32> -> vector<8x512xf32>
    %cst_32 = arith.constant 1.06140542 : f32
    %80 = vector.broadcast %cst_32 : f32 to vector<8x512xf32>
    %81 = arith.mulf %80, %79 : vector<8x512xf32>
    %cst_33 = arith.constant -1.45315206 : f32
    %82 = vector.broadcast %cst_33 : f32 to vector<8x512xf32>
    %83 = arith.addf %81, %82 : vector<8x512xf32>
    %84 = arith.mulf %83, %79 : vector<8x512xf32>
    %cst_34 = arith.constant 1.42141378 : f32
    %85 = vector.broadcast %cst_34 : f32 to vector<8x512xf32>
    %86 = arith.addf %84, %85 : vector<8x512xf32>
    %87 = arith.mulf %86, %79 : vector<8x512xf32>
    %cst_35 = arith.constant -0.284496725 : f32
    %88 = vector.broadcast %cst_35 : f32 to vector<8x512xf32>
    %89 = arith.addf %87, %88 : vector<8x512xf32>
    %90 = arith.mulf %89, %79 : vector<8x512xf32>
    %cst_36 = arith.constant 0.254829586 : f32
    %91 = vector.broadcast %cst_36 : f32 to vector<8x512xf32>
    %92 = arith.addf %90, %91 : vector<8x512xf32>
    %93 = arith.mulf %92, %79 : vector<8x512xf32>
    %cst_37 = arith.constant 0.000000e+00 : f32
    %94 = vector.broadcast %cst_37 : f32 to vector<8x512xf32>
    %95 = arith.subf %94, %74 : vector<8x512xf32>
    %96 = arith.mulf %95, %74 : vector<8x512xf32>
    %97 = math.exp %96 : vector<8x512xf32>
    %98 = arith.mulf %93, %97 : vector<8x512xf32>
    %cst_38 = arith.constant 1.000000e+00 : f32
    %99 = vector.broadcast %cst_38 : f32 to vector<8x512xf32>
    %100 = arith.subf %99, %98 : vector<8x512xf32>
    %101 = arith.mulf %73, %100 : vector<8x512xf32>
    %cst_39 = arith.constant 1.000000e+00 : f32
    %102 = vector.broadcast %cst_39 : f32 to vector<8x512xf32>
    %103 = arith.addf %101, %102 : vector<8x512xf32>
    %104 = arith.mulf %66, %103 : vector<8x512xf32>
    %cst_40 = arith.constant 0.000000e+00 : f32
    %105 = vector.broadcast %cst_40 : f32 to vector<8x512xf32>
    %106 = arith.select %62, %104, %105 : vector<8x512xi1>, vector<8x512xf32>
    %c1_i32_41 = arith.constant 1 : i32
    %107 = tpu.dynamic_rotate %106 by %c1_i32_41 dim 1 : vector<8x512xf32>, i32 -> vector<8x512xf32>
    %108 = tpu.concatenate %106, %107, %55 in 0 : vector<8x512xf32>, vector<8x512xf32>, vector<8x512xf32> -> vector<24x512xf32>
    %c0_42 = arith.constant 0 : index
    %c0_43 = arith.constant 0 : index
    %109 = vector.load %arg4[%c0_42, %c0_43] : memref<2x24xf32, #tpu.memory_space<vmem>>, vector<2x24xf32>
    %cst_44 = arith.constant dense<0.000000e+00> : vector<2x512xf32>
    %110 = tpu.matmul %109, %108, %cst_44 {dimension_numbers = #tpu.dot_dimension_numbers<[1], [0], [0], [1], [0, 0, 1, 1], [], []>, precision = #tpu.contract_precision<fp32>} : vector<2x24xf32>, vector<24x512xf32>, vector<2x512xf32> -> vector<2x512xf32>
    %111 = vector.extract_strided_slice %110 {offsets = [0, 0], sizes = [2, 393], strides = [1, 1]} : vector<2x512xf32> to vector<2x393xf32>
    %cst_45 = arith.constant 5.000000e-01 : f32
    %112 = vector.broadcast %cst_45 : f32 to vector<2x393xf32>
    %113 = arith.mulf %111, %112 : vector<2x393xf32>
    %cst_46 = arith.constant 0.707106769 : f32
    %114 = vector.broadcast %cst_46 : f32 to vector<2x393xf32>
    %115 = arith.mulf %111, %114 : vector<2x393xf32>
    %cst_47 = arith.constant 0.000000e+00 : f32
    %116 = vector.broadcast %cst_47 : f32 to vector<2x393xf32>
    %117 = arith.cmpf oge, %115, %116 : vector<2x393xf32>
    %cst_48 = arith.constant 1.000000e+00 : f32
    %cst_49 = arith.constant -1.000000e+00 : f32
    %118 = vector.broadcast %cst_48 : f32 to vector<2x393xf32>
    %119 = vector.broadcast %cst_49 : f32 to vector<2x393xf32>
    %120 = arith.select %117, %118, %119 : vector<2x393xi1>, vector<2x393xf32>
    %121 = math.absf %115 : vector<2x393xf32>
    %cst_50 = arith.constant 0.327591091 : f32
    %122 = vector.broadcast %cst_50 : f32 to vector<2x393xf32>
    %123 = arith.mulf %122, %121 : vector<2x393xf32>
    %cst_51 = arith.constant 1.000000e+00 : f32
    %124 = vector.broadcast %cst_51 : f32 to vector<2x393xf32>
    %125 = arith.addf %124, %123 : vector<2x393xf32>
    %126 = tpu.reciprocal %125 {approx = true} : vector<2x393xf32> -> vector<2x393xf32>
    %cst_52 = arith.constant 1.06140542 : f32
    %127 = vector.broadcast %cst_52 : f32 to vector<2x393xf32>
    %128 = arith.mulf %127, %126 : vector<2x393xf32>
    %cst_53 = arith.constant -1.45315206 : f32
    %129 = vector.broadcast %cst_53 : f32 to vector<2x393xf32>
    %130 = arith.addf %128, %129 : vector<2x393xf32>
    %131 = arith.mulf %130, %126 : vector<2x393xf32>
    %cst_54 = arith.constant 1.42141378 : f32
    %132 = vector.broadcast %cst_54 : f32 to vector<2x393xf32>
    %133 = arith.addf %131, %132 : vector<2x393xf32>
    %134 = arith.mulf %133, %126 : vector<2x393xf32>
    %cst_55 = arith.constant -0.284496725 : f32
    %135 = vector.broadcast %cst_55 : f32 to vector<2x393xf32>
    %136 = arith.addf %134, %135 : vector<2x393xf32>
    %137 = arith.mulf %136, %126 : vector<2x393xf32>
    %cst_56 = arith.constant 0.254829586 : f32
    %138 = vector.broadcast %cst_56 : f32 to vector<2x393xf32>
    %139 = arith.addf %137, %138 : vector<2x393xf32>
    %140 = arith.mulf %139, %126 : vector<2x393xf32>
    %cst_57 = arith.constant 0.000000e+00 : f32
    %141 = vector.broadcast %cst_57 : f32 to vector<2x393xf32>
    %142 = arith.subf %141, %121 : vector<2x393xf32>
    %143 = arith.mulf %142, %121 : vector<2x393xf32>
    %144 = math.exp %143 : vector<2x393xf32>
    %145 = arith.mulf %140, %144 : vector<2x393xf32>
    %cst_58 = arith.constant 1.000000e+00 : f32
    %146 = vector.broadcast %cst_58 : f32 to vector<2x393xf32>
    %147 = arith.subf %146, %145 : vector<2x393xf32>
    %148 = arith.mulf %120, %147 : vector<2x393xf32>
    %cst_59 = arith.constant 1.000000e+00 : f32
    %149 = vector.broadcast %cst_59 : f32 to vector<2x393xf32>
    %150 = arith.addf %148, %149 : vector<2x393xf32>
    %151 = arith.mulf %113, %150 : vector<2x393xf32>
    %c0_60 = arith.constant 0 : index
    %c0_61 = arith.constant 0 : index
    %152 = vector.load %arg5[%c0_60, %c0_61] : memref<2x393xf32, #tpu.memory_space<vmem>>, vector<2x393xf32>
    tpu.vector_store %arg5[%c0_60, %c0_61], %151 {strides = array<i32>} : memref<2x393xf32, #tpu.memory_space<vmem>>, vector<2x393xf32>,
    return
  }
}

</mosaic_0001>

<llo_original>
// kernel: model_forward.1
$region0: #{model_forward.1}
  #allocation0 [shape = 'u32[]', space=smem, size = 0x4, offset = 0x4, fixed_abs, tag = 'smem constant byte address 0x4 - core index']
  #allocation1 [shape = 'u32[144,128]{1,0:T(1,128)}', space=vmem, size = 0x12000, scoped, tag = 'internal scratch']
  %s0 = inlined_call_operand.vmem [shape: f32[8,256], index: 0, kind: input, shape index: {}]
  %s1 = inlined_call_operand.vmem [shape: f32[16,72], index: 1, kind: input, shape index: {}]
  %s2 = inlined_call_operand.hbm [shape: bf16[256,512], index: 2, kind: input, shape index: {}]
  %s3 = inlined_call_operand.vmem [shape: f32[8,72], index: 3, kind: input, shape index: {}]
  %s4 = inlined_call_operand.vmem [shape: f32[2,24], index: 4, kind: input, shape index: {}]
  %s5 = inlined_call_operand.hbm [shape: f32[2,393], index: 5, kind: output, shape index: {}]
  %s6 = sld [smem:[#allocation0]]
  $region34: #{model_forward.1} parent=0
    _
  %s8 = ssub.s32 1, %s6
  %s9 = scalar_select 0, %s8, %s6
  $region1: #{model_forward.1} parent=0
    #allocation2 [shape = 'u8[262144]{0}', space=vmem, size = 0x40000, scoped, tag = 'input window, operand 2, single buffered']
    #allocation3 [shape = 's32[1]{0}', space=sflag, size = 0x4, scoped, tag = 'scoped memory for model_forward.1']
    #allocation4 [shape = 's32[1]{0}', space=sflag, size = 0x4, scoped, tag = 'scoped memory for model_forward.1']
    #allocation5 [shape = 'u8[4096]{0}', space=vmem, size = 0x1000, scoped, tag = 'output window, operand 0, single buffered']
    %10 = vsyncpa [#allocation3], 0
    %11 = vsyncpa [#allocation4], 0
    // Predicated region
    $region2: #{model_forward.1} parent=1 // pred_check
      _
    $region3: #{model_forward.1} parent=1 // pred_check_branch
      %13 = sbr.rel (0) target = $region5
    $region4: #{model_forward.1} parent=1 // pred_region
      _
    $region5: #{model_forward.1} parent=1 // pred_fallthru
      _
    // Predicated region
    $region6: #{model_forward.1} parent=1 // pred_check
      _
    $region7: #{model_forward.1} parent=1 // pred_check_branch
      %15 = sbr.rel (0) target = $region9
    $region8: #{model_forward.1} parent=1 // pred_region
      _
    $region9: #{model_forward.1} parent=1 // pred_fallthru
      _
    // Predicated region
    $region10: #{model_forward.1} parent=1 // pred_check
      _
    $region11: #{model_forward.1} parent=1 // pred_check_branch
      %17 = sbr.rel (0) target = $region13
    $region12: #{model_forward.1} parent=1 // pred_region
      %s19 = ssub.s32 8192, 8192
      %20 = vsyncadd [#allocation3], %s19
      %s21 = sshll.u32 [#allocation2], 4
      %s22 = int_to_ptr.vmem [resolvable:$true] %s21
      %27 = dma.hbm_to_vmem [thread:$0]  %s2, 8192, %s22, [#allocation3], 256, 256, 16
    $region13: #{model_forward.1} parent=1 // pred_fallthru
      _
    // Predicated region
    $region14: #{model_forward.1} parent=1 // pred_check
      _
    $region15: #{model_forward.1} parent=1 // pred_check_branch
      %29 = sbr.rel (0) target = $region17
    $region16: #{model_forward.1} parent=1 // pred_region
      _
    $region17: #{model_forward.1} parent=1 // pred_fallthru
      _
    // Predicated region
    $region18: #{model_forward.1} parent=1 // pred_check
      _
    $region19: #{model_forward.1} parent=1 // pred_check_branch
      %31 = sbr.rel (0) target = $region21
    $region20: #{model_forward.1} parent=1 // pred_region
      _
    $region21: #{model_forward.1} parent=1 // pred_fallthru
      _
    // Predicated region
    $region22: #{model_forward.1} parent=1 // pred_check
      _
    $region23: #{model_forward.1} parent=1 // pred_check_branch
      %33 = sbr.rel (0) target = $region25
    $region24: #{model_forward.1} parent=1 // pred_region
      %34 = dma.done [#allocation3], 8192
    $region25: #{model_forward.1} parent=1 // pred_fallthru
      _
    %v35 = vld [vmem:[%s0] sm:$0xff]
    %v36 = vld [vmem:[%s0 + $0x8] sm:$0xff]
    %37 = vrot.lane.b32.xlu0 %v35, 127
    %v38 = vpop.permute.xlu0 %37
    %39 = vrot.lane.b32.xlu0 %v36, 127
    %v40 = vpop.permute.xlu0 %39
    %v41 = vlaneseq
    %v42 = vand.u32 %v41, 127
    %vm43 = vcmp.lt.s32.totalorder %v42, 127
    %v44 = vsel %vm43, %v38, %v40
    %v45 = vsel %vm43, %v40, %v38
    %46 = vrot.lane.b32.xlu0 %v35, 126
    %v47 = vpop.permute.xlu0 %46
    %48 = vrot.lane.b32.xlu0 %v36, 126
    %v49 = vpop.permute.xlu0 %48
    %vm50 = vcmp.lt.s32.totalorder %v42, 126
    %v51 = vsel %vm50, %v47, %v49
    %v52 = vsel %vm50, %v49, %v47
    %53 = vrot.lane.b32.xlu0 %v35, 112
    %v54 = vpop.permute.xlu0 %53
    %55 = vrot.lane.b32.xlu0 %v36, 112
    %v56 = vpop.permute.xlu0 %55
    %vm57 = vcmp.lt.s32.totalorder %v42, 112
    %v58 = vsel %vm57, %v54, %v56
    %v59 = vsel %vm57, %v56, %v54
    %60 = vrot.lane.b32.xlu0 %v35, 111
    %v61 = vpop.permute.xlu0 %60
    %62 = vrot.lane.b32.xlu0 %v36, 111
    %v63 = vpop.permute.xlu0 %62
    %vm64 = vcmp.lt.s32.totalorder %v42, 111
    %v65 = vsel %vm64, %v61, %v63
    %v66 = vsel %vm64, %v63, %v61
    %67 = vrot.lane.b32.xlu0 %v35, 110
    %v68 = vpop.permute.xlu0 %67
    %69 = vrot.lane.b32.xlu0 %v36, 110
    %v70 = vpop.permute.xlu0 %69
    %vm71 = vcmp.lt.s32.totalorder %v42, 110
    %v72 = vsel %vm71, %v68, %v70
    %v73 = vsel %vm71, %v70, %v68
    %74 = vrot.lane.b32.xlu0 %v35, 96
    %v75 = vpop.permute.xlu0 %74
    %76 = vrot.lane.b32.xlu0 %v36, 96
    %v77 = vpop.permute.xlu0 %76
    %vm78 = vcmp.lt.s32.totalorder %v42, 96
    %v79 = vsel %vm78, %v75, %v77
    %v80 = vsel %vm78, %v77, %v75
    %81 = vrot.lane.b32.xlu0 %v35, 95
    %v82 = vpop.permute.xlu0 %81
    %83 = vrot.lane.b32.xlu0 %v36, 95
    %v84 = vpop.permute.xlu0 %83
    %vm85 = vcmp.lt.s32.totalorder %v42, 95
    %v86 = vsel %vm85, %v82, %v84
    %v87 = vsel %vm85, %v84, %v82
    %88 = vrot.lane.b32.xlu0 %v35, 94
    %v89 = vpop.permute.xlu0 %88
    %90 = vrot.lane.b32.xlu0 %v36, 94
    %v91 = vpop.permute.xlu0 %90
    %vm92 = vcmp.lt.s32.totalorder %v42, 94
    %v93 = vsel %vm92, %v89, %v91
    %v94 = vsel %vm92, %v91, %v89
    %v95 = vld [vmem:[%s1] sm:$0xff]
    %v96 = vld [vmem:[%s1 + $0x8] sm:$0xff]
    %vm97 = vcmask 588800
    %v99 = vsel %vm97, %v95, 0
    %v102 = vsel %vm97, %v96, 0
    %104 = vmatprep.subr.mxu0 0.0
    %105 = vmatpush1.msra.mxu0 0.0
    %106 = vmatprep.subr.mxu0 0.0
    %107 = vmatpush1.msra.mxu0 0.0
    %108 = vmatprep.subr.mxu0 0.0
    %109 = vmatpush1.msra.mxu0 0.0
    %110 = vmatprep.subr.mxu0 0.0
    %111 = vmatpush1.msra.mxu0 0.0
    %112 = vmatprep.subr.mxu0 0.0
    %113 = vmatpush1.msra.mxu0 0.0
    %114 = vmatprep.subr.mxu0 0.0
    %115 = vmatpush1.msra.mxu0 0.0
    %116 = vmatprep.subr.mxu0 0.0
    %117 = vmatpush1.msra.mxu0 0.0
    %v118 = vand.u32 %v94, 4294901760
    %119 = vmatprep.subr.mxu0 %v118
    %v120 = vand.u32 %v93, 4294901760
    %121 = vmatpush1.msra.mxu0 %v120
    %v122 = vand.u32 %v87, 4294901760
    %123 = vmatprep.subr.mxu0 %v122
    %v124 = vand.u32 %v86, 4294901760
    %125 = vmatpush1.msra.mxu0 %v124
    %v126 = vand.u32 %v80, 4294901760
    %127 = vmatprep.subr.mxu0 %v126
    %v128 = vand.u32 %v79, 4294901760
    %129 = vmatpush1.msra.mxu0 %v128
    %v130 = vand.u32 %v73, 4294901760
    %131 = vmatprep.subr.mxu0 %v130
    %v132 = vand.u32 %v72, 4294901760
    %133 = vmatpush1.msra.mxu0 %v132
    %v134 = vand.u32 %v66, 4294901760
    %135 = vmatprep.subr.mxu0 %v134
    %v136 = vand.u32 %v65, 4294901760
    %137 = vmatpush1.msra.mxu0 %v136
    %v138 = vand.u32 %v59, 4294901760
    %139 = vmatprep.subr.mxu0 %v138
    %v140 = vand.u32 %v58, 4294901760
    %141 = vmatpush1.msra.mxu0 %v140
    %v142 = vand.u32 %v52, 4294901760
    %143 = vmatprep.subr.mxu0 %v142
    %v144 = vand.u32 %v51, 4294901760
    %145 = vmatpush1.msra.mxu0 %v144
    %v146 = vand.u32 %v45, 4294901760
    %147 = vmatprep.subr.mxu0 %v146
    %v148 = vand.u32 %v44, 4294901760
    %149 = vmatpush1.msra.mxu0 %v148
    %v150 = vand.u32 %v36, 4294901760
    %151 = vmatprep.subr.mxu0 %v150
    %v152 = vand.u32 %v35, 4294901760
    %153 = vmatpush1.msra.mxu0 %v152
    %154 = vmatprep.subr.mxu0 0.0
    %155 = vmatpush2.msra.mxu0 0.0
    %156 = vmatprep.subr.mxu0 0.0
    %157 = vmatpush2.msra.mxu0 0.0
    %158 = vmatprep.subr.mxu0 0.0
    %159 = vmatpush2.msra.mxu0 0.0
    %160 = vmatprep.subr.mxu0 0.0
    %161 = vmatpush2.msra.mxu0 0.0
    %162 = vmatprep.subr.mxu0 0.0
    %163 = vmatpush2.msra.mxu0 0.0
    %164 = vmatprep.subr.mxu0 0.0
    %165 = vmatpush2.msra.mxu0 0.0
    %166 = vmatprep.subr.mxu0 0.0
    %167 = vmatpush2.msra.mxu0 0.0
    %168 = vmatprep.subr.mxu0 0.0
    %169 = vmatpush2.msra.mxu0 0.0
    %170 = vmatprep.subr.mxu0 0.0
    %171 = vmatpush2.msra.mxu0 0.0
    %172 = vmatprep.subr.mxu0 0.0
    %173 = vmatpush2.msra.mxu0 0.0
    %174 = vmatprep.subr.mxu0 0.0
    %175 = vmatpush2.msra.mxu0 0.0
    %176 = vmatprep.subr.mxu0 0.0
    %177 = vmatpush2.msra.mxu0 0.0
    %178 = vmatprep.subr.mxu0 0.0
    %179 = vmatpush2.msra.mxu0 0.0
    %180 = vmatprep.subr.mxu0 0.0
    %181 = vmatpush2.msra.mxu0 0.0
    %182 = vmatprep.subr.mxu0 0.0
    %183 = vmatpush2.msra.mxu0 0.0
    %184 = vmatprep.subr.mxu0 0.0
    %185 = vmatpush2.msra.mxu0 0.0
    %186 = vmatprep.mubr.f32.mxu0 0.0
    %v187 = vand.u32 %v99, 4294901760
    %v188 = vsub.f32 %v99, %v187
    %v189 = vand.u32 %v188, 4294901760
    %v190 = vsub.f32 %v188, %v189
    %v191 = vand.u32 %v190, 4294901760
    %192 = vmatmul.mubr.f32.gmra.mxu0 %v191
    %v193 = vpop.f32.mrf.mxu0
    %v194 = vadd.f32 0.0, %v193
    %v195 = vpop.f32.mrf.mxu0
    %v196 = vadd.f32 0.0, %v195
    %197 = vmatprep.mubr.f32.mxu0 0.0
    %v198 = vand.u32 %v102, 4294901760
    %v199 = vsub.f32 %v102, %v198
    %v200 = vand.u32 %v199, 4294901760
    %v201 = vsub.f32 %v199, %v200
    %v202 = vand.u32 %v201, 4294901760
    %203 = vmatmul.mubr.f32.gmra.mxu0 %v202
    %v204 = vpop.f32.mrf.mxu0
    %v205 = vadd.f32 0.0, %v204
    %v206 = vpop.f32.mrf.mxu0
    %v207 = vadd.f32 0.0, %v206
    %208 = vdwg.mxu0
    %209 = vmatprep.subr.mxu0 0.0
    %210 = vmatpush1.msra.mxu0 0.0
    %211 = vmatprep.subr.mxu0 0.0
    %212 = vmatpush1.msra.mxu0 0.0
    %213 = vmatprep.subr.mxu0 0.0
    %214 = vmatpush1.msra.mxu0 0.0
    %215 = vmatprep.subr.mxu0 0.0
    %216 = vmatpush1.msra.mxu0 0.0
    %217 = vmatprep.subr.mxu0 0.0
    %218 = vmatpush1.msra.mxu0 0.0
    %219 = vmatprep.subr.mxu0 0.0
    %220 = vmatpush1.msra.mxu0 0.0
    %221 = vmatprep.subr.mxu0 0.0
    %222 = vmatpush1.msra.mxu0 0.0
    %v223 = vand.u32 %v94, 4294901760
    %v224 = vsub.f32 %v94, %v223
    %v225 = vand.u32 %v224, 4294901760
    %v226 = vsub.f32 %v224, %v225
    %v227 = vand.u32 %v226, 4294901760
    %228 = vmatprep.subr.mxu0 %v227
    %v229 = vand.u32 %v93, 4294901760
    %v230 = vsub.f32 %v93, %v229
    %v231 = vand.u32 %v230, 4294901760
    %v232 = vsub.f32 %v230, %v231
    %v233 = vand.u32 %v232, 4294901760
    %234 = vmatpush1.msra.mxu0 %v233
    %v235 = vand.u32 %v87, 4294901760
    %v236 = vsub.f32 %v87, %v235
    %v237 = vand.u32 %v236, 4294901760
    %v238 = vsub.f32 %v236, %v237
    %v239 = vand.u32 %v238, 4294901760
    %240 = vmatprep.subr.mxu0 %v239
    %v241 = vand.u32 %v86, 4294901760
    %v242 = vsub.f32 %v86, %v241
    %v243 = vand.u32 %v242, 4294901760
    %v244 = vsub.f32 %v242, %v243
    %v245 = vand.u32 %v244, 4294901760
    %246 = vmatpush1.msra.mxu0 %v245
    %v247 = vand.u32 %v80, 4294901760
    %v248 = vsub.f32 %v80, %v247
    %v249 = vand.u32 %v248, 4294901760
    %v250 = vsub.f32 %v248, %v249
    %v251 = vand.u32 %v250, 4294901760
    %252 = vmatprep.subr.mxu0 %v251
    %v253 = vand.u32 %v79, 4294901760
    %v254 = vsub.f32 %v79, %v253
    %v255 = vand.u32 %v254, 4294901760
    %v256 = vsub.f32 %v254, %v255
    %v257 = vand.u32 %v256, 4294901760
    %258 = vmatpush1.msra.mxu0 %v257
    %v259 = vand.u32 %v73, 4294901760
    %v260 = vsub.f32 %v73, %v259
    %v261 = vand.u32 %v260, 4294901760
    %v262 = vsub.f32 %v260, %v261
    %v263 = vand.u32 %v262, 4294901760
    %264 = vmatprep.subr.mxu0 %v263
    %v265 = vand.u32 %v72, 4294901760
    %v266 = vsub.f32 %v72, %v265
    %v267 = vand.u32 %v266, 4294901760
    %v268 = vsub.f32 %v266, %v267
    %v269 = vand.u32 %v268, 4294901760
    %270 = vmatpush1.msra.mxu0 %v269
    %v271 = vand.u32 %v66, 4294901760
    %v272 = vsub.f32 %v66, %v271
    %v273 = vand.u32 %v272, 4294901760
    %v274 = vsub.f32 %v272, %v273
    %v275 = vand.u32 %v274, 4294901760
    %276 = vmatprep.subr.mxu0 %v275
    %v277 = vand.u32 %v65, 4294901760
    %v278 = vsub.f32 %v65, %v277
    %v279 = vand.u32 %v278, 4294901760
    %v280 = vsub.f32 %v278, %v279
    %v281 = vand.u32 %v280, 4294901760
    %282 = vmatpush1.msra.mxu0 %v281
    %v283 = vand.u32 %v59, 4294901760
    %v284 = vsub.f32 %v59, %v283
    %v285 = vand.u32 %v284, 4294901760
    %v286 = vsub.f32 %v284, %v285
    %v287 = vand.u32 %v286, 4294901760
    %288 = vmatprep.subr.mxu0 %v287
    %v289 = vand.u32 %v58, 4294901760
    %v290 = vsub.f32 %v58, %v289
    %v291 = vand.u32 %v290, 4294901760
    %v292 = vsub.f32 %v290, %v291
    %v293 = vand.u32 %v292, 4294901760
    %294 = vmatpush1.msra.mxu0 %v293
    %v295 = vand.u32 %v52, 4294901760
    %v296 = vsub.f32 %v52, %v295
    %v297 = vand.u32 %v296, 4294901760
    %v298 = vsub.f32 %v296, %v297
    %v299 = vand.u32 %v298, 4294901760
    %300 = vmatprep.subr.mxu0 %v299
    %v301 = vand.u32 %v51, 4294901760
    %v302 = vsub.f32 %v51, %v301
    %v303 = vand.u32 %v302, 4294901760
    %v304 = vsub.f32 %v302, %v303
    %v305 = vand.u32 %v304, 4294901760
    %306 = vmatpush1.msra.mxu0 %v305
    %v307 = vand.u32 %v45, 4294901760
    %v308 = vsub.f32 %v45, %v307
    %v309 = vand.u32 %v308, 4294901760
    %v310 = vsub.f32 %v308, %v309
    %v311 = vand.u32 %v310, 4294901760
    %312 = vmatprep.subr.mxu0 %v311
    %v313 = vand.u32 %v44, 4294901760
    %v314 = vsub.f32 %v44, %v313
    %v315 = vand.u32 %v314, 4294901760
    %v316 = vsub.f32 %v314, %v315
    %v317 = vand.u32 %v316, 4294901760
    %318 = vmatpush1.msra.mxu0 %v317
    %v319 = vand.u32 %v36, 4294901760
    %v320 = vsub.f32 %v36, %v319
    %v321 = vand.u32 %v320, 4294901760
    %v322 = vsub.f32 %v320, %v321
    %v323 = vand.u32 %v322, 4294901760
    %324 = vmatprep.subr.mxu0 %v323
    %v325 = vand.u32 %v35, 4294901760
    %v326 = vsub.f32 %v35, %v325
    %v327 = vand.u32 %v326, 4294901760
    %v328 = vsub.f32 %v326, %v327
    %v329 = vand.u32 %v328, 4294901760
    %330 = vmatpush1.msra.mxu0 %v329
    %331 = vmatprep.subr.mxu0 0.0
    %332 = vmatpush2.msra.mxu0 0.0
    %333 = vmatprep.subr.mxu0 0.0
    %334 = vmatpush2.msra.mxu0 0.0
    %335 = vmatprep.subr.mxu0 0.0
    %336 = vmatpush2.msra.mxu0 0.0
    %337 = vmatprep.subr.mxu0 0.0
    %338 = vmatpush2.msra.mxu0 0.0
    %339 = vmatprep.subr.mxu0 0.0
    %340 = vmatpush2.msra.mxu0 0.0
    %341 = vmatprep.subr.mxu0 0.0
    %342 = vmatpush2.msra.mxu0 0.0
    %343 = vmatprep.subr.mxu0 0.0
    %344 = vmatpush2.msra.mxu0 0.0
    %345 = vmatprep.subr.mxu0 0.0
    %346 = vmatpush2.msra.mxu0 0.0
    %347 = vmatprep.subr.mxu0 0.0
    %348 = vmatpush2.msra.mxu0 0.0
    %349 = vmatprep.subr.mxu0 0.0
    %350 = vmatpush2.msra.mxu0 0.0
    %351 = vmatprep.subr.mxu0 0.0
    %352 = vmatpush2.msra.mxu0 0.0
    %353 = vmatprep.subr.mxu0 0.0
    %354 = vmatpush2.msra.mxu0 0.0
    %355 = vmatprep.subr.mxu0 0.0
    %356 = vmatpush2.msra.mxu0 0.0
    %357 = vmatprep.subr.mxu0 0.0
    %358 = vmatpush2.msra.mxu0 0.0
    %359 = vmatprep.subr.mxu0 0.0
    %360 = vmatpush2.msra.mxu0 0.0
    %361 = vmatprep.subr.mxu0 0.0
    %362 = vmatpush2.msra.mxu0 0.0
    %363 = vmatprep.mubr.f32.mxu0 0.0
    %v364 = vand.u32 %v99, 4294901760
    %365 = vmatmul.mubr.f32.gmra.mxu0 %v364
    %v366 = vpop.f32.mrf.mxu0
    %v367 = vadd.f32 %v194, %v366
    %v368 = vpop.f32.mrf.mxu0
    %v369 = vadd.f32 %v196, %v368
    %370 = vmatprep.mubr.f32.mxu0 0.0
    %v371 = vand.u32 %v102, 4294901760
    %372 = vmatmul.mubr.f32.gmra.mxu0 %v371
    %v373 = vpop.f32.mrf.mxu0
    %v374 = vadd.f32 %v205, %v373
    %v375 = vpop.f32.mrf.mxu0
    %v376 = vadd.f32 %v207, %v375
    %377 = vdwg.mxu0
    %378 = vmatprep.subr.mxu0 0.0
    %379 = vmatpush1.msra.mxu0 0.0
    %380 = vmatprep.subr.mxu0 0.0
    %381 = vmatpush1.msra.mxu0 0.0
    %382 = vmatprep.subr.mxu0 0.0
    %383 = vmatpush1.msra.mxu0 0.0
    %384 = vmatprep.subr.mxu0 0.0
    %385 = vmatpush1.msra.mxu0 0.0
    %386 = vmatprep.subr.mxu0 0.0
    %387 = vmatpush1.msra.mxu0 0.0
    %388 = vmatprep.subr.mxu0 0.0
    %389 = vmatpush1.msra.mxu0 0.0
    %390 = vmatprep.subr.mxu0 0.0
    %391 = vmatpush1.msra.mxu0 0.0
    %v392 = vand.u32 %v94, 4294901760
    %v393 = vsub.f32 %v94, %v392
    %394 = vmatprep.subr.mxu0 %v393
    %v395 = vand.u32 %v93, 4294901760
    %v396 = vsub.f32 %v93, %v395
    %397 = vmatpush1.msra.mxu0 %v396
    %v398 = vand.u32 %v87, 4294901760
    %v399 = vsub.f32 %v87, %v398
    %400 = vmatprep.subr.mxu0 %v399
    %v401 = vand.u32 %v86, 4294901760
    %v402 = vsub.f32 %v86, %v401
    %403 = vmatpush1.msra.mxu0 %v402
    %v404 = vand.u32 %v80, 4294901760
    %v405 = vsub.f32 %v80, %v404
    %406 = vmatprep.subr.mxu0 %v405
    %v407 = vand.u32 %v79, 4294901760
    %v408 = vsub.f32 %v79, %v407
    %409 = vmatpush1.msra.mxu0 %v408
    %v410 = vand.u32 %v73, 4294901760
    %v411 = vsub.f32 %v73, %v410
    %412 = vmatprep.subr.mxu0 %v411
    %v413 = vand.u32 %v72, 4294901760
    %v414 = vsub.f32 %v72, %v413
    %415 = vmatpush1.msra.mxu0 %v414
    %v416 = vand.u32 %v66, 4294901760
    %v417 = vsub.f32 %v66, %v416
    %418 = vmatprep.subr.mxu0 %v417
    %v419 = vand.u32 %v65, 4294901760
    %v420 = vsub.f32 %v65, %v419
    %421 = vmatpush1.msra.mxu0 %v420
    %v422 = vand.u32 %v59, 4294901760
    %v423 = vsub.f32 %v59, %v422
    %424 = vmatprep.subr.mxu0 %v423
    %v425 = vand.u32 %v58, 4294901760
    %v426 = vsub.f32 %v58, %v425
    %427 = vmatpush1.msra.mxu0 %v426
    %v428 = vand.u32 %v52, 4294901760
    %v429 = vsub.f32 %v52, %v428
    %430 = vmatprep.subr.mxu0 %v429
    %v431 = vand.u32 %v51, 4294901760
    %v432 = vsub.f32 %v51, %v431
    %433 = vmatpush1.msra.mxu0 %v432
    %v434 = vand.u32 %v45, 4294901760
    %v435 = vsub.f32 %v45, %v434
    %436 = vmatprep.subr.mxu0 %v435
    %v437 = vand.u32 %v44, 4294901760
    %v438 = vsub.f32 %v44, %v437
    %439 = vmatpush1.msra.mxu0 %v438
    %v440 = vand.u32 %v36, 4294901760
    %v441 = vsub.f32 %v36, %v440
    %442 = vmatprep.subr.mxu0 %v441
    %v443 = vand.u32 %v35, 4294901760
    %v444 = vsub.f32 %v35, %v443
    %445 = vmatpush1.msra.mxu0 %v444
    %446 = vmatprep.subr.mxu0 0.0
    %447 = vmatpush2.msra.mxu0 0.0
    %448 = vmatprep.subr.mxu0 0.0
    %449 = vmatpush2.msra.mxu0 0.0
    %450 = vmatprep.subr.mxu0 0.0
    %451 = vmatpush2.msra.mxu0 0.0
    %452 = vmatprep.subr.mxu0 0.0
    %453 = vmatpush2.msra.mxu0 0.0
    %454 = vmatprep.subr.mxu0 0.0
    %455 = vmatpush2.msra.mxu0 0.0
    %456 = vmatprep.subr.mxu0 0.0
    %457 = vmatpush2.msra.mxu0 0.0
    %458 = vmatprep.subr.mxu0 0.0
    %459 = vmatpush2.msra.mxu0 0.0
    %460 = vmatprep.subr.mxu0 0.0
    %461 = vmatpush2.msra.mxu0 0.0
    %462 = vmatprep.subr.mxu0 0.0
    %463 = vmatpush2.msra.mxu0 0.0
    %464 = vmatprep.subr.mxu0 0.0
    %465 = vmatpush2.msra.mxu0 0.0
    %466 = vmatprep.subr.mxu0 0.0
    %467 = vmatpush2.msra.mxu0 0.0
    %468 = vmatprep.subr.mxu0 0.0
    %469 = vmatpush2.msra.mxu0 0.0
    %470 = vmatprep.subr.mxu0 0.0
    %471 = vmatpush2.msra.mxu0 0.0
    %472 = vmatprep.subr.mxu0 0.0
    %473 = vmatpush2.msra.mxu0 0.0
    %474 = vmatprep.subr.mxu0 0.0
    %475 = vmatpush2.msra.mxu0 0.0
    %476 = vmatprep.subr.mxu0 0.0
    %477 = vmatpush2.msra.mxu0 0.0
    %478 = vmatprep.mubr.f32.mxu0 0.0
    %v479 = vand.u32 %v99, 4294901760
    %v480 = vsub.f32 %v99, %v479
    %481 = vmatmul.mubr.f32.gmra.mxu0 %v480
    %v482 = vpop.f32.mrf.mxu0
    %v483 = vadd.f32 %v367, %v482
    %v484 = vpop.f32.mrf.mxu0
    %v485 = vadd.f32 %v369, %v484
    %486 = vmatprep.mubr.f32.mxu0 0.0
    %v487 = vand.u32 %v102, 4294901760
    %v488 = vsub.f32 %v102, %v487
    %489 = vmatmul.mubr.f32.gmra.mxu0 %v488
    %v490 = vpop.f32.mrf.mxu0
    %v491 = vadd.f32 %v374, %v490
    %v492 = vpop.f32.mrf.mxu0
    %v493 = vadd.f32 %v376, %v492
    %494 = vdwg.mxu0
    %495 = vmatprep.subr.mxu0 0.0
    %496 = vmatpush1.msra.mxu0 0.0
    %497 = vmatprep.subr.mxu0 0.0
    %498 = vmatpush1.msra.mxu0 0.0
    %499 = vmatprep.subr.mxu0 0.0
    %500 = vmatpush1.msra.mxu0 0.0
    %501 = vmatprep.subr.mxu0 0.0
    %502 = vmatpush1.msra.mxu0 0.0
    %503 = vmatprep.subr.mxu0 0.0
    %504 = vmatpush1.msra.mxu0 0.0
    %505 = vmatprep.subr.mxu0 0.0
    %506 = vmatpush1.msra.mxu0 0.0
    %507 = vmatprep.subr.mxu0 0.0
    %508 = vmatpush1.msra.mxu0 0.0
    %v509 = vand.u32 %v94, 4294901760
    %510 = vmatprep.subr.mxu0 %v509
    %v511 = vand.u32 %v93, 4294901760
    %512 = vmatpush1.msra.mxu0 %v511
    %v513 = vand.u32 %v87, 4294901760
    %514 = vmatprep.subr.mxu0 %v513
    %v515 = vand.u32 %v86, 4294901760
    %516 = vmatpush1.msra.mxu0 %v515
    %v517 = vand.u32 %v80, 4294901760
    %518 = vmatprep.subr.mxu0 %v517
    %v519 = vand.u32 %v79, 4294901760
    %520 = vmatpush1.msra.mxu0 %v519
    %v521 = vand.u32 %v73, 4294901760
    %522 = vmatprep.subr.mxu0 %v521
    %v523 = vand.u32 %v72, 4294901760
    %524 = vmatpush1.msra.mxu0 %v523
    %v525 = vand.u32 %v66, 4294901760
    %526 = vmatprep.subr.mxu0 %v525
    %v527 = vand.u32 %v65, 4294901760
    %528 = vmatpush1.msra.mxu0 %v527
    %v529 = vand.u32 %v59, 4294901760
    %530 = vmatprep.subr.mxu0 %v529
    %v531 = vand.u32 %v58, 4294901760
    %532 = vmatpush1.msra.mxu0 %v531
    %v533 = vand.u32 %v52, 4294901760
    %534 = vmatprep.subr.mxu0 %v533
    %v535 = vand.u32 %v51, 4294901760
    %536 = vmatpush1.msra.mxu0 %v535
    %v537 = vand.u32 %v45, 4294901760
    %538 = vmatprep.subr.mxu0 %v537
    %v539 = vand.u32 %v44, 4294901760
    %540 = vmatpush1.msra.mxu0 %v539
    %v541 = vand.u32 %v36, 4294901760
    %542 = vmatprep.subr.mxu0 %v541
    %v543 = vand.u32 %v35, 4294901760
    %544 = vmatpush1.msra.mxu0 %v543
    %545 = vmatprep.subr.mxu0 0.0
    %546 = vmatpush2.msra.mxu0 0.0
    %547 = vmatprep.subr.mxu0 0.0
    %548 = vmatpush2.msra.mxu0 0.0
    %549 = vmatprep.subr.mxu0 0.0
    %550 = vmatpush2.msra.mxu0 0.0
    %551 = vmatprep.subr.mxu0 0.0
    %552 = vmatpush2.msra.mxu0 0.0
    %553 = vmatprep.subr.mxu0 0.0
    %554 = vmatpush2.msra.mxu0 0.0
    %555 = vmatprep.subr.mxu0 0.0
    %556 = vmatpush2.msra.mxu0 0.0
    %557 = vmatprep.subr.mxu0 0.0
    %558 = vmatpush2.msra.mxu0 0.0
    %559 = vmatprep.subr.mxu0 0.0
    %560 = vmatpush2.msra.mxu0 0.0
    %561 = vmatprep.subr.mxu0 0.0
    %562 = vmatpush2.msra.mxu0 0.0
    %563 = vmatprep.subr.mxu0 0.0
    %564 = vmatpush2.msra.mxu0 0.0
    %565 = vmatprep.subr.mxu0 0.0
    %566 = vmatpush2.msra.mxu0 0.0
    %567 = vmatprep.subr.mxu0 0.0
    %568 = vmatpush2.msra.mxu0 0.0
    %569 = vmatprep.subr.mxu0 0.0
    %570 = vmatpush2.msra.mxu0 0.0
    %571 = vmatprep.subr.mxu0 0.0
    %572 = vmatpush2.msra.mxu0 0.0
    %573 = vmatprep.subr.mxu0 0.0
    %574 = vmatpush2.msra.mxu0 0.0
    %575 = vmatprep.subr.mxu0 0.0
    %576 = vmatpush2.msra.mxu0 0.0
    %577 = vmatprep.mubr.f32.mxu0 0.0
    %v578 = vand.u32 %v99, 4294901760
    %v579 = vsub.f32 %v99, %v578
    %v580 = vand.u32 %v579, 4294901760
    %581 = vmatmul.mubr.f32.gmra.mxu0 %v580
    %v582 = vpop.f32.mrf.mxu0
    %v583 = vadd.f32 %v483, %v582
    %v584 = vpop.f32.mrf.mxu0
    %v585 = vadd.f32 %v485, %v584
    %586 = vmatprep.mubr.f32.mxu0 0.0
    %v587 = vand.u32 %v102, 4294901760
    %v588 = vsub.f32 %v102, %v587
    %v589 = vand.u32 %v588, 4294901760
    %590 = vmatmul.mubr.f32.gmra.mxu0 %v589
    %v591 = vpop.f32.mrf.mxu0
    %v592 = vadd.f32 %v491, %v591
    %v593 = vpop.f32.mrf.mxu0
    %v594 = vadd.f32 %v493, %v593
    %595 = vdwg.mxu0
    %596 = vmatprep.subr.mxu0 0.0
    %597 = vmatpush1.msra.mxu0 0.0
    %598 = vmatprep.subr.mxu0 0.0
    %599 = vmatpush1.msra.mxu0 0.0
    %600 = vmatprep.subr.mxu0 0.0
    %601 = vmatpush1.msra.mxu0 0.0
    %602 = vmatprep.subr.mxu0 0.0
    %603 = vmatpush1.msra.mxu0 0.0
    %604 = vmatprep.subr.mxu0 0.0
    %605 = vmatpush1.msra.mxu0 0.0
    %606 = vmatprep.subr.mxu0 0.0
    %607 = vmatpush1.msra.mxu0 0.0
    %608 = vmatprep.subr.mxu0 0.0
    %609 = vmatpush1.msra.mxu0 0.0
    %v610 = vand.u32 %v94, 4294901760
    %v611 = vsub.f32 %v94, %v610
    %v612 = vand.u32 %v611, 4294901760
    %613 = vmatprep.subr.mxu0 %v612
    %v614 = vand.u32 %v93, 4294901760
    %v615 = vsub.f32 %v93, %v614
    %v616 = vand.u32 %v615, 4294901760
    %617 = vmatpush1.msra.mxu0 %v616
    %v618 = vand.u32 %v87, 4294901760
    %v619 = vsub.f32 %v87, %v618
    %v620 = vand.u32 %v619, 4294901760
    %621 = vmatprep.subr.mxu0 %v620
    %v622 = vand.u32 %v86, 4294901760
    %v623 = vsub.f32 %v86, %v622
    %v624 = vand.u32 %v623, 4294901760
    %625 = vmatpush1.msra.mxu0 %v624
    %v626 = vand.u32 %v80, 4294901760
    %v627 = vsub.f32 %v80, %v626
    %v628 = vand.u32 %v627, 4294901760
    %629 = vmatprep.subr.mxu0 %v628
    %v630 = vand.u32 %v79, 4294901760
    %v631 = vsub.f32 %v79, %v630
    %v632 = vand.u32 %v631, 4294901760
    %633 = vmatpush1.msra.mxu0 %v632
    %v634 = vand.u32 %v73, 4294901760
    %v635 = vsub.f32 %v73, %v634
    %v636 = vand.u32 %v635, 4294901760
    %637 = vmatprep.subr.mxu0 %v636
    %v638 = vand.u32 %v72, 4294901760
    %v639 = vsub.f32 %v72, %v638
    %v640 = vand.u32 %v639, 4294901760
    %641 = vmatpush1.msra.mxu0 %v640
    %v642 = vand.u32 %v66, 4294901760
    %v643 = vsub.f32 %v66, %v642
    %v644 = vand.u32 %v643, 4294901760
    %645 = vmatprep.subr.mxu0 %v644
    %v646 = vand.u32 %v65, 4294901760
    %v647 = vsub.f32 %v65, %v646
    %v648 = vand.u32 %v647, 4294901760
    %649 = vmatpush1.msra.mxu0 %v648
    %v650 = vand.u32 %v59, 4294901760
    %v651 = vsub.f32 %v59, %v650
    %v652 = vand.u32 %v651, 4294901760
    %653 = vmatprep.subr.mxu0 %v652
    %v654 = vand.u32 %v58, 4294901760
    %v655 = vsub.f32 %v58, %v654
    %v656 = vand.u32 %v655, 4294901760
    %657 = vmatpush1.msra.mxu0 %v656
    %v658 = vand.u32 %v52, 4294901760
    %v659 = vsub.f32 %v52, %v658
    %v660 = vand.u32 %v659, 4294901760
    %661 = vmatprep.subr.mxu0 %v660
    %v662 = vand.u32 %v51, 4294901760
    %v663 = vsub.f32 %v51, %v662
    %v664 = vand.u32 %v663, 4294901760
    %665 = vmatpush1.msra.mxu0 %v664
    %v666 = vand.u32 %v45, 4294901760
    %v667 = vsub.f32 %v45, %v666
    %v668 = vand.u32 %v667, 4294901760
    %669 = vmatprep.subr.mxu0 %v668
    %v670 = vand.u32 %v44, 4294901760
    %v671 = vsub.f32 %v44, %v670
    %v672 = vand.u32 %v671, 4294901760
    %673 = vmatpush1.msra.mxu0 %v672
    %v674 = vand.u32 %v36, 4294901760
    %v675 = vsub.f32 %v36, %v674
    %v676 = vand.u32 %v675, 4294901760
    %677 = vmatprep.subr.mxu0 %v676
    %v678 = vand.u32 %v35, 4294901760
    %v679 = vsub.f32 %v35, %v678
    %v680 = vand.u32 %v679, 4294901760
    %681 = vmatpush1.msra.mxu0 %v680
    %682 = vmatprep.subr.mxu0 0.0
    %683 = vmatpush2.msra.mxu0 0.0
    %684 = vmatprep.subr.mxu0 0.0
    %685 = vmatpush2.msra.mxu0 0.0
    %686 = vmatprep.subr.mxu0 0.0
    %687 = vmatpush2.msra.mxu0 0.0
    %688 = vmatprep.subr.mxu0 0.0
    %689 = vmatpush2.msra.mxu0 0.0
    %690 = vmatprep.subr.mxu0 0.0
    %691 = vmatpush2.msra.mxu0 0.0
    %692 = vmatprep.subr.mxu0 0.0
    %693 = vmatpush2.msra.mxu0 0.0
    %694 = vmatprep.subr.mxu0 0.0
    %695 = vmatpush2.msra.mxu0 0.0
    %696 = vmatprep.subr.mxu0 0.0
    %697 = vmatpush2.msra.mxu0 0.0
    %698 = vmatprep.subr.mxu0 0.0
    %699 = vmatpush2.msra.mxu0 0.0
    %700 = vmatprep.subr.mxu0 0.0
    %701 = vmatpush2.msra.mxu0 0.0
    %702 = vmatprep.subr.mxu0 0.0
    %703 = vmatpush2.msra.mxu0 0.0
    %704 = vmatprep.subr.mxu0 0.0
    %705 = vmatpush2.msra.mxu0 0.0
    %706 = vmatprep.subr.mxu0 0.0
    %707 = vmatpush2.msra.mxu0 0.0
    %708 = vmatprep.subr.mxu0 0.0
    %709 = vmatpush2.msra.mxu0 0.0
    %710 = vmatprep.subr.mxu0 0.0
    %711 = vmatpush2.msra.mxu0 0.0
    %712 = vmatprep.subr.mxu0 0.0
    %713 = vmatpush2.msra.mxu0 0.0
    %714 = vmatprep.mubr.f32.mxu0 0.0
    %v715 = vand.u32 %v99, 4294901760
    %716 = vmatmul.mubr.f32.gmra.mxu0 %v715
    %v717 = vpop.f32.mrf.mxu0
    %v718 = vadd.f32 %v583, %v717
    %v719 = vpop.f32.mrf.mxu0
    %v720 = vadd.f32 %v585, %v719
    %721 = vmatprep.mubr.f32.mxu0 0.0
    %v722 = vand.u32 %v102, 4294901760
    %723 = vmatmul.mubr.f32.gmra.mxu0 %v722
    %v724 = vpop.f32.mrf.mxu0
    %v725 = vadd.f32 %v592, %v724
    %v726 = vpop.f32.mrf.mxu0
    %v727 = vadd.f32 %v594, %v726
    %728 = vdwg.mxu0
    %729 = vmatprep.subr.mxu0 0.0
    %730 = vmatpush1.msra.mxu0 0.0
    %731 = vmatprep.subr.mxu0 0.0
    %732 = vmatpush1.msra.mxu0 0.0
    %733 = vmatprep.subr.mxu0 0.0
    %734 = vmatpush1.msra.mxu0 0.0
    %735 = vmatprep.subr.mxu0 0.0
    %736 = vmatpush1.msra.mxu0 0.0
    %737 = vmatprep.subr.mxu0 0.0
    %738 = vmatpush1.msra.mxu0 0.0
    %739 = vmatprep.subr.mxu0 0.0
    %740 = vmatpush1.msra.mxu0 0.0
    %741 = vmatprep.subr.mxu0 0.0
    %742 = vmatpush1.msra.mxu0 0.0
    %v743 = vand.u32 %v94, 4294901760
    %744 = vmatprep.subr.mxu0 %v743
    %v745 = vand.u32 %v93, 4294901760
    %746 = vmatpush1.msra.mxu0 %v745
    %v747 = vand.u32 %v87, 4294901760
    %748 = vmatprep.subr.mxu0 %v747
    %v749 = vand.u32 %v86, 4294901760
    %750 = vmatpush1.msra.mxu0 %v749
    %v751 = vand.u32 %v80, 4294901760
    %752 = vmatprep.subr.mxu0 %v751
    %v753 = vand.u32 %v79, 4294901760
    %754 = vmatpush1.msra.mxu0 %v753
    %v755 = vand.u32 %v73, 4294901760
    %756 = vmatprep.subr.mxu0 %v755
    %v757 = vand.u32 %v72, 4294901760
    %758 = vmatpush1.msra.mxu0 %v757
    %v759 = vand.u32 %v66, 4294901760
    %760 = vmatprep.subr.mxu0 %v759
    %v761 = vand.u32 %v65, 4294901760
    %762 = vmatpush1.msra.mxu0 %v761
    %v763 = vand.u32 %v59, 4294901760
    %764 = vmatprep.subr.mxu0 %v763
    %v765 = vand.u32 %v58, 4294901760
    %766 = vmatpush1.msra.mxu0 %v765
    %v767 = vand.u32 %v52, 4294901760
    %768 = vmatprep.subr.mxu0 %v767
    %v769 = vand.u32 %v51, 4294901760
    %770 = vmatpush1.msra.mxu0 %v769
    %v771 = vand.u32 %v45, 4294901760
    %772 = vmatprep.subr.mxu0 %v771
    %v773 = vand.u32 %v44, 4294901760
    %774 = vmatpush1.msra.mxu0 %v773
    %v775 = vand.u32 %v36, 4294901760
    %776 = vmatprep.subr.mxu0 %v775
    %v777 = vand.u32 %v35, 4294901760
    %778 = vmatpush1.msra.mxu0 %v777
    %779 = vmatprep.subr.mxu0 0.0
    %780 = vmatpush2.msra.mxu0 0.0
    %781 = vmatprep.subr.mxu0 0.0
    %782 = vmatpush2.msra.mxu0 0.0
    %783 = vmatprep.subr.mxu0 0.0
    %784 = vmatpush2.msra.mxu0 0.0
    %785 = vmatprep.subr.mxu0 0.0
    %786 = vmatpush2.msra.mxu0 0.0
    %787 = vmatprep.subr.mxu0 0.0
    %788 = vmatpush2.msra.mxu0 0.0
    %789 = vmatprep.subr.mxu0 0.0
    %790 = vmatpush2.msra.mxu0 0.0
    %791 = vmatprep.subr.mxu0 0.0
    %792 = vmatpush2.msra.mxu0 0.0
    %793 = vmatprep.subr.mxu0 0.0
    %794 = vmatpush2.msra.mxu0 0.0
    %795 = vmatprep.subr.mxu0 0.0
    %796 = vmatpush2.msra.mxu0 0.0
    %797 = vmatprep.subr.mxu0 0.0
    %798 = vmatpush2.msra.mxu0 0.0
    %799 = vmatprep.subr.mxu0 0.0
    %800 = vmatpush2.msra.mxu0 0.0
    %801 = vmatprep.subr.mxu0 0.0
    %802 = vmatpush2.msra.mxu0 0.0
    %803 = vmatprep.subr.mxu0 0.0
    %804 = vmatpush2.msra.mxu0 0.0
    %805 = vmatprep.subr.mxu0 0.0
    %806 = vmatpush2.msra.mxu0 0.0
    %807 = vmatprep.subr.mxu0 0.0
    %808 = vmatpush2.msra.mxu0 0.0
    %809 = vmatprep.subr.mxu0 0.0
    %810 = vmatpush2.msra.mxu0 0.0
    %811 = vmatprep.mubr.f32.mxu0 0.0
    %v812 = vand.u32 %v99, 4294901760
    %813 = vmatmul.mubr.f32.gmra.mxu0 %v812
    %v814 = vpop.f32.mrf.mxu0
    %v815 = vadd.f32 %v718, %v814
    %v816 = vpop.f32.mrf.mxu0
    %v817 = vadd.f32 %v720, %v816
    %818 = vmatprep.mubr.f32.mxu0 0.0
    %v819 = vand.u32 %v102, 4294901760
    %820 = vmatmul.mubr.f32.gmra.mxu0 %v819
    %v821 = vpop.f32.mrf.mxu0
    %v822 = vadd.f32 %v725, %v821
    %v823 = vpop.f32.mrf.mxu0
    %v824 = vadd.f32 %v727, %v823
    %825 = vdwg.mxu0
    %v826 = vld [vmem:[#allocation2] sm:$0xff]
    %v827 = vld [vmem:[#allocation2 + $0x8] sm:$0xff]
    %v828 = vld [vmem:[#allocation2 + $0x10] sm:$0xff]
    %v829 = vld [vmem:[#allocation2 + $0x18] sm:$0xff]
    %v830 = vld [vmem:[#allocation2 + $0x20] sm:$0xff]
    %v831 = vld [vmem:[#allocation2 + $0x28] sm:$0xff]
    %v832 = vld [vmem:[#allocation2 + $0x30] sm:$0xff]
    %v833 = vld [vmem:[#allocation2 + $0x38] sm:$0xff]
    %v834 = vld [vmem:[#allocation2 + $0x40] sm:$0xff]
    %v835 = vld [vmem:[#allocation2 + $0x48] sm:$0xff]
    %v836 = vld [vmem:[#allocation2 + $0x50] sm:$0xff]
    %v837 = vld [vmem:[#allocation2 + $0x58] sm:$0xff]
    %v838 = vld [vmem:[#allocation2 + $0x60] sm:$0xff]
    %v839 = vld [vmem:[#allocation2 + $0x68] sm:$0xff]
    %v840 = vld [vmem:[#allocation2 + $0x70] sm:$0xff]
    %v841 = vld [vmem:[#allocation2 + $0x78] sm:$0xff]
    %v842 = vld [vmem:[#allocation2 + $0x80] sm:$0xff]
    %v843 = vld [vmem:[#allocation2 + $0x88] sm:$0xff]
    %v844 = vld [vmem:[#allocation2 + $0x90] sm:$0xff]
    %v845 = vld [vmem:[#allocation2 + $0x98] sm:$0xff]
    %v846 = vld [vmem:[#allocation2 + $0xa0] sm:$0xff]
    %v847 = vld [vmem:[#allocation2 + $0xa8] sm:$0xff]
    %v848 = vld [vmem:[#allocation2 + $0xb0] sm:$0xff]
    %v849 = vld [vmem:[#allocation2 + $0xb8] sm:$0xff]
    %v850 = vld [vmem:[#allocation2 + $0xc0] sm:$0xff]
    %v851 = vld [vmem:[#allocation2 + $0xc8] sm:$0xff]
    %v852 = vld [vmem:[#allocation2 + $0xd0] sm:$0xff]
    %v853 = vld [vmem:[#allocation2 + $0xd8] sm:$0xff]
    %v854 = vld [vmem:[#allocation2 + $0xe0] sm:$0xff]
    %v855 = vld [vmem:[#allocation2 + $0xe8] sm:$0xff]
    %v856 = vld [vmem:[#allocation2 + $0xf0] sm:$0xff]
    %v857 = vld [vmem:[#allocation2 + $0xf8] sm:$0xff]
    %v858 = vld [vmem:[#allocation2 + $0x100] sm:$0xff]
    %v859 = vld [vmem:[#allocation2 + $0x108] sm:$0xff]
    %v860 = vld [vmem:[#allocation2 + $0x110] sm:$0xff]
    %v861 = vld [vmem:[#allocation2 + $0x118] sm:$0xff]
    %v862 = vld [vmem:[#allocation2 + $0x120] sm:$0xff]
    %v863 = vld [vmem:[#allocation2 + $0x128] sm:$0xff]
    %v864 = vld [vmem:[#allocation2 + $0x130] sm:$0xff]
    %v865 = vld [vmem:[#allocation2 + $0x138] sm:$0xff]
    %v866 = vld [vmem:[#allocation2 + $0x140] sm:$0xff]
    %v867 = vld [vmem:[#allocation2 + $0x148] sm:$0xff]
    %v868 = vld [vmem:[#allocation2 + $0x150] sm:$0xff]
    %v869 = vld [vmem:[#allocation2 + $0x158] sm:$0xff]
    %v870 = vld [vmem:[#allocation2 + $0x160] sm:$0xff]
    %v871 = vld [vmem:[#allocation2 + $0x168] sm:$0xff]
    %v872 = vld [vmem:[#allocation2 + $0x170] sm:$0xff]
    %v873 = vld [vmem:[#allocation2 + $0x178] sm:$0xff]
    %v874 = vld [vmem:[#allocation2 + $0x180] sm:$0xff]
    %v875 = vld [vmem:[#allocation2 + $0x188] sm:$0xff]
    %v876 = vld [vmem:[#allocation2 + $0x190] sm:$0xff]
    %v877 = vld [vmem:[#allocation2 + $0x198] sm:$0xff]
    %v878 = vld [vmem:[#allocation2 + $0x1a0] sm:$0xff]
    %v879 = vld [vmem:[#allocation2 + $0x1a8] sm:$0xff]
    %v880 = vld [vmem:[#allocation2 + $0x1b0] sm:$0xff]
    %v881 = vld [vmem:[#allocation2 + $0x1b8] sm:$0xff]
    %v882 = vld [vmem:[#allocation2 + $0x1c0] sm:$0xff]
    %v883 = vld [vmem:[#allocation2 + $0x1c8] sm:$0xff]
    %v884 = vld [vmem:[#allocation2 + $0x1d0] sm:$0xff]
    %v885 = vld [vmem:[#allocation2 + $0x1d8] sm:$0xff]
    %v886 = vld [vmem:[#allocation2 + $0x1e0] sm:$0xff]
    %v887 = vld [vmem:[#allocation2 + $0x1e8] sm:$0xff]
    %v888 = vld [vmem:[#allocation2 + $0x1f0] sm:$0xff]
    %v889 = vld [vmem:[#allocation2 + $0x1f8] sm:$0xff]
    %v890 = vunpack.c.l.bf16 %v826
    %v891 = vunpack.c.h.bf16 %v826
    %v892 = vunpack.c.l.bf16 %v827
    %v893 = vunpack.c.h.bf16 %v827
    %v894 = vunpack.c.l.bf16 %v828
    %v895 = vunpack.c.h.bf16 %v828
    %v896 = vunpack.c.l.bf16 %v829
    %v897 = vunpack.c.h.bf16 %v829
    %v898 = vunpack.c.l.bf16 %v830
    %v899 = vunpack.c.h.bf16 %v830
    %v900 = vunpack.c.l.bf16 %v831
    %v901 = vunpack.c.h.bf16 %v831
    %v902 = vunpack.c.l.bf16 %v832
    %v903 = vunpack.c.h.bf16 %v832
    %v904 = vunpack.c.l.bf16 %v833
    %v905 = vunpack.c.h.bf16 %v833
    %v906 = vunpack.c.l.bf16 %v834
    %v907 = vunpack.c.h.bf16 %v834
    %v908 = vunpack.c.l.bf16 %v835
    %v909 = vunpack.c.h.bf16 %v835
    %v910 = vunpack.c.l.bf16 %v836
    %v911 = vunpack.c.h.bf16 %v836
    %v912 = vunpack.c.l.bf16 %v837
    %v913 = vunpack.c.h.bf16 %v837
    %v914 = vunpack.c.l.bf16 %v838
    %v915 = vunpack.c.h.bf16 %v838
    %v916 = vunpack.c.l.bf16 %v839
    %v917 = vunpack.c.h.bf16 %v839
    %v918 = vunpack.c.l.bf16 %v840
    %v919 = vunpack.c.h.bf16 %v840
    %v920 = vunpack.c.l.bf16 %v841
    %v921 = vunpack.c.h.bf16 %v841
    %v922 = vunpack.c.l.bf16 %v842
    %v923 = vunpack.c.h.bf16 %v842
    %v924 = vunpack.c.l.bf16 %v843
    %v925 = vunpack.c.h.bf16 %v843
    %v926 = vunpack.c.l.bf16 %v844
    %v927 = vunpack.c.h.bf16 %v844
    %v928 = vunpack.c.l.bf16 %v845
    %v929 = vunpack.c.h.bf16 %v845
    %v930 = vunpack.c.l.bf16 %v846
    %v931 = vunpack.c.h.bf16 %v846
    %v932 = vunpack.c.l.bf16 %v847
    %v933 = vunpack.c.h.bf16 %v847
    %v934 = vunpack.c.l.bf16 %v848
    %v935 = vunpack.c.h.bf16 %v848
    %v936 = vunpack.c.l.bf16 %v849
    %v937 = vunpack.c.h.bf16 %v849
    %v938 = vunpack.c.l.bf16 %v850
    %v939 = vunpack.c.h.bf16 %v850
    %v940 = vunpack.c.l.bf16 %v851
    %v941 = vunpack.c.h.bf16 %v851
    %v942 = vunpack.c.l.bf16 %v852
    %v943 = vunpack.c.h.bf16 %v852
    %v944 = vunpack.c.l.bf16 %v853
    %v945 = vunpack.c.h.bf16 %v853
    %v946 = vunpack.c.l.bf16 %v854
    %v947 = vunpack.c.h.bf16 %v854
    %v948 = vunpack.c.l.bf16 %v855
    %v949 = vunpack.c.h.bf16 %v855
    %v950 = vunpack.c.l.bf16 %v856
    %v951 = vunpack.c.h.bf16 %v856
    %v952 = vunpack.c.l.bf16 %v857
    %v953 = vunpack.c.h.bf16 %v857
    %v954 = vunpack.c.l.bf16 %v858
    %v955 = vunpack.c.h.bf16 %v858
    %v956 = vunpack.c.l.bf16 %v859
    %v957 = vunpack.c.h.bf16 %v859
    %v958 = vunpack.c.l.bf16 %v860
    %v959 = vunpack.c.h.bf16 %v860
    %v960 = vunpack.c.l.bf16 %v861
    %v961 = vunpack.c.h.bf16 %v861
    %v962 = vunpack.c.l.bf16 %v862
    %v963 = vunpack.c.h.bf16 %v862
    %v964 = vunpack.c.l.bf16 %v863
    %v965 = vunpack.c.h.bf16 %v863
    %v966 = vunpack.c.l.bf16 %v864
    %v967 = vunpack.c.h.bf16 %v864
    %v968 = vunpack.c.l.bf16 %v865
    %v969 = vunpack.c.h.bf16 %v865
    %v970 = vunpack.c.l.bf16 %v866
    %v971 = vunpack.c.h.bf16 %v866
    %v972 = vunpack.c.l.bf16 %v867
    %v973 = vunpack.c.h.bf16 %v867
    %v974 = vunpack.c.l.bf16 %v868
    %v975 = vunpack.c.h.bf16 %v868
    %v976 = vunpack.c.l.bf16 %v869
    %v977 = vunpack.c.h.bf16 %v869
    %v978 = vunpack.c.l.bf16 %v870
    %v979 = vunpack.c.h.bf16 %v870
    %v980 = vunpack.c.l.bf16 %v871
    %v981 = vunpack.c.h.bf16 %v871
    %v982 = vunpack.c.l.bf16 %v872
    %v983 = vunpack.c.h.bf16 %v872
    %v984 = vunpack.c.l.bf16 %v873
    %v985 = vunpack.c.h.bf16 %v873
    %v986 = vunpack.c.l.bf16 %v874
    %v987 = vunpack.c.h.bf16 %v874
    %v988 = vunpack.c.l.bf16 %v875
    %v989 = vunpack.c.h.bf16 %v875
    %v990 = vunpack.c.l.bf16 %v876
    %v991 = vunpack.c.h.bf16 %v876
    %v992 = vunpack.c.l.bf16 %v877
    %v993 = vunpack.c.h.bf16 %v877
    %v994 = vunpack.c.l.bf16 %v878
    %v995 = vunpack.c.h.bf16 %v878
    %v996 = vunpack.c.l.bf16 %v879
    %v997 = vunpack.c.h.bf16 %v879
    %v998 = vunpack.c.l.bf16 %v880
    %v999 = vunpack.c.h.bf16 %v880
    %v1000 = vunpack.c.l.bf16 %v881
    %v1001 = vunpack.c.h.bf16 %v881
    %v1002 = vunpack.c.l.bf16 %v882
    %v1003 = vunpack.c.h.bf16 %v882
    %v1004 = vunpack.c.l.bf16 %v883
    %v1005 = vunpack.c.h.bf16 %v883
    %v1006 = vunpack.c.l.bf16 %v884
    %v1007 = vunpack.c.h.bf16 %v884
    %v1008 = vunpack.c.l.bf16 %v885
    %v1009 = vunpack.c.h.bf16 %v885
    %v1010 = vunpack.c.l.bf16 %v886
    %v1011 = vunpack.c.h.bf16 %v886
    %v1012 = vunpack.c.l.bf16 %v887
    %v1013 = vunpack.c.h.bf16 %v887
    %v1014 = vunpack.c.l.bf16 %v888
    %v1015 = vunpack.c.h.bf16 %v888
    %v1016 = vunpack.c.l.bf16 %v889
    %v1017 = vunpack.c.h.bf16 %v889
    %1018 = vmatprep.subr.mxu0 %v951
    %1019 = vmatpush1.msra.mxu0 %v950
    %1020 = vmatprep.subr.mxu0 %v947
    %1021 = vmatpush1.msra.mxu0 %v946
    %1022 = vmatprep.subr.mxu0 %v943
    %1023 = vmatpush1.msra.mxu0 %v942
    %1024 = vmatprep.subr.mxu0 %v939
    %1025 = vmatpush1.msra.mxu0 %v938
    %1026 = vmatprep.subr.mxu0 %v935
    %1027 = vmatpush1.msra.mxu0 %v934
    %1028 = vmatprep.subr.mxu0 %v931
    %1029 = vmatpush1.msra.mxu0 %v930
    %1030 = vmatprep.subr.mxu0 %v927
    %1031 = vmatpush1.msra.mxu0 %v926
    %1032 = vmatprep.subr.mxu0 %v923
    %1033 = vmatpush1.msra.mxu0 %v922
    %1034 = vmatprep.subr.mxu0 %v919
    %1035 = vmatpush1.msra.mxu0 %v918
    %1036 = vmatprep.subr.mxu0 %v915
    %1037 = vmatpush1.msra.mxu0 %v914
    %1038 = vmatprep.subr.mxu0 %v911
    %1039 = vmatpush1.msra.mxu0 %v910
    %1040 = vmatprep.subr.mxu0 %v907
    %1041 = vmatpush1.msra.mxu0 %v906
    %1042 = vmatprep.subr.mxu0 %v903
    %1043 = vmatpush1.msra.mxu0 %v902
    %1044 = vmatprep.subr.mxu0 %v899
    %1045 = vmatpush1.msra.mxu0 %v898
    %1046 = vmatprep.subr.mxu0 %v895
    %1047 = vmatpush1.msra.mxu0 %v894
    %1048 = vmatprep.subr.mxu0 %v891
    %1049 = vmatpush1.msra.mxu0 %v890
    %1050 = vmatprep.subr.mxu0 %v1015
    %1051 = vmatpush2.msra.mxu0 %v1014
    %1052 = vmatprep.subr.mxu0 %v1011
    %1053 = vmatpush2.msra.mxu0 %v1010
    %1054 = vmatprep.subr.mxu0 %v1007
    %1055 = vmatpush2.msra.mxu0 %v1006
    %1056 = vmatprep.subr.mxu0 %v1003
    %1057 = vmatpush2.msra.mxu0 %v1002
    %1058 = vmatprep.subr.mxu0 %v999
    %1059 = vmatpush2.msra.mxu0 %v998
    %1060 = vmatprep.subr.mxu0 %v995
    %1061 = vmatpush2.msra.mxu0 %v994
    %1062 = vmatprep.subr.mxu0 %v991
    %1063 = vmatpush2.msra.mxu0 %v990
    %1064 = vmatprep.subr.mxu0 %v987
    %1065 = vmatpush2.msra.mxu0 %v986
    %1066 = vmatprep.subr.mxu0 %v983
    %1067 = vmatpush2.msra.mxu0 %v982
    %1068 = vmatprep.subr.mxu0 %v979
    %1069 = vmatpush2.msra.mxu0 %v978
    %1070 = vmatprep.subr.mxu0 %v975
    %1071 = vmatpush2.msra.mxu0 %v974
    %1072 = vmatprep.subr.mxu0 %v971
    %1073 = vmatpush2.msra.mxu0 %v970
    %1074 = vmatprep.subr.mxu0 %v967
    %1075 = vmatpush2.msra.mxu0 %v966
    %1076 = vmatprep.subr.mxu0 %v963
    %1077 = vmatpush2.msra.mxu0 %v962
    %1078 = vmatprep.subr.mxu0 %v959
    %1079 = vmatpush2.msra.mxu0 %v958
    %1080 = vmatprep.subr.mxu0 %v955
    %1081 = vmatpush2.msra.mxu0 %v954
    %v1082 = vand.u32 %v817, 4294901760
    %v1083 = vsub.f32 %v817, %v1082
    %v1084 = vand.u32 %v1083, 4294901760
    %v1085 = vsub.f32 %v1083, %v1084
    %v1086 = vand.u32 %v1085, 4294901760
    %1087 = vmatprep.mubr.f32.mxu0 %v1086
    %v1088 = vand.u32 %v815, 4294901760
    %v1089 = vsub.f32 %v815, %v1088
    %v1090 = vand.u32 %v1089, 4294901760
    %v1091 = vsub.f32 %v1089, %v1090
    %v1092 = vand.u32 %v1091, 4294901760
    %1093 = vmatmul.mubr.f32.gmra.mxu0 %v1092
    %v1094 = vpop.f32.mrf.mxu0
    %v1095 = vadd.f32 0.0, %v1094
    %v1096 = vpop.f32.mrf.mxu0
    %v1097 = vadd.f32 0.0, %v1096
    %v1098 = vand.u32 %v824, 4294901760
    %v1099 = vsub.f32 %v824, %v1098
    %v1100 = vand.u32 %v1099, 4294901760
    %v1101 = vsub.f32 %v1099, %v1100
    %v1102 = vand.u32 %v1101, 4294901760
    %1103 = vmatprep.mubr.f32.mxu0 %v1102
    %v1104 = vand.u32 %v822, 4294901760
    %v1105 = vsub.f32 %v822, %v1104
    %v1106 = vand.u32 %v1105, 4294901760
    %v1107 = vsub.f32 %v1105, %v1106
    %v1108 = vand.u32 %v1107, 4294901760
    %1109 = vmatmul.mubr.f32.gmra.mxu0 %v1108
    %v1110 = vpop.f32.mrf.mxu0
    %v1111 = vadd.f32 0.0, %v1110
    %v1112 = vpop.f32.mrf.mxu0
    %v1113 = vadd.f32 0.0, %v1112
    %1114 = vdwg.mxu0
    %v1115 = vsub.f32 %v951, %v951
    %v1116 = vand.u32 %v1115, 4294901760
    %v1117 = vsub.f32 %v1115, %v1116
    %v1118 = vand.u32 %v1117, 4294901760
    %1119 = vmatprep.subr.mxu0 %v1118
    %v1120 = vsub.f32 %v950, %v950
    %v1121 = vand.u32 %v1120, 4294901760
    %v1122 = vsub.f32 %v1120, %v1121
    %v1123 = vand.u32 %v1122, 4294901760
    %1124 = vmatpush1.msra.mxu0 %v1123
    %v1125 = vsub.f32 %v947, %v947
    %v1126 = vand.u32 %v1125, 4294901760
    %v1127 = vsub.f32 %v1125, %v1126
    %v1128 = vand.u32 %v1127, 4294901760
    %1129 = vmatprep.subr.mxu0 %v1128
    %v1130 = vsub.f32 %v946, %v946
    %v1131 = vand.u32 %v1130, 4294901760
    %v1132 = vsub.f32 %v1130, %v1131
    %v1133 = vand.u32 %v1132, 4294901760
    %1134 = vmatpush1.msra.mxu0 %v1133
    %v1135 = vsub.f32 %v943, %v943
    %v1136 = vand.u32 %v1135, 4294901760
    %v1137 = vsub.f32 %v1135, %v1136
    %v1138 = vand.u32 %v1137, 4294901760
    %1139 = vmatprep.subr.mxu0 %v1138
    %v1140 = vsub.f32 %v942, %v942
    %v1141 = vand.u32 %v1140, 4294901760
    %v1142 = vsub.f32 %v1140, %v1141
    %v1143 = vand.u32 %v1142, 4294901760
    %1144 = vmatpush1.msra.mxu0 %v1143
    %v1145 = vsub.f32 %v939, %v939
    %v1146 = vand.u32 %v1145, 4294901760
    %v1147 = vsub.f32 %v1145, %v1146
    %v1148 = vand.u32 %v1147, 4294901760
    %1149 = vmatprep.subr.mxu0 %v1148
    %v1150 = vsub.f32 %v938, %v938
    %v1151 = vand.u32 %v1150, 4294901760
    %v1152 = vsub.f32 %v1150, %v1151
    %v1153 = vand.u32 %v1152, 4294901760
    %1154 = vmatpush1.msra.mxu0 %v1153
    %v1155 = vsub.f32 %v935, %v935
    %v1156 = vand.u32 %v1155, 4294901760
    %v1157 = vsub.f32 %v1155, %v1156
    %v1158 = vand.u32 %v1157, 4294901760
    %1159 = vmatprep.subr.mxu0 %v1158
    %v1160 = vsub.f32 %v934, %v934
    %v1161 = vand.u32 %v1160, 4294901760
    %v1162 = vsub.f32 %v1160, %v1161
    %v1163 = vand.u32 %v1162, 4294901760
    %1164 = vmatpush1.msra.mxu0 %v1163
    %v1165 = vsub.f32 %v931, %v931
    %v1166 = vand.u32 %v1165, 4294901760
    %v1167 = vsub.f32 %v1165, %v1166
    %v1168 = vand.u32 %v1167, 4294901760
    %1169 = vmatprep.subr.mxu0 %v1168
    %v1170 = vsub.f32 %v930, %v930
    %v1171 = vand.u32 %v1170, 4294901760
    %v1172 = vsub.f32 %v1170, %v1171
    %v1173 = vand.u32 %v1172, 4294901760
    %1174 = vmatpush1.msra.mxu0 %v1173
    %v1175 = vsub.f32 %v927, %v927
    %v1176 = vand.u32 %v1175, 4294901760
    %v1177 = vsub.f32 %v1175, %v1176
    %v1178 = vand.u32 %v1177, 4294901760
    %1179 = vmatprep.subr.mxu0 %v1178
    %v1180 = vsub.f32 %v926, %v926
    %v1181 = vand.u32 %v1180, 4294901760
    %v1182 = vsub.f32 %v1180, %v1181
    %v1183 = vand.u32 %v1182, 4294901760
    %1184 = vmatpush1.msra.mxu0 %v1183
    %v1185 = vsub.f32 %v923, %v923
    %v1186 = vand.u32 %v1185, 4294901760
    %v1187 = vsub.f32 %v1185, %v1186
    %v1188 = vand.u32 %v1187, 4294901760
    %1189 = vmatprep.subr.mxu0 %v1188
    %v1190 = vsub.f32 %v922, %v922
    %v1191 = vand.u32 %v1190, 4294901760
    %v1192 = vsub.f32 %v1190, %v1191
    %v1193 = vand.u32 %v1192, 4294901760
    %1194 = vmatpush1.msra.mxu0 %v1193
    %v1195 = vsub.f32 %v919, %v919
    %v1196 = vand.u32 %v1195, 4294901760
    %v1197 = vsub.f32 %v1195, %v1196
    %v1198 = vand.u32 %v1197, 4294901760
    %1199 = vmatprep.subr.mxu0 %v1198
    %v1200 = vsub.f32 %v918, %v918
    %v1201 = vand.u32 %v1200, 4294901760
    %v1202 = vsub.f32 %v1200, %v1201
    %v1203 = vand.u32 %v1202, 4294901760
    %1204 = vmatpush1.msra.mxu0 %v1203
    %v1205 = vsub.f32 %v915, %v915
    %v1206 = vand.u32 %v1205, 4294901760
    %v1207 = vsub.f32 %v1205, %v1206
    %v1208 = vand.u32 %v1207, 4294901760
    %1209 = vmatprep.subr.mxu0 %v1208
    %v1210 = vsub.f32 %v914, %v914
    %v1211 = vand.u32 %v1210, 4294901760
    %v1212 = vsub.f32 %v1210, %v1211
    %v1213 = vand.u32 %v1212, 4294901760
    %1214 = vmatpush1.msra.mxu0 %v1213
    %v1215 = vsub.f32 %v911, %v911
    %v1216 = vand.u32 %v1215, 4294901760
    %v1217 = vsub.f32 %v1215, %v1216
    %v1218 = vand.u32 %v1217, 4294901760
    %1219 = vmatprep.subr.mxu0 %v1218
    %v1220 = vsub.f32 %v910, %v910
    %v1221 = vand.u32 %v1220, 4294901760
    %v1222 = vsub.f32 %v1220, %v1221
    %v1223 = vand.u32 %v1222, 4294901760
    %1224 = vmatpush1.msra.mxu0 %v1223
    %v1225 = vsub.f32 %v907, %v907
    %v1226 = vand.u32 %v1225, 4294901760
    %v1227 = vsub.f32 %v1225, %v1226
    %v1228 = vand.u32 %v1227, 4294901760
    %1229 = vmatprep.subr.mxu0 %v1228
    %v1230 = vsub.f32 %v906, %v906
    %v1231 = vand.u32 %v1230, 4294901760
    %v1232 = vsub.f32 %v1230, %v1231
    %v1233 = vand.u32 %v1232, 4294901760
    %1234 = vmatpush1.msra.mxu0 %v1233
    %v1235 = vsub.f32 %v903, %v903
    %v1236 = vand.u32 %v1235, 4294901760
    %v1237 = vsub.f32 %v1235, %v1236
    %v1238 = vand.u32 %v1237, 4294901760
    %1239 = vmatprep.subr.mxu0 %v1238
    %v1240 = vsub.f32 %v902, %v902
    %v1241 = vand.u32 %v1240, 4294901760
    %v1242 = vsub.f32 %v1240, %v1241
    %v1243 = vand.u32 %v1242, 4294901760
    %1244 = vmatpush1.msra.mxu0 %v1243
    %v1245 = vsub.f32 %v899, %v899
    %v1246 = vand.u32 %v1245, 4294901760
    %v1247 = vsub.f32 %v1245, %v1246
    %v1248 = vand.u32 %v1247, 4294901760
    %1249 = vmatprep.subr.mxu0 %v1248
    %v1250 = vsub.f32 %v898, %v898
    %v1251 = vand.u32 %v1250, 4294901760
    %v1252 = vsub.f32 %v1250, %v1251
    %v1253 = vand.u32 %v1252, 4294901760
    %1254 = vmatpush1.msra.mxu0 %v1253
    %v1255 = vsub.f32 %v895, %v895
    %v1256 = vand.u32 %v1255, 4294901760
    %v1257 = vsub.f32 %v1255, %v1256
    %v1258 = vand.u32 %v1257, 4294901760
    %1259 = vmatprep.subr.mxu0 %v1258
    %v1260 = vsub.f32 %v894, %v894
    %v1261 = vand.u32 %v1260, 4294901760
    %v1262 = vsub.f32 %v1260, %v1261
    %v1263 = vand.u32 %v1262, 4294901760
    %1264 = vmatpush1.msra.mxu0 %v1263
    %v1265 = vsub.f32 %v891, %v891
    %v1266 = vand.u32 %v1265, 4294901760
    %v1267 = vsub.f32 %v1265, %v1266
    %v1268 = vand.u32 %v1267, 4294901760
    %1269 = vmatprep.subr.mxu0 %v1268
    %v1270 = vsub.f32 %v890, %v890
    %v1271 = vand.u32 %v1270, 4294901760
    %v1272 = vsub.f32 %v1270, %v1271
    %v1273 = vand.u32 %v1272, 4294901760
    %1274 = vmatpush1.msra.mxu0 %v1273
    %v1275 = vsub.f32 %v1015, %v1015
    %v1276 = vand.u32 %v1275, 4294901760
    %v1277 = vsub.f32 %v1275, %v1276
    %v1278 = vand.u32 %v1277, 4294901760
    %1279 = vmatprep.subr.mxu0 %v1278
    %v1280 = vsub.f32 %v1014, %v1014
    %v1281 = vand.u32 %v1280, 4294901760
    %v1282 = vsub.f32 %v1280, %v1281
    %v1283 = vand.u32 %v1282, 4294901760
    %1284 = vmatpush2.msra.mxu0 %v1283
    %v1285 = vsub.f32 %v1011, %v1011
    %v1286 = vand.u32 %v1285, 4294901760
    %v1287 = vsub.f32 %v1285, %v1286
    %v1288 = vand.u32 %v1287, 4294901760
    %1289 = vmatprep.subr.mxu0 %v1288
    %v1290 = vsub.f32 %v1010, %v1010
    %v1291 = vand.u32 %v1290, 4294901760
    %v1292 = vsub.f32 %v1290, %v1291
    %v1293 = vand.u32 %v1292, 4294901760
    %1294 = vmatpush2.msra.mxu0 %v1293
    %v1295 = vsub.f32 %v1007, %v1007
    %v1296 = vand.u32 %v1295, 4294901760
    %v1297 = vsub.f32 %v1295, %v1296
    %v1298 = vand.u32 %v1297, 4294901760
    %1299 = vmatprep.subr.mxu0 %v1298
    %v1300 = vsub.f32 %v1006, %v1006
    %v1301 = vand.u32 %v1300, 4294901760
    %v1302 = vsub.f32 %v1300, %v1301
    %v1303 = vand.u32 %v1302, 4294901760
    %1304 = vmatpush2.msra.mxu0 %v1303
    %v1305 = vsub.f32 %v1003, %v1003
    %v1306 = vand.u32 %v1305, 4294901760
    %v1307 = vsub.f32 %v1305, %v1306
    %v1308 = vand.u32 %v1307, 4294901760
    %1309 = vmatprep.subr.mxu0 %v1308
    %v1310 = vsub.f32 %v1002, %v1002
    %v1311 = vand.u32 %v1310, 4294901760
    %v1312 = vsub.f32 %v1310, %v1311
    %v1313 = vand.u32 %v1312, 4294901760
    %1314 = vmatpush2.msra.mxu0 %v1313
    %v1315 = vsub.f32 %v999, %v999
    %v1316 = vand.u32 %v1315, 4294901760
    %v1317 = vsub.f32 %v1315, %v1316
    %v1318 = vand.u32 %v1317, 4294901760
    %1319 = vmatprep.subr.mxu0 %v1318
    %v1320 = vsub.f32 %v998, %v998
    %v1321 = vand.u32 %v1320, 4294901760
    %v1322 = vsub.f32 %v1320, %v1321
    %v1323 = vand.u32 %v1322, 4294901760
    %1324 = vmatpush2.msra.mxu0 %v1323
    %v1325 = vsub.f32 %v995, %v995
    %v1326 = vand.u32 %v1325, 4294901760
    %v1327 = vsub.f32 %v1325, %v1326
    %v1328 = vand.u32 %v1327, 4294901760
    %1329 = vmatprep.subr.mxu0 %v1328
    %v1330 = vsub.f32 %v994, %v994
    %v1331 = vand.u32 %v1330, 4294901760
    %v1332 = vsub.f32 %v1330, %v1331
    %v1333 = vand.u32 %v1332, 4294901760
    %1334 = vmatpush2.msra.mxu0 %v1333
    %v1335 = vsub.f32 %v991, %v991
    %v1336 = vand.u32 %v1335, 4294901760
    %v1337 = vsub.f32 %v1335, %v1336
    %v1338 = vand.u32 %v1337, 4294901760
    %1339 = vmatprep.subr.mxu0 %v1338
    %v1340 = vsub.f32 %v990, %v990
    %v1341 = vand.u32 %v1340, 4294901760
    %v1342 = vsub.f32 %v1340, %v1341
    %v1343 = vand.u32 %v1342, 4294901760
    %1344 = vmatpush2.msra.mxu0 %v1343
    %v1345 = vsub.f32 %v987, %v987
    %v1346 = vand.u32 %v1345, 4294901760
    %v1347 = vsub.f32 %v1345, %v1346
    %v1348 = vand.u32 %v1347, 4294901760
    %1349 = vmatprep.subr.mxu0 %v1348
    %v1350 = vsub.f32 %v986, %v986
    %v1351 = vand.u32 %v1350, 4294901760
    %v1352 = vsub.f32 %v1350, %v1351
    %v1353 = vand.u32 %v1352, 4294901760
    %1354 = vmatpush2.msra.mxu0 %v1353
    %v1355 = vsub.f32 %v983, %v983
    %v1356 = vand.u32 %v1355, 4294901760
    %v1357 = vsub.f32 %v1355, %v1356
    %v1358 = vand.u32 %v1357, 4294901760
    %1359 = vmatprep.subr.mxu0 %v1358
    %v1360 = vsub.f32 %v982, %v982
    %v1361 = vand.u32 %v1360, 4294901760
    %v1362 = vsub.f32 %v1360, %v1361
    %v1363 = vand.u32 %v1362, 4294901760
    %1364 = vmatpush2.msra.mxu0 %v1363
    %v1365 = vsub.f32 %v979, %v979
    %v1366 = vand.u32 %v1365, 4294901760
    %v1367 = vsub.f32 %v1365, %v1366
    %v1368 = vand.u32 %v1367, 4294901760
    %1369 = vmatprep.subr.mxu0 %v1368
    %v1370 = vsub.f32 %v978, %v978
    %v1371 = vand.u32 %v1370, 4294901760
    %v1372 = vsub.f32 %v1370, %v1371
    %v1373 = vand.u32 %v1372, 4294901760
    %1374 = vmatpush2.msra.mxu0 %v1373
    %v1375 = vsub.f32 %v975, %v975
    %v1376 = vand.u32 %v1375, 4294901760
    %v1377 = vsub.f32 %v1375, %v1376
    %v1378 = vand.u32 %v1377, 4294901760
    %1379 = vmatprep.subr.mxu0 %v1378
    %v1380 = vsub.f32 %v974, %v974
    %v1381 = vand.u32 %v1380, 4294901760
    %v1382 = vsub.f32 %v1380, %v1381
    %v1383 = vand.u32 %v1382, 4294901760
    %1384 = vmatpush2.msra.mxu0 %v1383
    %v1385 = vsub.f32 %v971, %v971
    %v1386 = vand.u32 %v1385, 4294901760
    %v1387 = vsub.f32 %v1385, %v1386
    %v1388 = vand.u32 %v1387, 4294901760
    %1389 = vmatprep.subr.mxu0 %v1388
    %v1390 = vsub.f32 %v970, %v970
    %v1391 = vand.u32 %v1390, 4294901760
    %v1392 = vsub.f32 %v1390, %v1391
    %v1393 = vand.u32 %v1392, 4294901760
    %1394 = vmatpush2.msra.mxu0 %v1393
    %v1395 = vsub.f32 %v967, %v967
    %v1396 = vand.u32 %v1395, 4294901760
    %v1397 = vsub.f32 %v1395, %v1396
    %v1398 = vand.u32 %v1397, 4294901760
    %1399 = vmatprep.subr.mxu0 %v1398
    %v1400 = vsub.f32 %v966, %v966
    %v1401 = vand.u32 %v1400, 4294901760
    %v1402 = vsub.f32 %v1400, %v1401
    %v1403 = vand.u32 %v1402, 4294901760
    %1404 = vmatpush2.msra.mxu0 %v1403
    %v1405 = vsub.f32 %v963, %v963
    %v1406 = vand.u32 %v1405, 4294901760
    %v1407 = vsub.f32 %v1405, %v1406
    %v1408 = vand.u32 %v1407, 4294901760
    %1409 = vmatprep.subr.mxu0 %v1408
    %v1410 = vsub.f32 %v962, %v962
    %v1411 = vand.u32 %v1410, 4294901760
    %v1412 = vsub.f32 %v1410, %v1411
    %v1413 = vand.u32 %v1412, 4294901760
    %1414 = vmatpush2.msra.mxu0 %v1413
    %v1415 = vsub.f32 %v959, %v959
    %v1416 = vand.u32 %v1415, 4294901760
    %v1417 = vsub.f32 %v1415, %v1416
    %v1418 = vand.u32 %v1417, 4294901760
    %1419 = vmatprep.subr.mxu0 %v1418
    %v1420 = vsub.f32 %v958, %v958
    %v1421 = vand.u32 %v1420, 4294901760
    %v1422 = vsub.f32 %v1420, %v1421
    %v1423 = vand.u32 %v1422, 4294901760
    %1424 = vmatpush2.msra.mxu0 %v1423
    %v1425 = vsub.f32 %v955, %v955
    %v1426 = vand.u32 %v1425, 4294901760
    %v1427 = vsub.f32 %v1425, %v1426
    %v1428 = vand.u32 %v1427, 4294901760
    %1429 = vmatprep.subr.mxu0 %v1428
    %v1430 = vsub.f32 %v954, %v954
    %v1431 = vand.u32 %v1430, 4294901760
    %v1432 = vsub.f32 %v1430, %v1431
    %v1433 = vand.u32 %v1432, 4294901760
    %1434 = vmatpush2.msra.mxu0 %v1433
    %v1435 = vand.u32 %v817, 4294901760
    %1436 = vmatprep.mubr.f32.mxu0 %v1435
    %v1437 = vand.u32 %v815, 4294901760
    %1438 = vmatmul.mubr.f32.gmra.mxu0 %v1437
    %v1439 = vpop.f32.mrf.mxu0
    %v1440 = vadd.f32 %v1095, %v1439
    %v1441 = vpop.f32.mrf.mxu0
    %v1442 = vadd.f32 %v1097, %v1441
    %v1443 = vand.u32 %v824, 4294901760
    %1444 = vmatprep.mubr.f32.mxu0 %v1443
    %v1445 = vand.u32 %v822, 4294901760
    %1446 = vmatmul.mubr.f32.gmra.mxu0 %v1445
    %v1447 = vpop.f32.mrf.mxu0
    %v1448 = vadd.f32 %v1111, %v1447
    %v1449 = vpop.f32.mrf.mxu0
    %v1450 = vadd.f32 %v1113, %v1449
    %1451 = vdwg.mxu0
    %v1452 = vsub.f32 %v951, %v951
    %1453 = vmatprep.subr.mxu0 %v1452
    %v1454 = vsub.f32 %v950, %v950
    %1455 = vmatpush1.msra.mxu0 %v1454
    %v1456 = vsub.f32 %v947, %v947
    %1457 = vmatprep.subr.mxu0 %v1456
    %v1458 = vsub.f32 %v946, %v946
    %1459 = vmatpush1.msra.mxu0 %v1458
    %v1460 = vsub.f32 %v943, %v943
    %1461 = vmatprep.subr.mxu0 %v1460
    %v1462 = vsub.f32 %v942, %v942
    %1463 = vmatpush1.msra.mxu0 %v1462
    %v1464 = vsub.f32 %v939, %v939
    %1465 = vmatprep.subr.mxu0 %v1464
    %v1466 = vsub.f32 %v938, %v938
    %1467 = vmatpush1.msra.mxu0 %v1466
    %v1468 = vsub.f32 %v935, %v935
    %1469 = vmatprep.subr.mxu0 %v1468
    %v1470 = vsub.f32 %v934, %v934
    %1471 = vmatpush1.msra.mxu0 %v1470
    %v1472 = vsub.f32 %v931, %v931
    %1473 = vmatprep.subr.mxu0 %v1472
    %v1474 = vsub.f32 %v930, %v930
    %1475 = vmatpush1.msra.mxu0 %v1474
    %v1476 = vsub.f32 %v927, %v927
    %1477 = vmatprep.subr.mxu0 %v1476
    %v1478 = vsub.f32 %v926, %v926
    %1479 = vmatpush1.msra.mxu0 %v1478
    %v1480 = vsub.f32 %v923, %v923
    %1481 = vmatprep.subr.mxu0 %v1480
    %v1482 = vsub.f32 %v922, %v922
    %1483 = vmatpush1.msra.mxu0 %v1482
    %v1484 = vsub.f32 %v919, %v919
    %1485 = vmatprep.subr.mxu0 %v1484
    %v1486 = vsub.f32 %v918, %v918
    %1487 = vmatpush1.msra.mxu0 %v1486
    %v1488 = vsub.f32 %v915, %v915
    %1489 = vmatprep.subr.mxu0 %v1488
    %v1490 = vsub.f32 %v914, %v914
    %1491 = vmatpush1.msra.mxu0 %v1490
    %v1492 = vsub.f32 %v911, %v911
    %1493 = vmatprep.subr.mxu0 %v1492
    %v1494 = vsub.f32 %v910, %v910
    %1495 = vmatpush1.msra.mxu0 %v1494
    %v1496 = vsub.f32 %v907, %v907
    %1497 = vmatprep.subr.mxu0 %v1496
    %v1498 = vsub.f32 %v906, %v906
    %1499 = vmatpush1.msra.mxu0 %v1498
    %v1500 = vsub.f32 %v903, %v903
    %1501 = vmatprep.subr.mxu0 %v1500
    %v1502 = vsub.f32 %v902, %v902
    %1503 = vmatpush1.msra.mxu0 %v1502
    %v1504 = vsub.f32 %v899, %v899
    %1505 = vmatprep.subr.mxu0 %v1504
    %v1506 = vsub.f32 %v898, %v898
    %1507 = vmatpush1.msra.mxu0 %v1506
    %v1508 = vsub.f32 %v895, %v895
    %1509 = vmatprep.subr.mxu0 %v1508
    %v1510 = vsub.f32 %v894, %v894
    %1511 = vmatpush1.msra.mxu0 %v1510
    %v1512 = vsub.f32 %v891, %v891
    %1513 = vmatprep.subr.mxu0 %v1512
    %v1514 = vsub.f32 %v890, %v890
    %1515 = vmatpush1.msra.mxu0 %v1514
    %v1516 = vsub.f32 %v1015, %v1015
    %1517 = vmatprep.subr.mxu0 %v1516
    %v1518 = vsub.f32 %v1014, %v1014
    %1519 = vmatpush2.msra.mxu0 %v1518
    %v1520 = vsub.f32 %v1011, %v1011
    %1521 = vmatprep.subr.mxu0 %v1520
    %v1522 = vsub.f32 %v1010, %v1010
    %1523 = vmatpush2.msra.mxu0 %v1522
    %v1524 = vsub.f32 %v1007, %v1007
    %1525 = vmatprep.subr.mxu0 %v1524
    %v1526 = vsub.f32 %v1006, %v1006
    %1527 = vmatpush2.msra.mxu0 %v1526
    %v1528 = vsub.f32 %v1003, %v1003
    %1529 = vmatprep.subr.mxu0 %v1528
    %v1530 = vsub.f32 %v1002, %v1002
    %1531 = vmatpush2.msra.mxu0 %v1530
    %v1532 = vsub.f32 %v999, %v999
    %1533 = vmatprep.subr.mxu0 %v1532
    %v1534 = vsub.f32 %v998, %v998
    %1535 = vmatpush2.msra.mxu0 %v1534
    %v1536 = vsub.f32 %v995, %v995
    %1537 = vmatprep.subr.mxu0 %v1536
    %v1538 = vsub.f32 %v994, %v994
    %1539 = vmatpush2.msra.mxu0 %v1538
    %v1540 = vsub.f32 %v991, %v991
    %1541 = vmatprep.subr.mxu0 %v1540
    %v1542 = vsub.f32 %v990, %v990
    %1543 = vmatpush2.msra.mxu0 %v1542
    %v1544 = vsub.f32 %v987, %v987
    %1545 = vmatprep.subr.mxu0 %v1544
    %v1546 = vsub.f32 %v986, %v986
    %1547 = vmatpush2.msra.mxu0 %v1546
    %v1548 = vsub.f32 %v983, %v983
    %1549 = vmatprep.subr.mxu0 %v1548
    %v1550 = vsub.f32 %v982, %v982
    %1551 = vmatpush2.msra.mxu0 %v1550
    %v1552 = vsub.f32 %v979, %v979
    %1553 = vmatprep.subr.mxu0 %v1552
    %v1554 = vsub.f32 %v978, %v978
    %1555 = vmatpush2.msra.mxu0 %v1554
    %v1556 = vsub.f32 %v975, %v975
    %1557 = vmatprep.subr.mxu0 %v1556
    %v1558 = vsub.f32 %v974, %v974
    %1559 = vmatpush2.msra.mxu0 %v1558
    %v1560 = vsub.f32 %v971, %v971
    %1561 = vmatprep.subr.mxu0 %v1560
    %v1562 = vsub.f32 %v970, %v970
    %1563 = vmatpush2.msra.mxu0 %v1562
    %v1564 = vsub.f32 %v967, %v967
    %1565 = vmatprep.subr.mxu0 %v1564
    %v1566 = vsub.f32 %v966, %v966
    %1567 = vmatpush2.msra.mxu0 %v1566
    %v1568 = vsub.f32 %v963, %v963
    %1569 = vmatprep.subr.mxu0 %v1568
    %v1570 = vsub.f32 %v962, %v962
    %1571 = vmatpush2.msra.mxu0 %v1570
    %v1572 = vsub.f32 %v959, %v959
    %1573 = vmatprep.subr.mxu0 %v1572
    %v1574 = vsub.f32 %v958, %v958
    %1575 = vmatpush2.msra.mxu0 %v1574
    %v1576 = vsub.f32 %v955, %v955
    %1577 = vmatprep.subr.mxu0 %v1576
    %v1578 = vsub.f32 %v954, %v954
    %1579 = vmatpush2.msra.mxu0 %v1578
    %v1580 = vand.u32 %v817, 4294901760
    %v1581 = vsub.f32 %v817, %v1580
    %1582 = vmatprep.mubr.f32.mxu0 %v1581
    %v1583 = vand.u32 %v815, 4294901760
    %v1584 = vsub.f32 %v815, %v1583
    %1585 = vmatmul.mubr.f32.gmra.mxu0 %v1584
    %v1586 = vpop.f32.mrf.mxu0
    %v1587 = vadd.f32 %v1440, %v1586
    %v1588 = vpop.f32.mrf.mxu0
    %v1589 = vadd.f32 %v1442, %v1588
    %v1590 = vand.u32 %v824, 4294901760
    %v1591 = vsub.f32 %v824, %v1590
    %1592 = vmatprep.mubr.f32.mxu0 %v1591
    %v1593 = vand.u32 %v822, 4294901760
    %v1594 = vsub.f32 %v822, %v1593
    %1595 = vmatmul.mubr.f32.gmra.mxu0 %v1594
    %v1596 = vpop.f32.mrf.mxu0
    %v1597 = vadd.f32 %v1448, %v1596
    %v1598 = vpop.f32.mrf.mxu0
    %v1599 = vadd.f32 %v1450, %v1598
    %1600 = vdwg.mxu0
    %1601 = vmatprep.subr.mxu0 %v951
    %1602 = vmatpush1.msra.mxu0 %v950
    %1603 = vmatprep.subr.mxu0 %v947
    %1604 = vmatpush1.msra.mxu0 %v946
    %1605 = vmatprep.subr.mxu0 %v943
    %1606 = vmatpush1.msra.mxu0 %v942
    %1607 = vmatprep.subr.mxu0 %v939
    %1608 = vmatpush1.msra.mxu0 %v938
    %1609 = vmatprep.subr.mxu0 %v935
    %1610 = vmatpush1.msra.mxu0 %v934
    %1611 = vmatprep.subr.mxu0 %v931
    %1612 = vmatpush1.msra.mxu0 %v930
    %1613 = vmatprep.subr.mxu0 %v927
    %1614 = vmatpush1.msra.mxu0 %v926
    %1615 = vmatprep.subr.mxu0 %v923
    %1616 = vmatpush1.msra.mxu0 %v922
    %1617 = vmatprep.subr.mxu0 %v919
    %1618 = vmatpush1.msra.mxu0 %v918
    %1619 = vmatprep.subr.mxu0 %v915
    %1620 = vmatpush1.msra.mxu0 %v914
    %1621 = vmatprep.subr.mxu0 %v911
    %1622 = vmatpush1.msra.mxu0 %v910
    %1623 = vmatprep.subr.mxu0 %v907
    %1624 = vmatpush1.msra.mxu0 %v906
    %1625 = vmatprep.subr.mxu0 %v903
    %1626 = vmatpush1.msra.mxu0 %v902
    %1627 = vmatprep.subr.mxu0 %v899
    %1628 = vmatpush1.msra.mxu0 %v898
    %1629 = vmatprep.subr.mxu0 %v895
    %1630 = vmatpush1.msra.mxu0 %v894
    %1631 = vmatprep.subr.mxu0 %v891
    %1632 = vmatpush1.msra.mxu0 %v890
    %1633 = vmatprep.subr.mxu0 %v1015
    %1634 = vmatpush2.msra.mxu0 %v1014
    %1635 = vmatprep.subr.mxu0 %v1011
    %1636 = vmatpush2.msra.mxu0 %v1010
    %1637 = vmatprep.subr.mxu0 %v1007
    %1638 = vmatpush2.msra.mxu0 %v1006
    %1639 = vmatprep.subr.mxu0 %v1003
    %1640 = vmatpush2.msra.mxu0 %v1002
    %1641 = vmatprep.subr.mxu0 %v999
    %1642 = vmatpush2.msra.mxu0 %v998
    %1643 = vmatprep.subr.mxu0 %v995
    %1644 = vmatpush2.msra.mxu0 %v994
    %1645 = vmatprep.subr.mxu0 %v991
    %1646 = vmatpush2.msra.mxu0 %v990
    %1647 = vmatprep.subr.mxu0 %v987
    %1648 = vmatpush2.msra.mxu0 %v986
    %1649 = vmatprep.subr.mxu0 %v983
    %1650 = vmatpush2.msra.mxu0 %v982
    %1651 = vmatprep.subr.mxu0 %v979
    %1652 = vmatpush2.msra.mxu0 %v978
    %1653 = vmatprep.subr.mxu0 %v975
    %1654 = vmatpush2.msra.mxu0 %v974
    %1655 = vmatprep.subr.mxu0 %v971
    %1656 = vmatpush2.msra.mxu0 %v970
    %1657 = vmatprep.subr.mxu0 %v967
    %1658 = vmatpush2.msra.mxu0 %v966
    %1659 = vmatprep.subr.mxu0 %v963
    %1660 = vmatpush2.msra.mxu0 %v962
    %1661 = vmatprep.subr.mxu0 %v959
    %1662 = vmatpush2.msra.mxu0 %v958
    %1663 = vmatprep.subr.mxu0 %v955
    %1664 = vmatpush2.msra.mxu0 %v954
    %v1665 = vand.u32 %v817, 4294901760
    %v1666 = vsub.f32 %v817, %v1665
    %v1667 = vand.u32 %v1666, 4294901760
    %1668 = vmatprep.mubr.f32.mxu0 %v1667
    %v1669 = vand.u32 %v815, 4294901760
    %v1670 = vsub.f32 %v815, %v1669
    %v1671 = vand.u32 %v1670, 4294901760
    %1672 = vmatmul.mubr.f32.gmra.mxu0 %v1671
    %v1673 = vpop.f32.mrf.mxu0
    %v1674 = vadd.f32 %v1587, %v1673
    %v1675 = vpop.f32.mrf.mxu0
    %v1676 = vadd.f32 %v1589, %v1675
    %v1677 = vand.u32 %v824, 4294901760
    %v1678 = vsub.f32 %v824, %v1677
    %v1679 = vand.u32 %v1678, 4294901760
    %1680 = vmatprep.mubr.f32.mxu0 %v1679
    %v1681 = vand.u32 %v822, 4294901760
    %v1682 = vsub.f32 %v822, %v1681
    %v1683 = vand.u32 %v1682, 4294901760
    %1684 = vmatmul.mubr.f32.gmra.mxu0 %v1683
    %v1685 = vpop.f32.mrf.mxu0
    %v1686 = vadd.f32 %v1597, %v1685
    %v1687 = vpop.f32.mrf.mxu0
    %v1688 = vadd.f32 %v1599, %v1687
    %1689 = vdwg.mxu0
    %v1690 = vsub.f32 %v951, %v951
    %v1691 = vand.u32 %v1690, 4294901760
    %1692 = vmatprep.subr.mxu0 %v1691
    %v1693 = vsub.f32 %v950, %v950
    %v1694 = vand.u32 %v1693, 4294901760
    %1695 = vmatpush1.msra.mxu0 %v1694
    %v1696 = vsub.f32 %v947, %v947
    %v1697 = vand.u32 %v1696, 4294901760
    %1698 = vmatprep.subr.mxu0 %v1697
    %v1699 = vsub.f32 %v946, %v946
    %v1700 = vand.u32 %v1699, 4294901760
    %1701 = vmatpush1.msra.mxu0 %v1700
    %v1702 = vsub.f32 %v943, %v943
    %v1703 = vand.u32 %v1702, 4294901760
    %1704 = vmatprep.subr.mxu0 %v1703
    %v1705 = vsub.f32 %v942, %v942
    %v1706 = vand.u32 %v1705, 4294901760
    %1707 = vmatpush1.msra.mxu0 %v1706
    %v1708 = vsub.f32 %v939, %v939
    %v1709 = vand.u32 %v1708, 4294901760
    %1710 = vmatprep.subr.mxu0 %v1709
    %v1711 = vsub.f32 %v938, %v938
    %v1712 = vand.u32 %v1711, 4294901760
    %1713 = vmatpush1.msra.mxu0 %v1712
    %v1714 = vsub.f32 %v935, %v935
    %v1715 = vand.u32 %v1714, 4294901760
    %1716 = vmatprep.subr.mxu0 %v1715
    %v1717 = vsub.f32 %v934, %v934
    %v1718 = vand.u32 %v1717, 4294901760
    %1719 = vmatpush1.msra.mxu0 %v1718
    %v1720 = vsub.f32 %v931, %v931
    %v1721 = vand.u32 %v1720, 4294901760
    %1722 = vmatprep.subr.mxu0 %v1721
    %v1723 = vsub.f32 %v930, %v930
    %v1724 = vand.u32 %v1723, 4294901760
    %1725 = vmatpush1.msra.mxu0 %v1724
    %v1726 = vsub.f32 %v927, %v927
    %v1727 = vand.u32 %v1726, 4294901760
    %1728 = vmatprep.subr.mxu0 %v1727
    %v1729 = vsub.f32 %v926, %v926
    %v1730 = vand.u32 %v1729, 4294901760
    %1731 = vmatpush1.msra.mxu0 %v1730
    %v1732 = vsub.f32 %v923, %v923
    %v1733 = vand.u32 %v1732, 4294901760
    %1734 = vmatprep.subr.mxu0 %v1733
    %v1735 = vsub.f32 %v922, %v922
    %v1736 = vand.u32 %v1735, 4294901760
    %1737 = vmatpush1.msra.mxu0 %v1736
    %v1738 = vsub.f32 %v919, %v919
    %v1739 = vand.u32 %v1738, 4294901760
    %1740 = vmatprep.subr.mxu0 %v1739
    %v1741 = vsub.f32 %v918, %v918
    %v1742 = vand.u32 %v1741, 4294901760
    %1743 = vmatpush1.msra.mxu0 %v1742
    %v1744 = vsub.f32 %v915, %v915
    %v1745 = vand.u32 %v1744, 4294901760
    %1746 = vmatprep.subr.mxu0 %v1745
    %v1747 = vsub.f32 %v914, %v914
    %v1748 = vand.u32 %v1747, 4294901760
    %1749 = vmatpush1.msra.mxu0 %v1748
    %v1750 = vsub.f32 %v911, %v911
    %v1751 = vand.u32 %v1750, 4294901760
    %1752 = vmatprep.subr.mxu0 %v1751
    %v1753 = vsub.f32 %v910, %v910
    %v1754 = vand.u32 %v1753, 4294901760
    %1755 = vmatpush1.msra.mxu0 %v1754
    %v1756 = vsub.f32 %v907, %v907
    %v1757 = vand.u32 %v1756, 4294901760
    %1758 = vmatprep.subr.mxu0 %v1757
    %v1759 = vsub.f32 %v906, %v906
    %v1760 = vand.u32 %v1759, 4294901760
    %1761 = vmatpush1.msra.mxu0 %v1760
    %v1762 = vsub.f32 %v903, %v903
    %v1763 = vand.u32 %v1762, 4294901760
    %1764 = vmatprep.subr.mxu0 %v1763
    %v1765 = vsub.f32 %v902, %v902
    %v1766 = vand.u32 %v1765, 4294901760
    %1767 = vmatpush1.msra.mxu0 %v1766
    %v1768 = vsub.f32 %v899, %v899
    %v1769 = vand.u32 %v1768, 4294901760
    %1770 = vmatprep.subr.mxu0 %v1769
    %v1771 = vsub.f32 %v898, %v898
    %v1772 = vand.u32 %v1771, 4294901760
    %1773 = vmatpush1.msra.mxu0 %v1772
    %v1774 = vsub.f32 %v895, %v895
    %v1775 = vand.u32 %v1774, 4294901760
    %1776 = vmatprep.subr.mxu0 %v1775
    %v1777 = vsub.f32 %v894, %v894
    %v1778 = vand.u32 %v1777, 4294901760
    %1779 = vmatpush1.msra.mxu0 %v1778
    %v1780 = vsub.f32 %v891, %v891
    %v1781 = vand.u32 %v1780, 4294901760
    %1782 = vmatprep.subr.mxu0 %v1781
    %v1783 = vsub.f32 %v890, %v890
    %v1784 = vand.u32 %v1783, 4294901760
    %1785 = vmatpush1.msra.mxu0 %v1784
    %v1786 = vsub.f32 %v1015, %v1015
    %v1787 = vand.u32 %v1786, 4294901760
    %1788 = vmatprep.subr.mxu0 %v1787
    %v1789 = vsub.f32 %v1014, %v1014
    %v1790 = vand.u32 %v1789, 4294901760
    %1791 = vmatpush2.msra.mxu0 %v1790
    %v1792 = vsub.f32 %v1011, %v1011
    %v1793 = vand.u32 %v1792, 4294901760
    %1794 = vmatprep.subr.mxu0 %v1793
    %v1795 = vsub.f32 %v1010, %v1010
    %v1796 = vand.u32 %v1795, 4294901760
    %1797 = vmatpush2.msra.mxu0 %v1796
    %v1798 = vsub.f32 %v1007, %v1007
    %v1799 = vand.u32 %v1798, 4294901760
    %1800 = vmatprep.subr.mxu0 %v1799
    %v1801 = vsub.f32 %v1006, %v1006
    %v1802 = vand.u32 %v1801, 4294901760
    %1803 = vmatpush2.msra.mxu0 %v1802
    %v1804 = vsub.f32 %v1003, %v1003
    %v1805 = vand.u32 %v1804, 4294901760
    %1806 = vmatprep.subr.mxu0 %v1805
    %v1807 = vsub.f32 %v1002, %v1002
    %v1808 = vand.u32 %v1807, 4294901760
    %1809 = vmatpush2.msra.mxu0 %v1808
    %v1810 = vsub.f32 %v999, %v999
    %v1811 = vand.u32 %v1810, 4294901760
    %1812 = vmatprep.subr.mxu0 %v1811
    %v1813 = vsub.f32 %v998, %v998
    %v1814 = vand.u32 %v1813, 4294901760
    %1815 = vmatpush2.msra.mxu0 %v1814
    %v1816 = vsub.f32 %v995, %v995
    %v1817 = vand.u32 %v1816, 4294901760
    %1818 = vmatprep.subr.mxu0 %v1817
    %v1819 = vsub.f32 %v994, %v994
    %v1820 = vand.u32 %v1819, 4294901760
    %1821 = vmatpush2.msra.mxu0 %v1820
    %v1822 = vsub.f32 %v991, %v991
    %v1823 = vand.u32 %v1822, 4294901760
    %1824 = vmatprep.subr.mxu0 %v1823
    %v1825 = vsub.f32 %v990, %v990
    %v1826 = vand.u32 %v1825, 4294901760
    %1827 = vmatpush2.msra.mxu0 %v1826
    %v1828 = vsub.f32 %v987, %v987
    %v1829 = vand.u32 %v1828, 4294901760
    %1830 = vmatprep.subr.mxu0 %v1829
    %v1831 = vsub.f32 %v986, %v986
    %v1832 = vand.u32 %v1831, 4294901760
    %1833 = vmatpush2.msra.mxu0 %v1832
    %v1834 = vsub.f32 %v983, %v983
    %v1835 = vand.u32 %v1834, 4294901760
    %1836 = vmatprep.subr.mxu0 %v1835
    %v1837 = vsub.f32 %v982, %v982
    %v1838 = vand.u32 %v1837, 4294901760
    %1839 = vmatpush2.msra.mxu0 %v1838
    %v1840 = vsub.f32 %v979, %v979
    %v1841 = vand.u32 %v1840, 4294901760
    %1842 = vmatprep.subr.mxu0 %v1841
    %v1843 = vsub.f32 %v978, %v978
    %v1844 = vand.u32 %v1843, 4294901760
    %1845 = vmatpush2.msra.mxu0 %v1844
    %v1846 = vsub.f32 %v975, %v975
    %v1847 = vand.u32 %v1846, 4294901760
    %1848 = vmatprep.subr.mxu0 %v1847
    %v1849 = vsub.f32 %v974, %v974
    %v1850 = vand.u32 %v1849, 4294901760
    %1851 = vmatpush2.msra.mxu0 %v1850
    %v1852 = vsub.f32 %v971, %v971
    %v1853 = vand.u32 %v1852, 4294901760
    %1854 = vmatprep.subr.mxu0 %v1853
    %v1855 = vsub.f32 %v970, %v970
    %v1856 = vand.u32 %v1855, 4294901760
    %1857 = vmatpush2.msra.mxu0 %v1856
    %v1858 = vsub.f32 %v967, %v967
    %v1859 = vand.u32 %v1858, 4294901760
    %1860 = vmatprep.subr.mxu0 %v1859
    %v1861 = vsub.f32 %v966, %v966
    %v1862 = vand.u32 %v1861, 4294901760
    %1863 = vmatpush2.msra.mxu0 %v1862
    %v1864 = vsub.f32 %v963, %v963
    %v1865 = vand.u32 %v1864, 4294901760
    %1866 = vmatprep.subr.mxu0 %v1865
    %v1867 = vsub.f32 %v962, %v962
    %v1868 = vand.u32 %v1867, 4294901760
    %1869 = vmatpush2.msra.mxu0 %v1868
    %v1870 = vsub.f32 %v959, %v959
    %v1871 = vand.u32 %v1870, 4294901760
    %1872 = vmatprep.subr.mxu0 %v1871
    %v1873 = vsub.f32 %v958, %v958
    %v1874 = vand.u32 %v1873, 4294901760
    %1875 = vmatpush2.msra.mxu0 %v1874
    %v1876 = vsub.f32 %v955, %v955
    %v1877 = vand.u32 %v1876, 4294901760
    %1878 = vmatprep.subr.mxu0 %v1877
    %v1879 = vsub.f32 %v954, %v954
    %v1880 = vand.u32 %v1879, 4294901760
    %1881 = vmatpush2.msra.mxu0 %v1880
    %v1882 = vand.u32 %v817, 4294901760
    %1883 = vmatprep.mubr.f32.mxu0 %v1882
    %v1884 = vand.u32 %v815, 4294901760
    %1885 = vmatmul.mubr.f32.gmra.mxu0 %v1884
    %v1886 = vpop.f32.mrf.mxu0
    %v1887 = vadd.f32 %v1674, %v1886
    %v1888 = vpop.f32.mrf.mxu0
    %v1889 = vadd.f32 %v1676, %v1888
    %v1890 = vand.u32 %v824, 4294901760
    %1891 = vmatprep.mubr.f32.mxu0 %v1890
    %v1892 = vand.u32 %v822, 4294901760
    %1893 = vmatmul.mubr.f32.gmra.mxu0 %v1892
    %v1894 = vpop.f32.mrf.mxu0
    %v1895 = vadd.f32 %v1686, %v1894
    %v1896 = vpop.f32.mrf.mxu0
    %v1897 = vadd.f32 %v1688, %v1896
    %1898 = vdwg.mxu0
    %1899 = vmatprep.subr.mxu0 %v951
    %1900 = vmatpush1.msra.mxu0 %v950
    %1901 = vmatprep.subr.mxu0 %v947
    %1902 = vmatpush1.msra.mxu0 %v946
    %1903 = vmatprep.subr.mxu0 %v943
    %1904 = vmatpush1.msra.mxu0 %v942
    %1905 = vmatprep.subr.mxu0 %v939
    %1906 = vmatpush1.msra.mxu0 %v938
    %1907 = vmatprep.subr.mxu0 %v935
    %1908 = vmatpush1.msra.mxu0 %v934
    %1909 = vmatprep.subr.mxu0 %v931
    %1910 = vmatpush1.msra.mxu0 %v930
    %1911 = vmatprep.subr.mxu0 %v927
    %1912 = vmatpush1.msra.mxu0 %v926
    %1913 = vmatprep.subr.mxu0 %v923
    %1914 = vmatpush1.msra.mxu0 %v922
    %1915 = vmatprep.subr.mxu0 %v919
    %1916 = vmatpush1.msra.mxu0 %v918
    %1917 = vmatprep.subr.mxu0 %v915
    %1918 = vmatpush1.msra.mxu0 %v914
    %1919 = vmatprep.subr.mxu0 %v911
    %1920 = vmatpush1.msra.mxu0 %v910
    %1921 = vmatprep.subr.mxu0 %v907
    %1922 = vmatpush1.msra.mxu0 %v906
    %1923 = vmatprep.subr.mxu0 %v903
    %1924 = vmatpush1.msra.mxu0 %v902
    %1925 = vmatprep.subr.mxu0 %v899
    %1926 = vmatpush1.msra.mxu0 %v898
    %1927 = vmatprep.subr.mxu0 %v895
    %1928 = vmatpush1.msra.mxu0 %v894
    %1929 = vmatprep.subr.mxu0 %v891
    %1930 = vmatpush1.msra.mxu0 %v890
    %1931 = vmatprep.subr.mxu0 %v1015
    %1932 = vmatpush2.msra.mxu0 %v1014
    %1933 = vmatprep.subr.mxu0 %v1011
    %1934 = vmatpush2.msra.mxu0 %v1010
    %1935 = vmatprep.subr.mxu0 %v1007
    %1936 = vmatpush2.msra.mxu0 %v1006
    %1937 = vmatprep.subr.mxu0 %v1003
    %1938 = vmatpush2.msra.mxu0 %v1002
    %1939 = vmatprep.subr.mxu0 %v999
    %1940 = vmatpush2.msra.mxu0 %v998
    %1941 = vmatprep.subr.mxu0 %v995
    %1942 = vmatpush2.msra.mxu0 %v994
    %1943 = vmatprep.subr.mxu0 %v991
    %1944 = vmatpush2.msra.mxu0 %v990
    %1945 = vmatprep.subr.mxu0 %v987
    %1946 = vmatpush2.msra.mxu0 %v986
    %1947 = vmatprep.subr.mxu0 %v983
    %1948 = vmatpush2.msra.mxu0 %v982
    %1949 = vmatprep.subr.mxu0 %v979
    %1950 = vmatpush2.msra.mxu0 %v978
    %1951 = vmatprep.subr.mxu0 %v975
    %1952 = vmatpush2.msra.mxu0 %v974
    %1953 = vmatprep.subr.mxu0 %v971
    %1954 = vmatpush2.msra.mxu0 %v970
    %1955 = vmatprep.subr.mxu0 %v967
    %1956 = vmatpush2.msra.mxu0 %v966
    %1957 = vmatprep.subr.mxu0 %v963
    %1958 = vmatpush2.msra.mxu0 %v962
    %1959 = vmatprep.subr.mxu0 %v959
    %1960 = vmatpush2.msra.mxu0 %v958
    %1961 = vmatprep.subr.mxu0 %v955
    %1962 = vmatpush2.msra.mxu0 %v954
    %v1963 = vand.u32 %v817, 4294901760
    %1964 = vmatprep.mubr.f32.mxu0 %v1963
    %v1965 = vand.u32 %v815, 4294901760
    %1966 = vmatmul.mubr.f32.gmra.mxu0 %v1965
    %v1967 = vpop.f32.mrf.mxu0
    %v1968 = vadd.f32 %v1887, %v1967
    %v1969 = vpop.f32.mrf.mxu0
    %v1970 = vadd.f32 %v1889, %v1969
    %v1971 = vand.u32 %v824, 4294901760
    %1972 = vmatprep.mubr.f32.mxu0 %v1971
    %v1973 = vand.u32 %v822, 4294901760
    %1974 = vmatmul.mubr.f32.gmra.mxu0 %v1973
    %v1975 = vpop.f32.mrf.mxu0
    %v1976 = vadd.f32 %v1895, %v1975
    %v1977 = vpop.f32.mrf.mxu0
    %v1978 = vadd.f32 %v1897, %v1977
    %1979 = vdwg.mxu0
    %1980 = vmatprep.subr.mxu0 %v953
    %1981 = vmatpush1.msra.mxu0 %v952
    %1982 = vmatprep.subr.mxu0 %v949
    %1983 = vmatpush1.msra.mxu0 %v948
    %1984 = vmatprep.subr.mxu0 %v945
    %1985 = vmatpush1.msra.mxu0 %v944
    %1986 = vmatprep.subr.mxu0 %v941
    %1987 = vmatpush1.msra.mxu0 %v940
    %1988 = vmatprep.subr.mxu0 %v937
    %1989 = vmatpush1.msra.mxu0 %v936
    %1990 = vmatprep.subr.mxu0 %v933
    %1991 = vmatpush1.msra.mxu0 %v932
    %1992 = vmatprep.subr.mxu0 %v929
    %1993 = vmatpush1.msra.mxu0 %v928
    %1994 = vmatprep.subr.mxu0 %v925
    %1995 = vmatpush1.msra.mxu0 %v924
    %1996 = vmatprep.subr.mxu0 %v921
    %1997 = vmatpush1.msra.mxu0 %v920
    %1998 = vmatprep.subr.mxu0 %v917
    %1999 = vmatpush1.msra.mxu0 %v916
    %2000 = vmatprep.subr.mxu0 %v913
    %2001 = vmatpush1.msra.mxu0 %v912
    %2002 = vmatprep.subr.mxu0 %v909
    %2003 = vmatpush1.msra.mxu0 %v908
    %2004 = vmatprep.subr.mxu0 %v905
    %2005 = vmatpush1.msra.mxu0 %v904
    %2006 = vmatprep.subr.mxu0 %v901
    %2007 = vmatpush1.msra.mxu0 %v900
    %2008 = vmatprep.subr.mxu0 %v897
    %2009 = vmatpush1.msra.mxu0 %v896
    %2010 = vmatprep.subr.mxu0 %v893
    %2011 = vmatpush1.msra.mxu0 %v892
    %2012 = vmatprep.subr.mxu0 %v1017
    %2013 = vmatpush2.msra.mxu0 %v1016
    %2014 = vmatprep.subr.mxu0 %v1013
    %2015 = vmatpush2.msra.mxu0 %v1012
    %2016 = vmatprep.subr.mxu0 %v1009
    %2017 = vmatpush2.msra.mxu0 %v1008
    %2018 = vmatprep.subr.mxu0 %v1005
    %2019 = vmatpush2.msra.mxu0 %v1004
    %2020 = vmatprep.subr.mxu0 %v1001
    %2021 = vmatpush2.msra.mxu0 %v1000
    %2022 = vmatprep.subr.mxu0 %v997
    %2023 = vmatpush2.msra.mxu0 %v996
    %2024 = vmatprep.subr.mxu0 %v993
    %2025 = vmatpush2.msra.mxu0 %v992
    %2026 = vmatprep.subr.mxu0 %v989
    %2027 = vmatpush2.msra.mxu0 %v988
    %2028 = vmatprep.subr.mxu0 %v985
    %2029 = vmatpush2.msra.mxu0 %v984
    %2030 = vmatprep.subr.mxu0 %v981
    %2031 = vmatpush2.msra.mxu0 %v980
    %2032 = vmatprep.subr.mxu0 %v977
    %2033 = vmatpush2.msra.mxu0 %v976
    %2034 = vmatprep.subr.mxu0 %v973
    %2035 = vmatpush2.msra.mxu0 %v972
    %2036 = vmatprep.subr.mxu0 %v969
    %2037 = vmatpush2.msra.mxu0 %v968
    %2038 = vmatprep.subr.mxu0 %v965
    %2039 = vmatpush2.msra.mxu0 %v964
    %2040 = vmatprep.subr.mxu0 %v961
    %2041 = vmatpush2.msra.mxu0 %v960
    %2042 = vmatprep.subr.mxu0 %v957
    %2043 = vmatpush2.msra.mxu0 %v956
    %v2044 = vand.u32 %v817, 4294901760
    %v2045 = vsub.f32 %v817, %v2044
    %v2046 = vand.u32 %v2045, 4294901760
    %v2047 = vsub.f32 %v2045, %v2046
    %v2048 = vand.u32 %v2047, 4294901760
    %2049 = vmatprep.mubr.f32.mxu0 %v2048
    %v2050 = vand.u32 %v815, 4294901760
    %v2051 = vsub.f32 %v815, %v2050
    %v2052 = vand.u32 %v2051, 4294901760
    %v2053 = vsub.f32 %v2051, %v2052
    %v2054 = vand.u32 %v2053, 4294901760
    %2055 = vmatmul.mubr.f32.gmra.mxu0 %v2054
    %v2056 = vpop.f32.mrf.mxu0
    %v2057 = vadd.f32 0.0, %v2056
    %v2058 = vpop.f32.mrf.mxu0
    %v2059 = vadd.f32 0.0, %v2058
    %v2060 = vand.u32 %v824, 4294901760
    %v2061 = vsub.f32 %v824, %v2060
    %v2062 = vand.u32 %v2061, 4294901760
    %v2063 = vsub.f32 %v2061, %v2062
    %v2064 = vand.u32 %v2063, 4294901760
    %2065 = vmatprep.mubr.f32.mxu0 %v2064
    %v2066 = vand.u32 %v822, 4294901760
    %v2067 = vsub.f32 %v822, %v2066
    %v2068 = vand.u32 %v2067, 4294901760
    %v2069 = vsub.f32 %v2067, %v2068
    %v2070 = vand.u32 %v2069, 4294901760
    %2071 = vmatmul.mubr.f32.gmra.mxu0 %v2070
    %v2072 = vpop.f32.mrf.mxu0
    %v2073 = vadd.f32 0.0, %v2072
    %v2074 = vpop.f32.mrf.mxu0
    %v2075 = vadd.f32 0.0, %v2074
    %2076 = vdwg.mxu0
    %v2077 = vsub.f32 %v953, %v953
    %v2078 = vand.u32 %v2077, 4294901760
    %v2079 = vsub.f32 %v2077, %v2078
    %v2080 = vand.u32 %v2079, 4294901760
    %2081 = vmatprep.subr.mxu0 %v2080
    %v2082 = vsub.f32 %v952, %v952
    %v2083 = vand.u32 %v2082, 4294901760
    %v2084 = vsub.f32 %v2082, %v2083
    %v2085 = vand.u32 %v2084, 4294901760
    %2086 = vmatpush1.msra.mxu0 %v2085
    %v2087 = vsub.f32 %v949, %v949
    %v2088 = vand.u32 %v2087, 4294901760
    %v2089 = vsub.f32 %v2087, %v2088
    %v2090 = vand.u32 %v2089, 4294901760
    %2091 = vmatprep.subr.mxu0 %v2090
    %v2092 = vsub.f32 %v948, %v948
    %v2093 = vand.u32 %v2092, 4294901760
    %v2094 = vsub.f32 %v2092, %v2093
    %v2095 = vand.u32 %v2094, 4294901760
    %2096 = vmatpush1.msra.mxu0 %v2095
    %v2097 = vsub.f32 %v945, %v945
    %v2098 = vand.u32 %v2097, 4294901760
    %v2099 = vsub.f32 %v2097, %v2098
    %v2100 = vand.u32 %v2099, 4294901760
    %2101 = vmatprep.subr.mxu0 %v2100
    %v2102 = vsub.f32 %v944, %v944
    %v2103 = vand.u32 %v2102, 4294901760
    %v2104 = vsub.f32 %v2102, %v2103
    %v2105 = vand.u32 %v2104, 4294901760
    %2106 = vmatpush1.msra.mxu0 %v2105
    %v2107 = vsub.f32 %v941, %v941
    %v2108 = vand.u32 %v2107, 4294901760
    %v2109 = vsub.f32 %v2107, %v2108
    %v2110 = vand.u32 %v2109, 4294901760
    %2111 = vmatprep.subr.mxu0 %v2110
    %v2112 = vsub.f32 %v940, %v940
    %v2113 = vand.u32 %v2112, 4294901760
    %v2114 = vsub.f32 %v2112, %v2113
    %v2115 = vand.u32 %v2114, 4294901760
    %2116 = vmatpush1.msra.mxu0 %v2115
    %v2117 = vsub.f32 %v937, %v937
    %v2118 = vand.u32 %v2117, 4294901760
    %v2119 = vsub.f32 %v2117, %v2118
    %v2120 = vand.u32 %v2119, 4294901760
    %2121 = vmatprep.subr.mxu0 %v2120
    %v2122 = vsub.f32 %v936, %v936
    %v2123 = vand.u32 %v2122, 4294901760
    %v2124 = vsub.f32 %v2122, %v2123
    %v2125 = vand.u32 %v2124, 4294901760
    %2126 = vmatpush1.msra.mxu0 %v2125
    %v2127 = vsub.f32 %v933, %v933
    %v2128 = vand.u32 %v2127, 4294901760
    %v2129 = vsub.f32 %v2127, %v2128
    %v2130 = vand.u32 %v2129, 4294901760
    %2131 = vmatprep.subr.mxu0 %v2130
    %v2132 = vsub.f32 %v932, %v932
    %v2133 = vand.u32 %v2132, 4294901760
    %v2134 = vsub.f32 %v2132, %v2133
    %v2135 = vand.u32 %v2134, 4294901760
    %2136 = vmatpush1.msra.mxu0 %v2135
    %v2137 = vsub.f32 %v929, %v929
    %v2138 = vand.u32 %v2137, 4294901760
    %v2139 = vsub.f32 %v2137, %v2138
    %v2140 = vand.u32 %v2139, 4294901760
    %2141 = vmatprep.subr.mxu0 %v2140
    %v2142 = vsub.f32 %v928, %v928
    %v2143 = vand.u32 %v2142, 4294901760
    %v2144 = vsub.f32 %v2142, %v2143
    %v2145 = vand.u32 %v2144, 4294901760
    %2146 = vmatpush1.msra.mxu0 %v2145
    %v2147 = vsub.f32 %v925, %v925
    %v2148 = vand.u32 %v2147, 4294901760
    %v2149 = vsub.f32 %v2147, %v2148
    %v2150 = vand.u32 %v2149, 4294901760
    %2151 = vmatprep.subr.mxu0 %v2150
    %v2152 = vsub.f32 %v924, %v924
    %v2153 = vand.u32 %v2152, 4294901760
    %v2154 = vsub.f32 %v2152, %v2153
    %v2155 = vand.u32 %v2154, 4294901760
    %2156 = vmatpush1.msra.mxu0 %v2155
    %v2157 = vsub.f32 %v921, %v921
    %v2158 = vand.u32 %v2157, 4294901760
    %v2159 = vsub.f32 %v2157, %v2158
    %v2160 = vand.u32 %v2159, 4294901760
    %2161 = vmatprep.subr.mxu0 %v2160
    %v2162 = vsub.f32 %v920, %v920
    %v2163 = vand.u32 %v2162, 4294901760
    %v2164 = vsub.f32 %v2162, %v2163
    %v2165 = vand.u32 %v2164, 4294901760
    %2166 = vmatpush1.msra.mxu0 %v2165
    %v2167 = vsub.f32 %v917, %v917
    %v2168 = vand.u32 %v2167, 4294901760
    %v2169 = vsub.f32 %v2167, %v2168
    %v2170 = vand.u32 %v2169, 4294901760
    %2171 = vmatprep.subr.mxu0 %v2170
    %v2172 = vsub.f32 %v916, %v916
    %v2173 = vand.u32 %v2172, 4294901760
    %v2174 = vsub.f32 %v2172, %v2173
    %v2175 = vand.u32 %v2174, 4294901760
    %2176 = vmatpush1.msra.mxu0 %v2175
    %v2177 = vsub.f32 %v913, %v913
    %v2178 = vand.u32 %v2177, 4294901760
    %v2179 = vsub.f32 %v2177, %v2178
    %v2180 = vand.u32 %v2179, 4294901760
    %2181 = vmatprep.subr.mxu0 %v2180
    %v2182 = vsub.f32 %v912, %v912
    %v2183 = vand.u32 %v2182, 4294901760
    %v2184 = vsub.f32 %v2182, %v2183
    %v2185 = vand.u32 %v2184, 4294901760
    %2186 = vmatpush1.msra.mxu0 %v2185
    %v2187 = vsub.f32 %v909, %v909
    %v2188 = vand.u32 %v2187, 4294901760
    %v2189 = vsub.f32 %v2187, %v2188
    %v2190 = vand.u32 %v2189, 4294901760
    %2191 = vmatprep.subr.mxu0 %v2190
    %v2192 = vsub.f32 %v908, %v908
    %v2193 = vand.u32 %v2192, 4294901760
    %v2194 = vsub.f32 %v2192, %v2193
    %v2195 = vand.u32 %v2194, 4294901760
    %2196 = vmatpush1.msra.mxu0 %v2195
    %v2197 = vsub.f32 %v905, %v905
    %v2198 = vand.u32 %v2197, 4294901760
    %v2199 = vsub.f32 %v2197, %v2198
    %v2200 = vand.u32 %v2199, 4294901760
    %2201 = vmatprep.subr.mxu0 %v2200
    %v2202 = vsub.f32 %v904, %v904
    %v2203 = vand.u32 %v2202, 4294901760
    %v2204 = vsub.f32 %v2202, %v2203
    %v2205 = vand.u32 %v2204, 4294901760
    %2206 = vmatpush1.msra.mxu0 %v2205
    %v2207 = vsub.f32 %v901, %v901
    %v2208 = vand.u32 %v2207, 4294901760
    %v2209 = vsub.f32 %v2207, %v2208
    %v2210 = vand.u32 %v2209, 4294901760
    %2211 = vmatprep.subr.mxu0 %v2210
    %v2212 = vsub.f32 %v900, %v900
    %v2213 = vand.u32 %v2212, 4294901760
    %v2214 = vsub.f32 %v2212, %v2213
    %v2215 = vand.u32 %v2214, 4294901760
    %2216 = vmatpush1.msra.mxu0 %v2215
    %v2217 = vsub.f32 %v897, %v897
    %v2218 = vand.u32 %v2217, 4294901760
    %v2219 = vsub.f32 %v2217, %v2218
    %v2220 = vand.u32 %v2219, 4294901760
    %2221 = vmatprep.subr.mxu0 %v2220
    %v2222 = vsub.f32 %v896, %v896
    %v2223 = vand.u32 %v2222, 4294901760
    %v2224 = vsub.f32 %v2222, %v2223
    %v2225 = vand.u32 %v2224, 4294901760
    %2226 = vmatpush1.msra.mxu0 %v2225
    %v2227 = vsub.f32 %v893, %v893
    %v2228 = vand.u32 %v2227, 4294901760
    %v2229 = vsub.f32 %v2227, %v2228
    %v2230 = vand.u32 %v2229, 4294901760
    %2231 = vmatprep.subr.mxu0 %v2230
    %v2232 = vsub.f32 %v892, %v892
    %v2233 = vand.u32 %v2232, 4294901760
    %v2234 = vsub.f32 %v2232, %v2233
    %v2235 = vand.u32 %v2234, 4294901760
    %2236 = vmatpush1.msra.mxu0 %v2235
    %v2237 = vsub.f32 %v1017, %v1017
    %v2238 = vand.u32 %v2237, 4294901760
    %v2239 = vsub.f32 %v2237, %v2238
    %v2240 = vand.u32 %v2239, 4294901760
    %2241 = vmatprep.subr.mxu0 %v2240
    %v2242 = vsub.f32 %v1016, %v1016
    %v2243 = vand.u32 %v2242, 4294901760
    %v2244 = vsub.f32 %v2242, %v2243
    %v2245 = vand.u32 %v2244, 4294901760
    %2246 = vmatpush2.msra.mxu0 %v2245
    %v2247 = vsub.f32 %v1013, %v1013
    %v2248 = vand.u32 %v2247, 4294901760
    %v2249 = vsub.f32 %v2247, %v2248
    %v2250 = vand.u32 %v2249, 4294901760
    %2251 = vmatprep.subr.mxu0 %v2250
    %v2252 = vsub.f32 %v1012, %v1012
    %v2253 = vand.u32 %v2252, 4294901760
    %v2254 = vsub.f32 %v2252, %v2253
    %v2255 = vand.u32 %v2254, 4294901760
    %2256 = vmatpush2.msra.mxu0 %v2255
    %v2257 = vsub.f32 %v1009, %v1009
    %v2258 = vand.u32 %v2257, 4294901760
    %v2259 = vsub.f32 %v2257, %v2258
    %v2260 = vand.u32 %v2259, 4294901760
    %2261 = vmatprep.subr.mxu0 %v2260
    %v2262 = vsub.f32 %v1008, %v1008
    %v2263 = vand.u32 %v2262, 4294901760
    %v2264 = vsub.f32 %v2262, %v2263
    %v2265 = vand.u32 %v2264, 4294901760
    %2266 = vmatpush2.msra.mxu0 %v2265
    %v2267 = vsub.f32 %v1005, %v1005
    %v2268 = vand.u32 %v2267, 4294901760
    %v2269 = vsub.f32 %v2267, %v2268
    %v2270 = vand.u32 %v2269, 4294901760
    %2271 = vmatprep.subr.mxu0 %v2270
    %v2272 = vsub.f32 %v1004, %v1004
    %v2273 = vand.u32 %v2272, 4294901760
    %v2274 = vsub.f32 %v2272, %v2273
    %v2275 = vand.u32 %v2274, 4294901760
    %2276 = vmatpush2.msra.mxu0 %v2275
    %v2277 = vsub.f32 %v1001, %v1001
    %v2278 = vand.u32 %v2277, 4294901760
    %v2279 = vsub.f32 %v2277, %v2278
    %v2280 = vand.u32 %v2279, 4294901760
    %2281 = vmatprep.subr.mxu0 %v2280
    %v2282 = vsub.f32 %v1000, %v1000
    %v2283 = vand.u32 %v2282, 4294901760
    %v2284 = vsub.f32 %v2282, %v2283
    %v2285 = vand.u32 %v2284, 4294901760
    %2286 = vmatpush2.msra.mxu0 %v2285
    %v2287 = vsub.f32 %v997, %v997
    %v2288 = vand.u32 %v2287, 4294901760
    %v2289 = vsub.f32 %v2287, %v2288
    %v2290 = vand.u32 %v2289, 4294901760
    %2291 = vmatprep.subr.mxu0 %v2290
    %v2292 = vsub.f32 %v996, %v996
    %v2293 = vand.u32 %v2292, 4294901760
    %v2294 = vsub.f32 %v2292, %v2293
    %v2295 = vand.u32 %v2294, 4294901760
    %2296 = vmatpush2.msra.mxu0 %v2295
    %v2297 = vsub.f32 %v993, %v993
    %v2298 = vand.u32 %v2297, 4294901760
    %v2299 = vsub.f32 %v2297, %v2298
    %v2300 = vand.u32 %v2299, 4294901760
    %2301 = vmatprep.subr.mxu0 %v2300
    %v2302 = vsub.f32 %v992, %v992
    %v2303 = vand.u32 %v2302, 4294901760
    %v2304 = vsub.f32 %v2302, %v2303
    %v2305 = vand.u32 %v2304, 4294901760
    %2306 = vmatpush2.msra.mxu0 %v2305
    %v2307 = vsub.f32 %v989, %v989
    %v2308 = vand.u32 %v2307, 4294901760
    %v2309 = vsub.f32 %v2307, %v2308
    %v2310 = vand.u32 %v2309, 4294901760
    %2311 = vmatprep.subr.mxu0 %v2310
    %v2312 = vsub.f32 %v988, %v988
    %v2313 = vand.u32 %v2312, 4294901760
    %v2314 = vsub.f32 %v2312, %v2313
    %v2315 = vand.u32 %v2314, 4294901760
    %2316 = vmatpush2.msra.mxu0 %v2315
    %v2317 = vsub.f32 %v985, %v985
    %v2318 = vand.u32 %v2317, 4294901760
    %v2319 = vsub.f32 %v2317, %v2318
    %v2320 = vand.u32 %v2319, 4294901760
    %2321 = vmatprep.subr.mxu0 %v2320
    %v2322 = vsub.f32 %v984, %v984
    %v2323 = vand.u32 %v2322, 4294901760
    %v2324 = vsub.f32 %v2322, %v2323
    %v2325 = vand.u32 %v2324, 4294901760
    %2326 = vmatpush2.msra.mxu0 %v2325
    %v2327 = vsub.f32 %v981, %v981
    %v2328 = vand.u32 %v2327, 4294901760
    %v2329 = vsub.f32 %v2327, %v2328
    %v2330 = vand.u32 %v2329, 4294901760
    %2331 = vmatprep.subr.mxu0 %v2330
    %v2332 = vsub.f32 %v980, %v980
    %v2333 = vand.u32 %v2332, 4294901760
    %v2334 = vsub.f32 %v2332, %v2333
    %v2335 = vand.u32 %v2334, 4294901760
    %2336 = vmatpush2.msra.mxu0 %v2335
    %v2337 = vsub.f32 %v977, %v977
    %v2338 = vand.u32 %v2337, 4294901760
    %v2339 = vsub.f32 %v2337, %v2338
    %v2340 = vand.u32 %v2339, 4294901760
    %2341 = vmatprep.subr.mxu0 %v2340
    %v2342 = vsub.f32 %v976, %v976
    %v2343 = vand.u32 %v2342, 4294901760
    %v2344 = vsub.f32 %v2342, %v2343
    %v2345 = vand.u32 %v2344, 4294901760
    %2346 = vmatpush2.msra.mxu0 %v2345
    %v2347 = vsub.f32 %v973, %v973
    %v2348 = vand.u32 %v2347, 4294901760
    %v2349 = vsub.f32 %v2347, %v2348
    %v2350 = vand.u32 %v2349, 4294901760
    %2351 = vmatprep.subr.mxu0 %v2350
    %v2352 = vsub.f32 %v972, %v972
    %v2353 = vand.u32 %v2352, 4294901760
    %v2354 = vsub.f32 %v2352, %v2353
    %v2355 = vand.u32 %v2354, 4294901760
    %2356 = vmatpush2.msra.mxu0 %v2355
    %v2357 = vsub.f32 %v969, %v969
    %v2358 = vand.u32 %v2357, 4294901760
    %v2359 = vsub.f32 %v2357, %v2358
    %v2360 = vand.u32 %v2359, 4294901760
    %2361 = vmatprep.subr.mxu0 %v2360
    %v2362 = vsub.f32 %v968, %v968
    %v2363 = vand.u32 %v2362, 4294901760
    %v2364 = vsub.f32 %v2362, %v2363
    %v2365 = vand.u32 %v2364, 4294901760
    %2366 = vmatpush2.msra.mxu0 %v2365
    %v2367 = vsub.f32 %v965, %v965
    %v2368 = vand.u32 %v2367, 4294901760
    %v2369 = vsub.f32 %v2367, %v2368
    %v2370 = vand.u32 %v2369, 4294901760
    %2371 = vmatprep.subr.mxu0 %v2370
    %v2372 = vsub.f32 %v964, %v964
    %v2373 = vand.u32 %v2372, 4294901760
    %v2374 = vsub.f32 %v2372, %v2373
    %v2375 = vand.u32 %v2374, 4294901760
    %2376 = vmatpush2.msra.mxu0 %v2375
    %v2377 = vsub.f32 %v961, %v961
    %v2378 = vand.u32 %v2377, 4294901760
    %v2379 = vsub.f32 %v2377, %v2378
    %v2380 = vand.u32 %v2379, 4294901760
    %2381 = vmatprep.subr.mxu0 %v2380
    %v2382 = vsub.f32 %v960, %v960
    %v2383 = vand.u32 %v2382, 4294901760
    %v2384 = vsub.f32 %v2382, %v2383
    %v2385 = vand.u32 %v2384, 4294901760
    %2386 = vmatpush2.msra.mxu0 %v2385
    %v2387 = vsub.f32 %v957, %v957
    %v2388 = vand.u32 %v2387, 4294901760
    %v2389 = vsub.f32 %v2387, %v2388
    %v2390 = vand.u32 %v2389, 4294901760
    %2391 = vmatprep.subr.mxu0 %v2390
    %v2392 = vsub.f32 %v956, %v956
    %v2393 = vand.u32 %v2392, 4294901760
    %v2394 = vsub.f32 %v2392, %v2393
    %v2395 = vand.u32 %v2394, 4294901760
    %2396 = vmatpush2.msra.mxu0 %v2395
    %v2397 = vand.u32 %v817, 4294901760
    %2398 = vmatprep.mubr.f32.mxu0 %v2397
    %v2399 = vand.u32 %v815, 4294901760
    %2400 = vmatmul.mubr.f32.gmra.mxu0 %v2399
    %v2401 = vpop.f32.mrf.mxu0
    %v2402 = vadd.f32 %v2057, %v2401
    %v2403 = vpop.f32.mrf.mxu0
    %v2404 = vadd.f32 %v2059, %v2403
    %v2405 = vand.u32 %v824, 4294901760
    %2406 = vmatprep.mubr.f32.mxu0 %v2405
    %v2407 = vand.u32 %v822, 4294901760
    %2408 = vmatmul.mubr.f32.gmra.mxu0 %v2407
    %v2409 = vpop.f32.mrf.mxu0
    %v2410 = vadd.f32 %v2073, %v2409
    %v2411 = vpop.f32.mrf.mxu0
    %v2412 = vadd.f32 %v2075, %v2411
    %2413 = vdwg.mxu0
    %v2414 = vsub.f32 %v953, %v953
    %2415 = vmatprep.subr.mxu0 %v2414
    %v2416 = vsub.f32 %v952, %v952
    %2417 = vmatpush1.msra.mxu0 %v2416
    %v2418 = vsub.f32 %v949, %v949
    %2419 = vmatprep.subr.mxu0 %v2418
    %v2420 = vsub.f32 %v948, %v948
    %2421 = vmatpush1.msra.mxu0 %v2420
    %v2422 = vsub.f32 %v945, %v945
    %2423 = vmatprep.subr.mxu0 %v2422
    %v2424 = vsub.f32 %v944, %v944
    %2425 = vmatpush1.msra.mxu0 %v2424
    %v2426 = vsub.f32 %v941, %v941
    %2427 = vmatprep.subr.mxu0 %v2426
    %v2428 = vsub.f32 %v940, %v940
    %2429 = vmatpush1.msra.mxu0 %v2428
    %v2430 = vsub.f32 %v937, %v937
    %2431 = vmatprep.subr.mxu0 %v2430
    %v2432 = vsub.f32 %v936, %v936
    %2433 = vmatpush1.msra.mxu0 %v2432
    %v2434 = vsub.f32 %v933, %v933
    %2435 = vmatprep.subr.mxu0 %v2434
    %v2436 = vsub.f32 %v932, %v932
    %2437 = vmatpush1.msra.mxu0 %v2436
    %v2438 = vsub.f32 %v929, %v929
    %2439 = vmatprep.subr.mxu0 %v2438
    %v2440 = vsub.f32 %v928, %v928
    %2441 = vmatpush1.msra.mxu0 %v2440
    %v2442 = vsub.f32 %v925, %v925
    %2443 = vmatprep.subr.mxu0 %v2442
    %v2444 = vsub.f32 %v924, %v924
    %2445 = vmatpush1.msra.mxu0 %v2444
    %v2446 = vsub.f32 %v921, %v921
    %2447 = vmatprep.subr.mxu0 %v2446
    %v2448 = vsub.f32 %v920, %v920
    %2449 = vmatpush1.msra.mxu0 %v2448
    %v2450 = vsub.f32 %v917, %v917
    %2451 = vmatprep.subr.mxu0 %v2450
    %v2452 = vsub.f32 %v916, %v916
    %2453 = vmatpush1.msra.mxu0 %v2452
    %v2454 = vsub.f32 %v913, %v913
    %2455 = vmatprep.subr.mxu0 %v2454
    %v2456 = vsub.f32 %v912, %v912
    %2457 = vmatpush1.msra.mxu0 %v2456
    %v2458 = vsub.f32 %v909, %v909
    %2459 = vmatprep.subr.mxu0 %v2458
    %v2460 = vsub.f32 %v908, %v908
    %2461 = vmatpush1.msra.mxu0 %v2460
    %v2462 = vsub.f32 %v905, %v905
    %2463 = vmatprep.subr.mxu0 %v2462
    %v2464 = vsub.f32 %v904, %v904
    %2465 = vmatpush1.msra.mxu0 %v2464
    %v2466 = vsub.f32 %v901, %v901
    %2467 = vmatprep.subr.mxu0 %v2466
    %v2468 = vsub.f32 %v900, %v900
    %2469 = vmatpush1.msra.mxu0 %v2468
    %v2470 = vsub.f32 %v897, %v897
    %2471 = vmatprep.subr.mxu0 %v2470
    %v2472 = vsub.f32 %v896, %v896
    %2473 = vmatpush1.msra.mxu0 %v2472
    %v2474 = vsub.f32 %v893, %v893
    %2475 = vmatprep.subr.mxu0 %v2474
    %v2476 = vsub.f32 %v892, %v892
    %2477 = vmatpush1.msra.mxu0 %v2476
    %v2478 = vsub.f32 %v1017, %v1017
    %2479 = vmatprep.subr.mxu0 %v2478
    %v2480 = vsub.f32 %v1016, %v1016
    %2481 = vmatpush2.msra.mxu0 %v2480
    %v2482 = vsub.f32 %v1013, %v1013
    %2483 = vmatprep.subr.mxu0 %v2482
    %v2484 = vsub.f32 %v1012, %v1012
    %2485 = vmatpush2.msra.mxu0 %v2484
    %v2486 = vsub.f32 %v1009, %v1009
    %2487 = vmatprep.subr.mxu0 %v2486
    %v2488 = vsub.f32 %v1008, %v1008
    %2489 = vmatpush2.msra.mxu0 %v2488
    %v2490 = vsub.f32 %v1005, %v1005
    %2491 = vmatprep.subr.mxu0 %v2490
    %v2492 = vsub.f32 %v1004, %v1004
    %2493 = vmatpush2.msra.mxu0 %v2492
    %v2494 = vsub.f32 %v1001, %v1001
    %2495 = vmatprep.subr.mxu0 %v2494
    %v2496 = vsub.f32 %v1000, %v1000
    %2497 = vmatpush2.msra.mxu0 %v2496
    %v2498 = vsub.f32 %v997, %v997
    %2499 = vmatprep.subr.mxu0 %v2498
    %v2500 = vsub.f32 %v996, %v996
    %2501 = vmatpush2.msra.mxu0 %v2500
    %v2502 = vsub.f32 %v993, %v993
    %2503 = vmatprep.subr.mxu0 %v2502
    %v2504 = vsub.f32 %v992, %v992
    %2505 = vmatpush2.msra.mxu0 %v2504
    %v2506 = vsub.f32 %v989, %v989
    %2507 = vmatprep.subr.mxu0 %v2506
    %v2508 = vsub.f32 %v988, %v988
    %2509 = vmatpush2.msra.mxu0 %v2508
    %v2510 = vsub.f32 %v985, %v985
    %2511 = vmatprep.subr.mxu0 %v2510
    %v2512 = vsub.f32 %v984, %v984
    %2513 = vmatpush2.msra.mxu0 %v2512
    %v2514 = vsub.f32 %v981, %v981
    %2515 = vmatprep.subr.mxu0 %v2514
    %v2516 = vsub.f32 %v980, %v980
    %2517 = vmatpush2.msra.mxu0 %v2516
    %v2518 = vsub.f32 %v977, %v977
    %2519 = vmatprep.subr.mxu0 %v2518
    %v2520 = vsub.f32 %v976, %v976
    %2521 = vmatpush2.msra.mxu0 %v2520
    %v2522 = vsub.f32 %v973, %v973
    %2523 = vmatprep.subr.mxu0 %v2522
    %v2524 = vsub.f32 %v972, %v972
    %2525 = vmatpush2.msra.mxu0 %v2524
    %v2526 = vsub.f32 %v969, %v969
    %2527 = vmatprep.subr.mxu0 %v2526
    %v2528 = vsub.f32 %v968, %v968
    %2529 = vmatpush2.msra.mxu0 %v2528
    %v2530 = vsub.f32 %v965, %v965
    %2531 = vmatprep.subr.mxu0 %v2530
    %v2532 = vsub.f32 %v964, %v964
    %2533 = vmatpush2.msra.mxu0 %v2532
    %v2534 = vsub.f32 %v961, %v961
    %2535 = vmatprep.subr.mxu0 %v2534
    %v2536 = vsub.f32 %v960, %v960
    %2537 = vmatpush2.msra.mxu0 %v2536
    %v2538 = vsub.f32 %v957, %v957
    %2539 = vmatprep.subr.mxu0 %v2538
    %v2540 = vsub.f32 %v956, %v956
    %2541 = vmatpush2.msra.mxu0 %v2540
    %v2542 = vand.u32 %v817, 4294901760
    %v2543 = vsub.f32 %v817, %v2542
    %2544 = vmatprep.mubr.f32.mxu0 %v2543
    %v2545 = vand.u32 %v815, 4294901760
    %v2546 = vsub.f32 %v815, %v2545
    %2547 = vmatmul.mubr.f32.gmra.mxu0 %v2546
    %v2548 = vpop.f32.mrf.mxu0
    %v2549 = vadd.f32 %v2402, %v2548
    %v2550 = vpop.f32.mrf.mxu0
    %v2551 = vadd.f32 %v2404, %v2550
    %v2552 = vand.u32 %v824, 4294901760
    %v2553 = vsub.f32 %v824, %v2552
    %2554 = vmatprep.mubr.f32.mxu0 %v2553
    %v2555 = vand.u32 %v822, 4294901760
    %v2556 = vsub.f32 %v822, %v2555
    %2557 = vmatmul.mubr.f32.gmra.mxu0 %v2556
    %v2558 = vpop.f32.mrf.mxu0
    %v2559 = vadd.f32 %v2410, %v2558
    %v2560 = vpop.f32.mrf.mxu0
    %v2561 = vadd.f32 %v2412, %v2560
    %2562 = vdwg.mxu0
    %2563 = vmatprep.subr.mxu0 %v953
    %2564 = vmatpush1.msra.mxu0 %v952
    %2565 = vmatprep.subr.mxu0 %v949
    %2566 = vmatpush1.msra.mxu0 %v948
    %2567 = vmatprep.subr.mxu0 %v945
    %2568 = vmatpush1.msra.mxu0 %v944
    %2569 = vmatprep.subr.mxu0 %v941
    %2570 = vmatpush1.msra.mxu0 %v940
    %2571 = vmatprep.subr.mxu0 %v937
    %2572 = vmatpush1.msra.mxu0 %v936
    %2573 = vmatprep.subr.mxu0 %v933
    %2574 = vmatpush1.msra.mxu0 %v932
    %2575 = vmatprep.subr.mxu0 %v929
    %2576 = vmatpush1.msra.mxu0 %v928
    %2577 = vmatprep.subr.mxu0 %v925
    %2578 = vmatpush1.msra.mxu0 %v924
    %2579 = vmatprep.subr.mxu0 %v921
    %2580 = vmatpush1.msra.mxu0 %v920
    %2581 = vmatprep.subr.mxu0 %v917
    %2582 = vmatpush1.msra.mxu0 %v916
    %2583 = vmatprep.subr.mxu0 %v913
    %2584 = vmatpush1.msra.mxu0 %v912
    %2585 = vmatprep.subr.mxu0 %v909
    %2586 = vmatpush1.msra.mxu0 %v908
    %2587 = vmatprep.subr.mxu0 %v905
    %2588 = vmatpush1.msra.mxu0 %v904
    %2589 = vmatprep.subr.mxu0 %v901
    %2590 = vmatpush1.msra.mxu0 %v900
    %2591 = vmatprep.subr.mxu0 %v897
    %2592 = vmatpush1.msra.mxu0 %v896
    %2593 = vmatprep.subr.mxu0 %v893
    %2594 = vmatpush1.msra.mxu0 %v892
    %2595 = vmatprep.subr.mxu0 %v1017
    %2596 = vmatpush2.msra.mxu0 %v1016
    %2597 = vmatprep.subr.mxu0 %v1013
    %2598 = vmatpush2.msra.mxu0 %v1012
    %2599 = vmatprep.subr.mxu0 %v1009
    %2600 = vmatpush2.msra.mxu0 %v1008
    %2601 = vmatprep.subr.mxu0 %v1005
    %2602 = vmatpush2.msra.mxu0 %v1004
    %2603 = vmatprep.subr.mxu0 %v1001
    %2604 = vmatpush2.msra.mxu0 %v1000
    %2605 = vmatprep.subr.mxu0 %v997
    %2606 = vmatpush2.msra.mxu0 %v996
    %2607 = vmatprep.subr.mxu0 %v993
    %2608 = vmatpush2.msra.mxu0 %v992
    %2609 = vmatprep.subr.mxu0 %v989
    %2610 = vmatpush2.msra.mxu0 %v988
    %2611 = vmatprep.subr.mxu0 %v985
    %2612 = vmatpush2.msra.mxu0 %v984
    %2613 = vmatprep.subr.mxu0 %v981
    %2614 = vmatpush2.msra.mxu0 %v980
    %2615 = vmatprep.subr.mxu0 %v977
    %2616 = vmatpush2.msra.mxu0 %v976
    %2617 = vmatprep.subr.mxu0 %v973
    %2618 = vmatpush2.msra.mxu0 %v972
    %2619 = vmatprep.subr.mxu0 %v969
    %2620 = vmatpush2.msra.mxu0 %v968
    %2621 = vmatprep.subr.mxu0 %v965
    %2622 = vmatpush2.msra.mxu0 %v964
    %2623 = vmatprep.subr.mxu0 %v961
    %2624 = vmatpush2.msra.mxu0 %v960
    %2625 = vmatprep.subr.mxu0 %v957
    %2626 = vmatpush2.msra.mxu0 %v956
    %v2627 = vand.u32 %v817, 4294901760
    %v2628 = vsub.f32 %v817, %v2627
    %v2629 = vand.u32 %v2628, 4294901760
    %2630 = vmatprep.mubr.f32.mxu0 %v2629
    %v2631 = vand.u32 %v815, 4294901760
    %v2632 = vsub.f32 %v815, %v2631
    %v2633 = vand.u32 %v2632, 4294901760
    %2634 = vmatmul.mubr.f32.gmra.mxu0 %v2633
    %v2635 = vpop.f32.mrf.mxu0
    %v2636 = vadd.f32 %v2549, %v2635
    %v2637 = vpop.f32.mrf.mxu0
    %v2638 = vadd.f32 %v2551, %v2637
    %v2639 = vand.u32 %v824, 4294901760
    %v2640 = vsub.f32 %v824, %v2639
    %v2641 = vand.u32 %v2640, 4294901760
    %2642 = vmatprep.mubr.f32.mxu0 %v2641
    %v2643 = vand.u32 %v822, 4294901760
    %v2644 = vsub.f32 %v822, %v2643
    %v2645 = vand.u32 %v2644, 4294901760
    %2646 = vmatmul.mubr.f32.gmra.mxu0 %v2645
    %v2647 = vpop.f32.mrf.mxu0
    %v2648 = vadd.f32 %v2559, %v2647
    %v2649 = vpop.f32.mrf.mxu0
    %v2650 = vadd.f32 %v2561, %v2649
    %2651 = vdwg.mxu0
    %v2652 = vsub.f32 %v953, %v953
    %v2653 = vand.u32 %v2652, 4294901760
    %2654 = vmatprep.subr.mxu0 %v2653
    %v2655 = vsub.f32 %v952, %v952
    %v2656 = vand.u32 %v2655, 4294901760
    %2657 = vmatpush1.msra.mxu0 %v2656
    %v2658 = vsub.f32 %v949, %v949
    %v2659 = vand.u32 %v2658, 4294901760
    %2660 = vmatprep.subr.mxu0 %v2659
    %v2661 = vsub.f32 %v948, %v948
    %v2662 = vand.u32 %v2661, 4294901760
    %2663 = vmatpush1.msra.mxu0 %v2662
    %v2664 = vsub.f32 %v945, %v945
    %v2665 = vand.u32 %v2664, 4294901760
    %2666 = vmatprep.subr.mxu0 %v2665
    %v2667 = vsub.f32 %v944, %v944
    %v2668 = vand.u32 %v2667, 4294901760
    %2669 = vmatpush1.msra.mxu0 %v2668
    %v2670 = vsub.f32 %v941, %v941
    %v2671 = vand.u32 %v2670, 4294901760
    %2672 = vmatprep.subr.mxu0 %v2671
    %v2673 = vsub.f32 %v940, %v940
    %v2674 = vand.u32 %v2673, 4294901760
    %2675 = vmatpush1.msra.mxu0 %v2674
    %v2676 = vsub.f32 %v937, %v937
    %v2677 = vand.u32 %v2676, 4294901760
    %2678 = vmatprep.subr.mxu0 %v2677
    %v2679 = vsub.f32 %v936, %v936
    %v2680 = vand.u32 %v2679, 4294901760
    %2681 = vmatpush1.msra.mxu0 %v2680
    %v2682 = vsub.f32 %v933, %v933
    %v2683 = vand.u32 %v2682, 4294901760
    %2684 = vmatprep.subr.mxu0 %v2683
    %v2685 = vsub.f32 %v932, %v932
    %v2686 = vand.u32 %v2685, 4294901760
    %2687 = vmatpush1.msra.mxu0 %v2686
    %v2688 = vsub.f32 %v929, %v929
    %v2689 = vand.u32 %v2688, 4294901760
    %2690 = vmatprep.subr.mxu0 %v2689
    %v2691 = vsub.f32 %v928, %v928
    %v2692 = vand.u32 %v2691, 4294901760
    %2693 = vmatpush1.msra.mxu0 %v2692
    %v2694 = vsub.f32 %v925, %v925
    %v2695 = vand.u32 %v2694, 4294901760
    %2696 = vmatprep.subr.mxu0 %v2695
    %v2697 = vsub.f32 %v924, %v924
    %v2698 = vand.u32 %v2697, 4294901760
    %2699 = vmatpush1.msra.mxu0 %v2698
    %v2700 = vsub.f32 %v921, %v921
    %v2701 = vand.u32 %v2700, 4294901760
    %2702 = vmatprep.subr.mxu0 %v2701
    %v2703 = vsub.f32 %v920, %v920
    %v2704 = vand.u32 %v2703, 4294901760
    %2705 = vmatpush1.msra.mxu0 %v2704
    %v2706 = vsub.f32 %v917, %v917
    %v2707 = vand.u32 %v2706, 4294901760
    %2708 = vmatprep.subr.mxu0 %v2707
    %v2709 = vsub.f32 %v916, %v916
    %v2710 = vand.u32 %v2709, 4294901760
    %2711 = vmatpush1.msra.mxu0 %v2710
    %v2712 = vsub.f32 %v913, %v913
    %v2713 = vand.u32 %v2712, 4294901760
    %2714 = vmatprep.subr.mxu0 %v2713
    %v2715 = vsub.f32 %v912, %v912
    %v2716 = vand.u32 %v2715, 4294901760
    %2717 = vmatpush1.msra.mxu0 %v2716
    %v2718 = vsub.f32 %v909, %v909
    %v2719 = vand.u32 %v2718, 4294901760
    %2720 = vmatprep.subr.mxu0 %v2719
    %v2721 = vsub.f32 %v908, %v908
    %v2722 = vand.u32 %v2721, 4294901760
    %2723 = vmatpush1.msra.mxu0 %v2722
    %v2724 = vsub.f32 %v905, %v905
    %v2725 = vand.u32 %v2724, 4294901760
    %2726 = vmatprep.subr.mxu0 %v2725
    %v2727 = vsub.f32 %v904, %v904
    %v2728 = vand.u32 %v2727, 4294901760
    %2729 = vmatpush1.msra.mxu0 %v2728
    %v2730 = vsub.f32 %v901, %v901
    %v2731 = vand.u32 %v2730, 4294901760
    %2732 = vmatprep.subr.mxu0 %v2731
    %v2733 = vsub.f32 %v900, %v900
    %v2734 = vand.u32 %v2733, 4294901760
    %2735 = vmatpush1.msra.mxu0 %v2734
    %v2736 = vsub.f32 %v897, %v897
    %v2737 = vand.u32 %v2736, 4294901760
    %2738 = vmatprep.subr.mxu0 %v2737
    %v2739 = vsub.f32 %v896, %v896
    %v2740 = vand.u32 %v2739, 4294901760
    %2741 = vmatpush1.msra.mxu0 %v2740
    %v2742 = vsub.f32 %v893, %v893
    %v2743 = vand.u32 %v2742, 4294901760
    %2744 = vmatprep.subr.mxu0 %v2743
    %v2745 = vsub.f32 %v892, %v892
    %v2746 = vand.u32 %v2745, 4294901760
    %2747 = vmatpush1.msra.mxu0 %v2746
    %v2748 = vsub.f32 %v1017, %v1017
    %v2749 = vand.u32 %v2748, 4294901760
    %2750 = vmatprep.subr.mxu0 %v2749
    %v2751 = vsub.f32 %v1016, %v1016
    %v2752 = vand.u32 %v2751, 4294901760
    %2753 = vmatpush2.msra.mxu0 %v2752
    %v2754 = vsub.f32 %v1013, %v1013
    %v2755 = vand.u32 %v2754, 4294901760
    %2756 = vmatprep.subr.mxu0 %v2755
    %v2757 = vsub.f32 %v1012, %v1012
    %v2758 = vand.u32 %v2757, 4294901760
    %2759 = vmatpush2.msra.mxu0 %v2758
    %v2760 = vsub.f32 %v1009, %v1009
    %v2761 = vand.u32 %v2760, 4294901760
    %2762 = vmatprep.subr.mxu0 %v2761
    %v2763 = vsub.f32 %v1008, %v1008
    %v2764 = vand.u32 %v2763, 4294901760
    %2765 = vmatpush2.msra.mxu0 %v2764
    %v2766 = vsub.f32 %v1005, %v1005
    %v2767 = vand.u32 %v2766, 4294901760
    %2768 = vmatprep.subr.mxu0 %v2767
    %v2769 = vsub.f32 %v1004, %v1004
    %v2770 = vand.u32 %v2769, 4294901760
    %2771 = vmatpush2.msra.mxu0 %v2770
    %v2772 = vsub.f32 %v1001, %v1001
    %v2773 = vand.u32 %v2772, 4294901760
    %2774 = vmatprep.subr.mxu0 %v2773
    %v2775 = vsub.f32 %v1000, %v1000
    %v2776 = vand.u32 %v2775, 4294901760
    %2777 = vmatpush2.msra.mxu0 %v2776
    %v2778 = vsub.f32 %v997, %v997
    %v2779 = vand.u32 %v2778, 4294901760
    %2780 = vmatprep.subr.mxu0 %v2779
    %v2781 = vsub.f32 %v996, %v996
    %v2782 = vand.u32 %v2781, 4294901760
    %2783 = vmatpush2.msra.mxu0 %v2782
    %v2784 = vsub.f32 %v993, %v993
    %v2785 = vand.u32 %v2784, 4294901760
    %2786 = vmatprep.subr.mxu0 %v2785
    %v2787 = vsub.f32 %v992, %v992
    %v2788 = vand.u32 %v2787, 4294901760
    %2789 = vmatpush2.msra.mxu0 %v2788
    %v2790 = vsub.f32 %v989, %v989
    %v2791 = vand.u32 %v2790, 4294901760
    %2792 = vmatprep.subr.mxu0 %v2791
    %v2793 = vsub.f32 %v988, %v988
    %v2794 = vand.u32 %v2793, 4294901760
    %2795 = vmatpush2.msra.mxu0 %v2794
    %v2796 = vsub.f32 %v985, %v985
    %v2797 = vand.u32 %v2796, 4294901760
    %2798 = vmatprep.subr.mxu0 %v2797
    %v2799 = vsub.f32 %v984, %v984
    %v2800 = vand.u32 %v2799, 4294901760
    %2801 = vmatpush2.msra.mxu0 %v2800
    %v2802 = vsub.f32 %v981, %v981
    %v2803 = vand.u32 %v2802, 4294901760
    %2804 = vmatprep.subr.mxu0 %v2803
    %v2805 = vsub.f32 %v980, %v980
    %v2806 = vand.u32 %v2805, 4294901760
    %2807 = vmatpush2.msra.mxu0 %v2806
    %v2808 = vsub.f32 %v977, %v977
    %v2809 = vand.u32 %v2808, 4294901760
    %2810 = vmatprep.subr.mxu0 %v2809
    %v2811 = vsub.f32 %v976, %v976
    %v2812 = vand.u32 %v2811, 4294901760
    %2813 = vmatpush2.msra.mxu0 %v2812
    %v2814 = vsub.f32 %v973, %v973
    %v2815 = vand.u32 %v2814, 4294901760
    %2816 = vmatprep.subr.mxu0 %v2815
    %v2817 = vsub.f32 %v972, %v972
    %v2818 = vand.u32 %v2817, 4294901760
    %2819 = vmatpush2.msra.mxu0 %v2818
    %v2820 = vsub.f32 %v969, %v969
    %v2821 = vand.u32 %v2820, 4294901760
    %2822 = vmatprep.subr.mxu0 %v2821
    %v2823 = vsub.f32 %v968, %v968
    %v2824 = vand.u32 %v2823, 4294901760
    %2825 = vmatpush2.msra.mxu0 %v2824
    %v2826 = vsub.f32 %v965, %v965
    %v2827 = vand.u32 %v2826, 4294901760
    %2828 = vmatprep.subr.mxu0 %v2827
    %v2829 = vsub.f32 %v964, %v964
    %v2830 = vand.u32 %v2829, 4294901760
    %2831 = vmatpush2.msra.mxu0 %v2830
    %v2832 = vsub.f32 %v961, %v961
    %v2833 = vand.u32 %v2832, 4294901760
    %2834 = vmatprep.subr.mxu0 %v2833
    %v2835 = vsub.f32 %v960, %v960
    %v2836 = vand.u32 %v2835, 4294901760
    %2837 = vmatpush2.msra.mxu0 %v2836
    %v2838 = vsub.f32 %v957, %v957
    %v2839 = vand.u32 %v2838, 4294901760
    %2840 = vmatprep.subr.mxu0 %v2839
    %v2841 = vsub.f32 %v956, %v956
    %v2842 = vand.u32 %v2841, 4294901760
    %2843 = vmatpush2.msra.mxu0 %v2842
    %v2844 = vand.u32 %v817, 4294901760
    %2845 = vmatprep.mubr.f32.mxu0 %v2844
    %v2846 = vand.u32 %v815, 4294901760
    %2847 = vmatmul.mubr.f32.gmra.mxu0 %v2846
    %v2848 = vpop.f32.mrf.mxu0
    %v2849 = vadd.f32 %v2636, %v2848
    %v2850 = vpop.f32.mrf.mxu0
    %v2851 = vadd.f32 %v2638, %v2850
    %v2852 = vand.u32 %v824, 4294901760
    %2853 = vmatprep.mubr.f32.mxu0 %v2852
    %v2854 = vand.u32 %v822, 4294901760
    %2855 = vmatmul.mubr.f32.gmra.mxu0 %v2854
    %v2856 = vpop.f32.mrf.mxu0
    %v2857 = vadd.f32 %v2648, %v2856
    %v2858 = vpop.f32.mrf.mxu0
    %v2859 = vadd.f32 %v2650, %v2858
    %2860 = vdwg.mxu0
    %2861 = vmatprep.subr.mxu0 %v953
    %2862 = vmatpush1.msra.mxu0 %v952
    %2863 = vmatprep.subr.mxu0 %v949
    %2864 = vmatpush1.msra.mxu0 %v948
    %2865 = vmatprep.subr.mxu0 %v945
    %2866 = vmatpush1.msra.mxu0 %v944
    %2867 = vmatprep.subr.mxu0 %v941
    %2868 = vmatpush1.msra.mxu0 %v940
    %2869 = vmatprep.subr.mxu0 %v937
    %2870 = vmatpush1.msra.mxu0 %v936
    %2871 = vmatprep.subr.mxu0 %v933
    %2872 = vmatpush1.msra.mxu0 %v932
    %2873 = vmatprep.subr.mxu0 %v929
    %2874 = vmatpush1.msra.mxu0 %v928
    %2875 = vmatprep.subr.mxu0 %v925
    %2876 = vmatpush1.msra.mxu0 %v924
    %2877 = vmatprep.subr.mxu0 %v921
    %2878 = vmatpush1.msra.mxu0 %v920
    %2879 = vmatprep.subr.mxu0 %v917
    %2880 = vmatpush1.msra.mxu0 %v916
    %2881 = vmatprep.subr.mxu0 %v913
    %2882 = vmatpush1.msra.mxu0 %v912
    %2883 = vmatprep.subr.mxu0 %v909
    %2884 = vmatpush1.msra.mxu0 %v908
    %2885 = vmatprep.subr.mxu0 %v905
    %2886 = vmatpush1.msra.mxu0 %v904
    %2887 = vmatprep.subr.mxu0 %v901
    %2888 = vmatpush1.msra.mxu0 %v900
    %2889 = vmatprep.subr.mxu0 %v897
    %2890 = vmatpush1.msra.mxu0 %v896
    %2891 = vmatprep.subr.mxu0 %v893
    %2892 = vmatpush1.msra.mxu0 %v892
    %2893 = vmatprep.subr.mxu0 %v1017
    %2894 = vmatpush2.msra.mxu0 %v1016
    %2895 = vmatprep.subr.mxu0 %v1013
    %2896 = vmatpush2.msra.mxu0 %v1012
    %2897 = vmatprep.subr.mxu0 %v1009
    %2898 = vmatpush2.msra.mxu0 %v1008
    %2899 = vmatprep.subr.mxu0 %v1005
    %2900 = vmatpush2.msra.mxu0 %v1004
    %2901 = vmatprep.subr.mxu0 %v1001
    %2902 = vmatpush2.msra.mxu0 %v1000
    %2903 = vmatprep.subr.mxu0 %v997
    %2904 = vmatpush2.msra.mxu0 %v996
    %2905 = vmatprep.subr.mxu0 %v993
    %2906 = vmatpush2.msra.mxu0 %v992
    %2907 = vmatprep.subr.mxu0 %v989
    %2908 = vmatpush2.msra.mxu0 %v988
    %2909 = vmatprep.subr.mxu0 %v985
    %2910 = vmatpush2.msra.mxu0 %v984
    %2911 = vmatprep.subr.mxu0 %v981
    %2912 = vmatpush2.msra.mxu0 %v980
    %2913 = vmatprep.subr.mxu0 %v977
    %2914 = vmatpush2.msra.mxu0 %v976
    %2915 = vmatprep.subr.mxu0 %v973
    %2916 = vmatpush2.msra.mxu0 %v972
    %2917 = vmatprep.subr.mxu0 %v969
    %2918 = vmatpush2.msra.mxu0 %v968
    %2919 = vmatprep.subr.mxu0 %v965
    %2920 = vmatpush2.msra.mxu0 %v964
    %2921 = vmatprep.subr.mxu0 %v961
    %2922 = vmatpush2.msra.mxu0 %v960
    %2923 = vmatprep.subr.mxu0 %v957
    %2924 = vmatpush2.msra.mxu0 %v956
    %v2925 = vand.u32 %v817, 4294901760
    %2926 = vmatprep.mubr.f32.mxu0 %v2925
    %v2927 = vand.u32 %v815, 4294901760
    %2928 = vmatmul.mubr.f32.gmra.mxu0 %v2927
    %v2929 = vpop.f32.mrf.mxu0
    %v2930 = vadd.f32 %v2849, %v2929
    %v2931 = vpop.f32.mrf.mxu0
    %v2932 = vadd.f32 %v2851, %v2931
    %v2933 = vand.u32 %v824, 4294901760
    %2934 = vmatprep.mubr.f32.mxu0 %v2933
    %v2935 = vand.u32 %v822, 4294901760
    %2936 = vmatmul.mubr.f32.gmra.mxu0 %v2935
    %v2937 = vpop.f32.mrf.mxu0
    %v2938 = vadd.f32 %v2857, %v2937
    %v2939 = vpop.f32.mrf.mxu0
    %v2940 = vadd.f32 %v2859, %v2939
    %2941 = vdwg.mxu0
    %v2942 = vmul.f32 %v1968, 0.5
    %v2943 = vmul.f32 %v1970, 0.5
    %v2944 = vmul.f32 %v2930, 0.5
    %v2945 = vmul.f32 %v2932, 0.5
    %v2946 = vmul.f32 %v1976, 0.5
    %v2947 = vmul.f32 %v1978, 0.5
    %v2948 = vmul.f32 %v2938, 0.5
    %v2949 = vmul.f32 %v2940, 0.5
    %v2950 = vmul.f32 %v1968, 0.70710677
    %v2951 = vmul.f32 %v1970, 0.70710677
    %v2952 = vmul.f32 %v2930, 0.70710677
    %v2953 = vmul.f32 %v2932, 0.70710677
    %v2954 = vmul.f32 %v1976, 0.70710677
    %v2955 = vmul.f32 %v1978, 0.70710677
    %v2956 = vmul.f32 %v2938, 0.70710677
    %v2957 = vmul.f32 %v2940, 0.70710677
    %vm2958 = vcmp.ge.f32.partialorder %v2950, 0.0
    %vm2959 = vcmp.ge.f32.partialorder %v2951, 0.0
    %vm2960 = vcmp.ge.f32.partialorder %v2952, 0.0
    %vm2961 = vcmp.ge.f32.partialorder %v2953, 0.0
    %vm2962 = vcmp.ge.f32.partialorder %v2954, 0.0
    %vm2963 = vcmp.ge.f32.partialorder %v2955, 0.0
    %vm2964 = vcmp.ge.f32.partialorder %v2956, 0.0
    %vm2965 = vcmp.ge.f32.partialorder %v2957, 0.0
    %v2966 = vsel %vm2958, 1.0, -1.0
    %v2967 = vsel %vm2959, 1.0, -1.0
    %v2968 = vsel %vm2960, 1.0, -1.0
    %v2969 = vsel %vm2961, 1.0, -1.0
    %v2970 = vsel %vm2962, 1.0, -1.0
    %v2971 = vsel %vm2963, 1.0, -1.0
    %v2972 = vsel %vm2964, 1.0, -1.0
    %v2973 = vsel %vm2965, 1.0, -1.0
    %v2974 = vand.u32 2147483647, %v2950
    %v2975 = vand.u32 2147483647, %v2951
    %v2976 = vand.u32 2147483647, %v2952
    %v2977 = vand.u32 2147483647, %v2953
    %v2978 = vand.u32 2147483647, %v2954
    %v2979 = vand.u32 2147483647, %v2955
    %v2980 = vand.u32 2147483647, %v2956
    %v2981 = vand.u32 2147483647, %v2957
    %v2982 = vmul.f32 %v2974, 0.3275911
    %v2983 = vmul.f32 %v2975, 0.3275911
    %v2984 = vmul.f32 %v2976, 0.3275911
    %v2985 = vmul.f32 %v2977, 0.3275911
    %v2986 = vmul.f32 %v2978, 0.3275911
    %v2987 = vmul.f32 %v2979, 0.3275911
    %v2988 = vmul.f32 %v2980, 0.3275911
    %v2989 = vmul.f32 %v2981, 0.3275911
    %v2990 = vadd.f32 %v2982, 1.0
    %v2991 = vadd.f32 %v2983, 1.0
    %v2992 = vadd.f32 %v2984, 1.0
    %v2993 = vadd.f32 %v2985, 1.0
    %v2994 = vadd.f32 %v2986, 1.0
    %v2995 = vadd.f32 %v2987, 1.0
    %v2996 = vadd.f32 %v2988, 1.0
    %v2997 = vadd.f32 %v2989, 1.0
    %v2998 = vrcp.pop %v2990
    %v2999 = vrcp.pop %v2991
    %v3000 = vrcp.pop %v2992
    %v3001 = vrcp.pop %v2993
    %v3002 = vrcp.pop %v2994
    %v3003 = vrcp.pop %v2995
    %v3004 = vrcp.pop %v2996
    %v3005 = vrcp.pop %v2997
    %v3006 = vmul.f32 %v2998, 1.0614054
    %v3007 = vmul.f32 %v2999, 1.0614054
    %v3008 = vmul.f32 %v3000, 1.0614054
    %v3009 = vmul.f32 %v3001, 1.0614054
    %v3010 = vmul.f32 %v3002, 1.0614054
    %v3011 = vmul.f32 %v3003, 1.0614054
    %v3012 = vmul.f32 %v3004, 1.0614054
    %v3013 = vmul.f32 %v3005, 1.0614054
    %v3014 = vadd.f32 %v3006, -1.4531521
    %v3015 = vadd.f32 %v3007, -1.4531521
    %v3016 = vadd.f32 %v3008, -1.4531521
    %v3017 = vadd.f32 %v3009, -1.4531521
    %v3018 = vadd.f32 %v3010, -1.4531521
    %v3019 = vadd.f32 %v3011, -1.4531521
    %v3020 = vadd.f32 %v3012, -1.4531521
    %v3021 = vadd.f32 %v3013, -1.4531521
    %v3022 = vmul.f32 %v3014, %v2998
    %v3023 = vmul.f32 %v3015, %v2999
    %v3024 = vmul.f32 %v3016, %v3000
    %v3025 = vmul.f32 %v3017, %v3001
    %v3026 = vmul.f32 %v3018, %v3002
    %v3027 = vmul.f32 %v3019, %v3003
    %v3028 = vmul.f32 %v3020, %v3004
    %v3029 = vmul.f32 %v3021, %v3005
    %v3030 = vadd.f32 %v3022, 1.4214138
    %v3031 = vadd.f32 %v3023, 1.4214138
    %v3032 = vadd.f32 %v3024, 1.4214138
    %v3033 = vadd.f32 %v3025, 1.4214138
    %v3034 = vadd.f32 %v3026, 1.4214138
    %v3035 = vadd.f32 %v3027, 1.4214138
    %v3036 = vadd.f32 %v3028, 1.4214138
    %v3037 = vadd.f32 %v3029, 1.4214138
    %v3038 = vmul.f32 %v3030, %v2998
    %v3039 = vmul.f32 %v3031, %v2999
    %v3040 = vmul.f32 %v3032, %v3000
    %v3041 = vmul.f32 %v3033, %v3001
    %v3042 = vmul.f32 %v3034, %v3002
    %v3043 = vmul.f32 %v3035, %v3003
    %v3044 = vmul.f32 %v3036, %v3004
    %v3045 = vmul.f32 %v3037, %v3005
    %v3046 = vadd.f32 %v3038, -0.28449672
    %v3047 = vadd.f32 %v3039, -0.28449672
    %v3048 = vadd.f32 %v3040, -0.28449672
    %v3049 = vadd.f32 %v3041, -0.28449672
    %v3050 = vadd.f32 %v3042, -0.28449672
    %v3051 = vadd.f32 %v3043, -0.28449672
    %v3052 = vadd.f32 %v3044, -0.28449672
    %v3053 = vadd.f32 %v3045, -0.28449672
    %v3054 = vmul.f32 %v3046, %v2998
    %v3055 = vmul.f32 %v3047, %v2999
    %v3056 = vmul.f32 %v3048, %v3000
    %v3057 = vmul.f32 %v3049, %v3001
    %v3058 = vmul.f32 %v3050, %v3002
    %v3059 = vmul.f32 %v3051, %v3003
    %v3060 = vmul.f32 %v3052, %v3004
    %v3061 = vmul.f32 %v3053, %v3005
    %v3062 = vadd.f32 %v3054, 0.2548296
    %v3063 = vadd.f32 %v3055, 0.2548296
    %v3064 = vadd.f32 %v3056, 0.2548296
    %v3065 = vadd.f32 %v3057, 0.2548296
    %v3066 = vadd.f32 %v3058, 0.2548296
    %v3067 = vadd.f32 %v3059, 0.2548296
    %v3068 = vadd.f32 %v3060, 0.2548296
    %v3069 = vadd.f32 %v3061, 0.2548296
    %v3070 = vmul.f32 %v3062, %v2998
    %v3071 = vmul.f32 %v3063, %v2999
    %v3072 = vmul.f32 %v3064, %v3000
    %v3073 = vmul.f32 %v3065, %v3001
    %v3074 = vmul.f32 %v3066, %v3002
    %v3075 = vmul.f32 %v3067, %v3003
    %v3076 = vmul.f32 %v3068, %v3004
    %v3077 = vmul.f32 %v3069, %v3005
    %v3078 = vsub.f32 0.0, %v2974
    %v3079 = vsub.f32 0.0, %v2975
    %v3080 = vsub.f32 0.0, %v2976
    %v3081 = vsub.f32 0.0, %v2977
    %v3082 = vsub.f32 0.0, %v2978
    %v3083 = vsub.f32 0.0, %v2979
    %v3084 = vsub.f32 0.0, %v2980
    %v3085 = vsub.f32 0.0, %v2981
    %v3086 = vmul.f32 %v3078, %v2974
    %v3087 = vmul.f32 %v3079, %v2975
    %v3088 = vmul.f32 %v3080, %v2976
    %v3089 = vmul.f32 %v3081, %v2977
    %v3090 = vmul.f32 %v3082, %v2978
    %v3091 = vmul.f32 %v3083, %v2979
    %v3092 = vmul.f32 %v3084, %v2980
    %v3093 = vmul.f32 %v3085, %v2981
    %v3094 = vmul.f32 %v3086, 1.442695
    %v3095 = vpow.pop %v3094
    %v3096 = vmul.f32 %v3087, 1.442695
    %v3097 = vpow.pop %v3096
    %v3098 = vmul.f32 %v3088, 1.442695
    %v3099 = vpow.pop %v3098
    %v3100 = vmul.f32 %v3089, 1.442695
    %v3101 = vpow.pop %v3100
    %v3102 = vmul.f32 %v3090, 1.442695
    %v3103 = vpow.pop %v3102
    %v3104 = vmul.f32 %v3091, 1.442695
    %v3105 = vpow.pop %v3104
    %v3106 = vmul.f32 %v3092, 1.442695
    %v3107 = vpow.pop %v3106
    %v3108 = vmul.f32 %v3093, 1.442695
    %v3109 = vpow.pop %v3108
    %v3110 = vmul.f32 %v3070, %v3095
    %v3111 = vmul.f32 %v3071, %v3097
    %v3112 = vmul.f32 %v3072, %v3099
    %v3113 = vmul.f32 %v3073, %v3101
    %v3114 = vmul.f32 %v3074, %v3103
    %v3115 = vmul.f32 %v3075, %v3105
    %v3116 = vmul.f32 %v3076, %v3107
    %v3117 = vmul.f32 %v3077, %v3109
    %v3118 = vsub.f32 1.0, %v3110
    %v3119 = vsub.f32 1.0, %v3111
    %v3120 = vsub.f32 1.0, %v3112
    %v3121 = vsub.f32 1.0, %v3113
    %v3122 = vsub.f32 1.0, %v3114
    %v3123 = vsub.f32 1.0, %v3115
    %v3124 = vsub.f32 1.0, %v3116
    %v3125 = vsub.f32 1.0, %v3117
    %v3126 = vmul.f32 %v2966, %v3118
    %v3127 = vmul.f32 %v2967, %v3119
    %v3128 = vmul.f32 %v2968, %v3120
    %v3129 = vmul.f32 %v2969, %v3121
    %v3130 = vmul.f32 %v2970, %v3122
    %v3131 = vmul.f32 %v2971, %v3123
    %v3132 = vmul.f32 %v2972, %v3124
    %v3133 = vmul.f32 %v2973, %v3125
    %v3134 = vadd.f32 %v3126, 1.0
    %v3135 = vadd.f32 %v3127, 1.0
    %v3136 = vadd.f32 %v3128, 1.0
    %v3137 = vadd.f32 %v3129, 1.0
    %v3138 = vadd.f32 %v3130, 1.0
    %v3139 = vadd.f32 %v3131, 1.0
    %v3140 = vadd.f32 %v3132, 1.0
    %v3141 = vadd.f32 %v3133, 1.0
    %v3142 = vmul.f32 %v2942, %v3134
    %v3143 = vmul.f32 %v2943, %v3135
    %v3144 = vmul.f32 %v2944, %v3136
    %v3145 = vmul.f32 %v2945, %v3137
    %v3146 = vmul.f32 %v2946, %v3138
    %v3147 = vmul.f32 %v2947, %v3139
    %v3148 = vmul.f32 %v2948, %v3140
    %v3149 = vmul.f32 %v2949, %v3141
    %v3150 = vadd.s32 %v42, 128
    %v3151 = vadd.s32 %v42, 256
    %v3152 = vadd.s32 %v42, 384
    %3153 = vrot.lane.b32.xlu0 %v3142, 127
    %v3154 = vpop.permute.xlu0 %3153
    %3155 = vrot.lane.b32.xlu0 %v3146, 127
    %v3156 = vpop.permute.xlu0 %3155
    %3157 = vrot.lane.b32.xlu0 %v3143, 127
    %v3158 = vpop.permute.xlu0 %3157
    %3159 = vrot.lane.b32.xlu0 %v3147, 127
    %v3160 = vpop.permute.xlu0 %3159
    %3161 = vrot.lane.b32.xlu0 %v3144, 127
    %v3162 = vpop.permute.xlu0 %3161
    %3163 = vrot.lane.b32.xlu0 %v3148, 127
    %v3164 = vpop.permute.xlu0 %3163
    %3165 = vrot.lane.b32.xlu0 %v3145, 127
    %v3166 = vpop.permute.xlu0 %3165
    %3167 = vrot.lane.b32.xlu0 %v3149, 127
    %v3168 = vpop.permute.xlu0 %3167
    %v3169 = vsel %vm43, %v3162, %v3166
    %v3170 = vsel %vm43, %v3164, %v3168
    %v3171 = vsel %vm43, %v3158, %v3162
    %v3172 = vsel %vm43, %v3160, %v3164
    %v3173 = vsel %vm43, %v3154, %v3158
    %v3174 = vsel %vm43, %v3156, %v3160
    %v3175 = vsel %vm43, %v3166, %v3154
    %v3176 = vsel %vm43, %v3168, %v3156
    %3177 = vrot.lane.b32.xlu0 %v3142, 1
    %v3178 = vpop.permute.xlu0 %3177
    %3179 = vrot.lane.b32.xlu0 %v3146, 1
    %v3180 = vpop.permute.xlu0 %3179
    %3181 = vrot.lane.b32.xlu0 %v3143, 1
    %v3182 = vpop.permute.xlu0 %3181
    %3183 = vrot.lane.b32.xlu0 %v3147, 1
    %v3184 = vpop.permute.xlu0 %3183
    %3185 = vrot.lane.b32.xlu0 %v3144, 1
    %v3186 = vpop.permute.xlu0 %3185
    %3187 = vrot.lane.b32.xlu0 %v3148, 1
    %v3188 = vpop.permute.xlu0 %3187
    %3189 = vrot.lane.b32.xlu0 %v3145, 1
    %v3190 = vpop.permute.xlu0 %3189
    %3191 = vrot.lane.b32.xlu0 %v3149, 1
    %v3192 = vpop.permute.xlu0 %3191
    %vm3193 = vcmp.lt.s32.totalorder %v42, 1
    %v3194 = vsel %vm3193, %v3186, %v3190
    %v3195 = vsel %vm3193, %v3188, %v3192
    %v3196 = vsel %vm3193, %v3182, %v3186
    %v3197 = vsel %vm3193, %v3184, %v3188
    %v3198 = vsel %vm3193, %v3178, %v3182
    %v3199 = vsel %vm3193, %v3180, %v3184
    %v3200 = vsel %vm3193, %v3190, %v3178
    %v3201 = vsel %vm3193, %v3192, %v3180
    %3202 = vrot.lane.b32.xlu0 %v3142, 2
    %v3203 = vpop.permute.xlu0 %3202
    %3204 = vrot.lane.b32.xlu0 %v3146, 2
    %v3205 = vpop.permute.xlu0 %3204
    %3206 = vrot.lane.b32.xlu0 %v3143, 2
    %v3207 = vpop.permute.xlu0 %3206
    %3208 = vrot.lane.b32.xlu0 %v3147, 2
    %v3209 = vpop.permute.xlu0 %3208
    %3210 = vrot.lane.b32.xlu0 %v3144, 2
    %v3211 = vpop.permute.xlu0 %3210
    %3212 = vrot.lane.b32.xlu0 %v3148, 2
    %v3213 = vpop.permute.xlu0 %3212
    %3214 = vrot.lane.b32.xlu0 %v3145, 2
    %v3215 = vpop.permute.xlu0 %3214
    %3216 = vrot.lane.b32.xlu0 %v3149, 2
    %v3217 = vpop.permute.xlu0 %3216
    %vm3218 = vcmp.lt.s32.totalorder %v42, 2
    %v3219 = vsel %vm3218, %v3211, %v3215
    %v3220 = vsel %vm3218, %v3213, %v3217
    %v3221 = vsel %vm3218, %v3207, %v3211
    %v3222 = vsel %vm3218, %v3209, %v3213
    %v3223 = vsel %vm3218, %v3203, %v3207
    %v3224 = vsel %vm3218, %v3205, %v3209
    %v3225 = vsel %vm3218, %v3215, %v3203
    %v3226 = vsel %vm3218, %v3217, %v3205
    %vm3227 = vcmp.lt.s32.totalorder %v42, 392
    %vm3228 = vcmp.lt.s32.totalorder %v3150, 392
    %vm3229 = vcmp.lt.s32.totalorder %v3151, 392
    %vm3230 = vcmp.lt.s32.totalorder %v3152, 392
    %v3231 = vld [vmem:[%s3] sm:$0xff]
    %v3233 = vsel %vm97, %v3231, 0
    %3235 = vmatprep.subr.mxu0 0.0
    %3236 = vmatpush1.msra.mxu0 0.0
    %3237 = vmatprep.subr.mxu0 0.0
    %3238 = vmatpush1.msra.mxu0 0.0
    %3239 = vmatprep.subr.mxu0 0.0
    %3240 = vmatpush1.msra.mxu0 0.0
    %3241 = vmatprep.subr.mxu0 0.0
    %3242 = vmatpush1.msra.mxu0 0.0
    %3243 = vmatprep.subr.mxu0 0.0
    %3244 = vmatpush1.msra.mxu0 0.0
    %3245 = vmatprep.subr.mxu0 0.0
    %3246 = vmatpush1.msra.mxu0 0.0
    %3247 = vmatprep.subr.mxu0 0.0
    %3248 = vmatpush1.msra.mxu0 0.0
    %3249 = vmatprep.subr.mxu0 1.0
    %3250 = vmatpush1.msra.mxu0 1.0
    %v3251 = vand.u32 %v3224, 4294901760
    %3252 = vmatprep.subr.mxu0 %v3251
    %v3253 = vand.u32 %v3226, 4294901760
    %3254 = vmatpush1.msra.mxu0 %v3253
    %v3255 = vand.u32 %v3223, 4294901760
    %3256 = vmatprep.subr.mxu0 %v3255
    %v3257 = vand.u32 %v3225, 4294901760
    %3258 = vmatpush1.msra.mxu0 %v3257
    %v3259 = vand.u32 %v3199, 4294901760
    %3260 = vmatprep.subr.mxu0 %v3259
    %v3261 = vand.u32 %v3201, 4294901760
    %3262 = vmatpush1.msra.mxu0 %v3261
    %v3263 = vand.u32 %v3198, 4294901760
    %3264 = vmatprep.subr.mxu0 %v3263
    %v3265 = vand.u32 %v3200, 4294901760
    %3266 = vmatpush1.msra.mxu0 %v3265
    %v3267 = vand.u32 %v3147, 4294901760
    %3268 = vmatprep.subr.mxu0 %v3267
    %v3269 = vand.u32 %v3146, 4294901760
    %3270 = vmatpush1.msra.mxu0 %v3269
    %v3271 = vand.u32 %v3143, 4294901760
    %3272 = vmatprep.subr.mxu0 %v3271
    %v3273 = vand.u32 %v3142, 4294901760
    %3274 = vmatpush1.msra.mxu0 %v3273
    %v3275 = vand.u32 %v3172, 4294901760
    %3276 = vmatprep.subr.mxu0 %v3275
    %v3277 = vand.u32 %v3174, 4294901760
    %3278 = vmatpush1.msra.mxu0 %v3277
    %v3279 = vand.u32 %v3171, 4294901760
    %3280 = vmatprep.subr.mxu0 %v3279
    %v3281 = vand.u32 %v3173, 4294901760
    %3282 = vmatpush1.msra.mxu0 %v3281
    %3283 = vmatprep.subr.mxu0 0.0
    %3284 = vmatpush2.msra.mxu0 0.0
    %3285 = vmatprep.subr.mxu0 0.0
    %3286 = vmatpush2.msra.mxu0 0.0
    %3287 = vmatprep.subr.mxu0 0.0
    %3288 = vmatpush2.msra.mxu0 0.0
    %3289 = vmatprep.subr.mxu0 0.0
    %3290 = vmatpush2.msra.mxu0 0.0
    %3291 = vmatprep.subr.mxu0 0.0
    %3292 = vmatpush2.msra.mxu0 0.0
    %3293 = vmatprep.subr.mxu0 0.0
    %3294 = vmatpush2.msra.mxu0 0.0
    %3295 = vmatprep.subr.mxu0 0.0
    %3296 = vmatpush2.msra.mxu0 0.0
    %3297 = vmatprep.subr.mxu0 0.0
    %3298 = vmatpush2.msra.mxu0 0.0
    %3299 = vmatprep.subr.mxu0 0.0
    %3300 = vmatpush2.msra.mxu0 0.0
    %3301 = vmatprep.subr.mxu0 0.0
    %3302 = vmatpush2.msra.mxu0 0.0
    %3303 = vmatprep.subr.mxu0 0.0
    %3304 = vmatpush2.msra.mxu0 0.0
    %3305 = vmatprep.subr.mxu0 0.0
    %3306 = vmatpush2.msra.mxu0 0.0
    %3307 = vmatprep.subr.mxu0 0.0
    %3308 = vmatpush2.msra.mxu0 0.0
    %3309 = vmatprep.subr.mxu0 0.0
    %3310 = vmatpush2.msra.mxu0 0.0
    %3311 = vmatprep.subr.mxu0 0.0
    %3312 = vmatpush2.msra.mxu0 0.0
    %3313 = vmatprep.subr.mxu0 0.0
    %3314 = vmatpush2.msra.mxu0 0.0
    %3315 = vmatprep.mubr.f32.mxu0 0.0
    %v3316 = vand.u32 %v3233, 4294901760
    %v3317 = vsub.f32 %v3233, %v3316
    %v3318 = vand.u32 %v3317, 4294901760
    %v3319 = vsub.f32 %v3317, %v3318
    %v3320 = vand.u32 %v3319, 4294901760
    %3321 = vmatmul.mubr.f32.gmra.mxu0 %v3320
    %v3322 = vpop.f32.mrf.mxu0
    %v3323 = vadd.f32 0.0, %v3322
    %v3324 = vpop.f32.mrf.mxu0
    %v3325 = vadd.f32 0.0, %v3324
    %3326 = vdwg.mxu0
    %3327 = vmatprep.subr.mxu0 0.0
    %3328 = vmatpush1.msra.mxu0 0.0
    %3329 = vmatprep.subr.mxu0 0.0
    %3330 = vmatpush1.msra.mxu0 0.0
    %3331 = vmatprep.subr.mxu0 0.0
    %3332 = vmatpush1.msra.mxu0 0.0
    %3333 = vmatprep.subr.mxu0 0.0
    %3334 = vmatpush1.msra.mxu0 0.0
    %3335 = vmatprep.subr.mxu0 0.0
    %3336 = vmatpush1.msra.mxu0 0.0
    %3337 = vmatprep.subr.mxu0 0.0
    %3338 = vmatpush1.msra.mxu0 0.0
    %3339 = vmatprep.subr.mxu0 0.0
    %3340 = vmatpush1.msra.mxu0 0.0
    %3341 = vmatprep.subr.mxu0 0.0
    %3342 = vmatpush1.msra.mxu0 0.0
    %v3343 = vand.u32 %v3224, 4294901760
    %v3344 = vsub.f32 %v3224, %v3343
    %v3345 = vand.u32 %v3344, 4294901760
    %v3346 = vsub.f32 %v3344, %v3345
    %v3347 = vand.u32 %v3346, 4294901760
    %3348 = vmatprep.subr.mxu0 %v3347
    %v3349 = vand.u32 %v3226, 4294901760
    %v3350 = vsub.f32 %v3226, %v3349
    %v3351 = vand.u32 %v3350, 4294901760
    %v3352 = vsub.f32 %v3350, %v3351
    %v3353 = vand.u32 %v3352, 4294901760
    %3354 = vmatpush1.msra.mxu0 %v3353
    %v3355 = vand.u32 %v3223, 4294901760
    %v3356 = vsub.f32 %v3223, %v3355
    %v3357 = vand.u32 %v3356, 4294901760
    %v3358 = vsub.f32 %v3356, %v3357
    %v3359 = vand.u32 %v3358, 4294901760
    %3360 = vmatprep.subr.mxu0 %v3359
    %v3361 = vand.u32 %v3225, 4294901760
    %v3362 = vsub.f32 %v3225, %v3361
    %v3363 = vand.u32 %v3362, 4294901760
    %v3364 = vsub.f32 %v3362, %v3363
    %v3365 = vand.u32 %v3364, 4294901760
    %3366 = vmatpush1.msra.mxu0 %v3365
    %v3367 = vand.u32 %v3199, 4294901760
    %v3368 = vsub.f32 %v3199, %v3367
    %v3369 = vand.u32 %v3368, 4294901760
    %v3370 = vsub.f32 %v3368, %v3369
    %v3371 = vand.u32 %v3370, 4294901760
    %3372 = vmatprep.subr.mxu0 %v3371
    %v3373 = vand.u32 %v3201, 4294901760
    %v3374 = vsub.f32 %v3201, %v3373
    %v3375 = vand.u32 %v3374, 4294901760
    %v3376 = vsub.f32 %v3374, %v3375
    %v3377 = vand.u32 %v3376, 4294901760
    %3378 = vmatpush1.msra.mxu0 %v3377
    %v3379 = vand.u32 %v3198, 4294901760
    %v3380 = vsub.f32 %v3198, %v3379
    %v3381 = vand.u32 %v3380, 4294901760
    %v3382 = vsub.f32 %v3380, %v3381
    %v3383 = vand.u32 %v3382, 4294901760
    %3384 = vmatprep.subr.mxu0 %v3383
    %v3385 = vand.u32 %v3200, 4294901760
    %v3386 = vsub.f32 %v3200, %v3385
    %v3387 = vand.u32 %v3386, 4294901760
    %v3388 = vsub.f32 %v3386, %v3387
    %v3389 = vand.u32 %v3388, 4294901760
    %3390 = vmatpush1.msra.mxu0 %v3389
    %v3391 = vand.u32 %v3147, 4294901760
    %v3392 = vsub.f32 %v3147, %v3391
    %v3393 = vand.u32 %v3392, 4294901760
    %v3394 = vsub.f32 %v3392, %v3393
    %v3395 = vand.u32 %v3394, 4294901760
    %3396 = vmatprep.subr.mxu0 %v3395
    %v3397 = vand.u32 %v3146, 4294901760
    %v3398 = vsub.f32 %v3146, %v3397
    %v3399 = vand.u32 %v3398, 4294901760
    %v3400 = vsub.f32 %v3398, %v3399
    %v3401 = vand.u32 %v3400, 4294901760
    %3402 = vmatpush1.msra.mxu0 %v3401
    %v3403 = vand.u32 %v3143, 4294901760
    %v3404 = vsub.f32 %v3143, %v3403
    %v3405 = vand.u32 %v3404, 4294901760
    %v3406 = vsub.f32 %v3404, %v3405
    %v3407 = vand.u32 %v3406, 4294901760
    %3408 = vmatprep.subr.mxu0 %v3407
    %v3409 = vand.u32 %v3142, 4294901760
    %v3410 = vsub.f32 %v3142, %v3409
    %v3411 = vand.u32 %v3410, 4294901760
    %v3412 = vsub.f32 %v3410, %v3411
    %v3413 = vand.u32 %v3412, 4294901760
    %3414 = vmatpush1.msra.mxu0 %v3413
    %v3415 = vand.u32 %v3172, 4294901760
    %v3416 = vsub.f32 %v3172, %v3415
    %v3417 = vand.u32 %v3416, 4294901760
    %v3418 = vsub.f32 %v3416, %v3417
    %v3419 = vand.u32 %v3418, 4294901760
    %3420 = vmatprep.subr.mxu0 %v3419
    %v3421 = vand.u32 %v3174, 4294901760
    %v3422 = vsub.f32 %v3174, %v3421
    %v3423 = vand.u32 %v3422, 4294901760
    %v3424 = vsub.f32 %v3422, %v3423
    %v3425 = vand.u32 %v3424, 4294901760
    %3426 = vmatpush1.msra.mxu0 %v3425
    %v3427 = vand.u32 %v3171, 4294901760
    %v3428 = vsub.f32 %v3171, %v3427
    %v3429 = vand.u32 %v3428, 4294901760
    %v3430 = vsub.f32 %v3428, %v3429
    %v3431 = vand.u32 %v3430, 4294901760
    %3432 = vmatprep.subr.mxu0 %v3431
    %v3433 = vand.u32 %v3173, 4294901760
    %v3434 = vsub.f32 %v3173, %v3433
    %v3435 = vand.u32 %v3434, 4294901760
    %v3436 = vsub.f32 %v3434, %v3435
    %v3437 = vand.u32 %v3436, 4294901760
    %3438 = vmatpush1.msra.mxu0 %v3437
    %3439 = vmatprep.subr.mxu0 0.0
    %3440 = vmatpush2.msra.mxu0 0.0
    %3441 = vmatprep.subr.mxu0 0.0
    %3442 = vmatpush2.msra.mxu0 0.0
    %3443 = vmatprep.subr.mxu0 0.0
    %3444 = vmatpush2.msra.mxu0 0.0
    %3445 = vmatprep.subr.mxu0 0.0
    %3446 = vmatpush2.msra.mxu0 0.0
    %3447 = vmatprep.subr.mxu0 0.0
    %3448 = vmatpush2.msra.mxu0 0.0
    %3449 = vmatprep.subr.mxu0 0.0
    %3450 = vmatpush2.msra.mxu0 0.0
    %3451 = vmatprep.subr.mxu0 0.0
    %3452 = vmatpush2.msra.mxu0 0.0
    %3453 = vmatprep.subr.mxu0 0.0
    %3454 = vmatpush2.msra.mxu0 0.0
    %3455 = vmatprep.subr.mxu0 0.0
    %3456 = vmatpush2.msra.mxu0 0.0
    %3457 = vmatprep.subr.mxu0 0.0
    %3458 = vmatpush2.msra.mxu0 0.0
    %3459 = vmatprep.subr.mxu0 0.0
    %3460 = vmatpush2.msra.mxu0 0.0
    %3461 = vmatprep.subr.mxu0 0.0
    %3462 = vmatpush2.msra.mxu0 0.0
    %3463 = vmatprep.subr.mxu0 0.0
    %3464 = vmatpush2.msra.mxu0 0.0
    %3465 = vmatprep.subr.mxu0 0.0
    %3466 = vmatpush2.msra.mxu0 0.0
    %3467 = vmatprep.subr.mxu0 0.0
    %3468 = vmatpush2.msra.mxu0 0.0
    %3469 = vmatprep.subr.mxu0 0.0
    %3470 = vmatpush2.msra.mxu0 0.0
    %3471 = vmatprep.mubr.f32.mxu0 0.0
    %v3472 = vand.u32 %v3233, 4294901760
    %3473 = vmatmul.mubr.f32.gmra.mxu0 %v3472
    %v3474 = vpop.f32.mrf.mxu0
    %v3475 = vadd.f32 %v3323, %v3474
    %v3476 = vpop.f32.mrf.mxu0
    %v3477 = vadd.f32 %v3325, %v3476
    %3478 = vdwg.mxu0
    %3479 = vmatprep.subr.mxu0 0.0
    %3480 = vmatpush1.msra.mxu0 0.0
    %3481 = vmatprep.subr.mxu0 0.0
    %3482 = vmatpush1.msra.mxu0 0.0
    %3483 = vmatprep.subr.mxu0 0.0
    %3484 = vmatpush1.msra.mxu0 0.0
    %3485 = vmatprep.subr.mxu0 0.0
    %3486 = vmatpush1.msra.mxu0 0.0
    %3487 = vmatprep.subr.mxu0 0.0
    %3488 = vmatpush1.msra.mxu0 0.0
    %3489 = vmatprep.subr.mxu0 0.0
    %3490 = vmatpush1.msra.mxu0 0.0
    %3491 = vmatprep.subr.mxu0 0.0
    %3492 = vmatpush1.msra.mxu0 0.0
    %3493 = vmatprep.subr.mxu0 0.0
    %3494 = vmatpush1.msra.mxu0 0.0
    %v3495 = vand.u32 %v3224, 4294901760
    %v3496 = vsub.f32 %v3224, %v3495
    %3497 = vmatprep.subr.mxu0 %v3496
    %v3498 = vand.u32 %v3226, 4294901760
    %v3499 = vsub.f32 %v3226, %v3498
    %3500 = vmatpush1.msra.mxu0 %v3499
    %v3501 = vand.u32 %v3223, 4294901760
    %v3502 = vsub.f32 %v3223, %v3501
    %3503 = vmatprep.subr.mxu0 %v3502
    %v3504 = vand.u32 %v3225, 4294901760
    %v3505 = vsub.f32 %v3225, %v3504
    %3506 = vmatpush1.msra.mxu0 %v3505
    %v3507 = vand.u32 %v3199, 4294901760
    %v3508 = vsub.f32 %v3199, %v3507
    %3509 = vmatprep.subr.mxu0 %v3508
    %v3510 = vand.u32 %v3201, 4294901760
    %v3511 = vsub.f32 %v3201, %v3510
    %3512 = vmatpush1.msra.mxu0 %v3511
    %v3513 = vand.u32 %v3198, 4294901760
    %v3514 = vsub.f32 %v3198, %v3513
    %3515 = vmatprep.subr.mxu0 %v3514
    %v3516 = vand.u32 %v3200, 4294901760
    %v3517 = vsub.f32 %v3200, %v3516
    %3518 = vmatpush1.msra.mxu0 %v3517
    %v3519 = vand.u32 %v3147, 4294901760
    %v3520 = vsub.f32 %v3147, %v3519
    %3521 = vmatprep.subr.mxu0 %v3520
    %v3522 = vand.u32 %v3146, 4294901760
    %v3523 = vsub.f32 %v3146, %v3522
    %3524 = vmatpush1.msra.mxu0 %v3523
    %v3525 = vand.u32 %v3143, 4294901760
    %v3526 = vsub.f32 %v3143, %v3525
    %3527 = vmatprep.subr.mxu0 %v3526
    %v3528 = vand.u32 %v3142, 4294901760
    %v3529 = vsub.f32 %v3142, %v3528
    %3530 = vmatpush1.msra.mxu0 %v3529
    %v3531 = vand.u32 %v3172, 4294901760
    %v3532 = vsub.f32 %v3172, %v3531
    %3533 = vmatprep.subr.mxu0 %v3532
    %v3534 = vand.u32 %v3174, 4294901760
    %v3535 = vsub.f32 %v3174, %v3534
    %3536 = vmatpush1.msra.mxu0 %v3535
    %v3537 = vand.u32 %v3171, 4294901760
    %v3538 = vsub.f32 %v3171, %v3537
    %3539 = vmatprep.subr.mxu0 %v3538
    %v3540 = vand.u32 %v3173, 4294901760
    %v3541 = vsub.f32 %v3173, %v3540
    %3542 = vmatpush1.msra.mxu0 %v3541
    %3543 = vmatprep.subr.mxu0 0.0
    %3544 = vmatpush2.msra.mxu0 0.0
    %3545 = vmatprep.subr.mxu0 0.0
    %3546 = vmatpush2.msra.mxu0 0.0
    %3547 = vmatprep.subr.mxu0 0.0
    %3548 = vmatpush2.msra.mxu0 0.0
    %3549 = vmatprep.subr.mxu0 0.0
    %3550 = vmatpush2.msra.mxu0 0.0
    %3551 = vmatprep.subr.mxu0 0.0
    %3552 = vmatpush2.msra.mxu0 0.0
    %3553 = vmatprep.subr.mxu0 0.0
    %3554 = vmatpush2.msra.mxu0 0.0
    %3555 = vmatprep.subr.mxu0 0.0
    %3556 = vmatpush2.msra.mxu0 0.0
    %3557 = vmatprep.subr.mxu0 0.0
    %3558 = vmatpush2.msra.mxu0 0.0
    %3559 = vmatprep.subr.mxu0 0.0
    %3560 = vmatpush2.msra.mxu0 0.0
    %3561 = vmatprep.subr.mxu0 0.0
    %3562 = vmatpush2.msra.mxu0 0.0
    %3563 = vmatprep.subr.mxu0 0.0
    %3564 = vmatpush2.msra.mxu0 0.0
    %3565 = vmatprep.subr.mxu0 0.0
    %3566 = vmatpush2.msra.mxu0 0.0
    %3567 = vmatprep.subr.mxu0 0.0
    %3568 = vmatpush2.msra.mxu0 0.0
    %3569 = vmatprep.subr.mxu0 0.0
    %3570 = vmatpush2.msra.mxu0 0.0
    %3571 = vmatprep.subr.mxu0 0.0
    %3572 = vmatpush2.msra.mxu0 0.0
    %3573 = vmatprep.subr.mxu0 0.0
    %3574 = vmatpush2.msra.mxu0 0.0
    %3575 = vmatprep.mubr.f32.mxu0 0.0
    %v3576 = vand.u32 %v3233, 4294901760
    %v3577 = vsub.f32 %v3233, %v3576
    %3578 = vmatmul.mubr.f32.gmra.mxu0 %v3577
    %v3579 = vpop.f32.mrf.mxu0
    %v3580 = vadd.f32 %v3475, %v3579
    %v3581 = vpop.f32.mrf.mxu0
    %v3582 = vadd.f32 %v3477, %v3581
    %3583 = vdwg.mxu0
    %3584 = vmatprep.subr.mxu0 0.0
    %3585 = vmatpush1.msra.mxu0 0.0
    %3586 = vmatprep.subr.mxu0 0.0
    %3587 = vmatpush1.msra.mxu0 0.0
    %3588 = vmatprep.subr.mxu0 0.0
    %3589 = vmatpush1.msra.mxu0 0.0
    %3590 = vmatprep.subr.mxu0 0.0
    %3591 = vmatpush1.msra.mxu0 0.0
    %3592 = vmatprep.subr.mxu0 0.0
    %3593 = vmatpush1.msra.mxu0 0.0
    %3594 = vmatprep.subr.mxu0 0.0
    %3595 = vmatpush1.msra.mxu0 0.0
    %3596 = vmatprep.subr.mxu0 0.0
    %3597 = vmatpush1.msra.mxu0 0.0
    %3598 = vmatprep.subr.mxu0 1.0
    %3599 = vmatpush1.msra.mxu0 1.0
    %v3600 = vand.u32 %v3224, 4294901760
    %3601 = vmatprep.subr.mxu0 %v3600
    %v3602 = vand.u32 %v3226, 4294901760
    %3603 = vmatpush1.msra.mxu0 %v3602
    %v3604 = vand.u32 %v3223, 4294901760
    %3605 = vmatprep.subr.mxu0 %v3604
    %v3606 = vand.u32 %v3225, 4294901760
    %3607 = vmatpush1.msra.mxu0 %v3606
    %v3608 = vand.u32 %v3199, 4294901760
    %3609 = vmatprep.subr.mxu0 %v3608
    %v3610 = vand.u32 %v3201, 4294901760
    %3611 = vmatpush1.msra.mxu0 %v3610
    %v3612 = vand.u32 %v3198, 4294901760
    %3613 = vmatprep.subr.mxu0 %v3612
    %v3614 = vand.u32 %v3200, 4294901760
    %3615 = vmatpush1.msra.mxu0 %v3614
    %v3616 = vand.u32 %v3147, 4294901760
    %3617 = vmatprep.subr.mxu0 %v3616
    %v3618 = vand.u32 %v3146, 4294901760
    %3619 = vmatpush1.msra.mxu0 %v3618
    %v3620 = vand.u32 %v3143, 4294901760
    %3621 = vmatprep.subr.mxu0 %v3620
    %v3622 = vand.u32 %v3142, 4294901760
    %3623 = vmatpush1.msra.mxu0 %v3622
    %v3624 = vand.u32 %v3172, 4294901760
    %3625 = vmatprep.subr.mxu0 %v3624
    %v3626 = vand.u32 %v3174, 4294901760
    %3627 = vmatpush1.msra.mxu0 %v3626
    %v3628 = vand.u32 %v3171, 4294901760
    %3629 = vmatprep.subr.mxu0 %v3628
    %v3630 = vand.u32 %v3173, 4294901760
    %3631 = vmatpush1.msra.mxu0 %v3630
    %3632 = vmatprep.subr.mxu0 0.0
    %3633 = vmatpush2.msra.mxu0 0.0
    %3634 = vmatprep.subr.mxu0 0.0
    %3635 = vmatpush2.msra.mxu0 0.0
    %3636 = vmatprep.subr.mxu0 0.0
    %3637 = vmatpush2.msra.mxu0 0.0
    %3638 = vmatprep.subr.mxu0 0.0
    %3639 = vmatpush2.msra.mxu0 0.0
    %3640 = vmatprep.subr.mxu0 0.0
    %3641 = vmatpush2.msra.mxu0 0.0
    %3642 = vmatprep.subr.mxu0 0.0
    %3643 = vmatpush2.msra.mxu0 0.0
    %3644 = vmatprep.subr.mxu0 0.0
    %3645 = vmatpush2.msra.mxu0 0.0
    %3646 = vmatprep.subr.mxu0 0.0
    %3647 = vmatpush2.msra.mxu0 0.0
    %3648 = vmatprep.subr.mxu0 0.0
    %3649 = vmatpush2.msra.mxu0 0.0
    %3650 = vmatprep.subr.mxu0 0.0
    %3651 = vmatpush2.msra.mxu0 0.0
    %3652 = vmatprep.subr.mxu0 0.0
    %3653 = vmatpush2.msra.mxu0 0.0
    %3654 = vmatprep.subr.mxu0 0.0
    %3655 = vmatpush2.msra.mxu0 0.0
    %3656 = vmatprep.subr.mxu0 0.0
    %3657 = vmatpush2.msra.mxu0 0.0
    %3658 = vmatprep.subr.mxu0 0.0
    %3659 = vmatpush2.msra.mxu0 0.0
    %3660 = vmatprep.subr.mxu0 0.0
    %3661 = vmatpush2.msra.mxu0 0.0
    %3662 = vmatprep.subr.mxu0 0.0
    %3663 = vmatpush2.msra.mxu0 0.0
    %3664 = vmatprep.mubr.f32.mxu0 0.0
    %v3665 = vand.u32 %v3233, 4294901760
    %v3666 = vsub.f32 %v3233, %v3665
    %v3667 = vand.u32 %v3666, 4294901760
    %3668 = vmatmul.mubr.f32.gmra.mxu0 %v3667
    %v3669 = vpop.f32.mrf.mxu0
    %v3670 = vadd.f32 %v3580, %v3669
    %v3671 = vpop.f32.mrf.mxu0
    %v3672 = vadd.f32 %v3582, %v3671
    %3673 = vdwg.mxu0
    %3674 = vmatprep.subr.mxu0 0.0
    %3675 = vmatpush1.msra.mxu0 0.0
    %3676 = vmatprep.subr.mxu0 0.0
    %3677 = vmatpush1.msra.mxu0 0.0
    %3678 = vmatprep.subr.mxu0 0.0
    %3679 = vmatpush1.msra.mxu0 0.0
    %3680 = vmatprep.subr.mxu0 0.0
    %3681 = vmatpush1.msra.mxu0 0.0
    %3682 = vmatprep.subr.mxu0 0.0
    %3683 = vmatpush1.msra.mxu0 0.0
    %3684 = vmatprep.subr.mxu0 0.0
    %3685 = vmatpush1.msra.mxu0 0.0
    %3686 = vmatprep.subr.mxu0 0.0
    %3687 = vmatpush1.msra.mxu0 0.0
    %3688 = vmatprep.subr.mxu0 0.0
    %3689 = vmatpush1.msra.mxu0 0.0
    %v3690 = vand.u32 %v3224, 4294901760
    %v3691 = vsub.f32 %v3224, %v3690
    %v3692 = vand.u32 %v3691, 4294901760
    %3693 = vmatprep.subr.mxu0 %v3692
    %v3694 = vand.u32 %v3226, 4294901760
    %v3695 = vsub.f32 %v3226, %v3694
    %v3696 = vand.u32 %v3695, 4294901760
    %3697 = vmatpush1.msra.mxu0 %v3696
    %v3698 = vand.u32 %v3223, 4294901760
    %v3699 = vsub.f32 %v3223, %v3698
    %v3700 = vand.u32 %v3699, 4294901760
    %3701 = vmatprep.subr.mxu0 %v3700
    %v3702 = vand.u32 %v3225, 4294901760
    %v3703 = vsub.f32 %v3225, %v3702
    %v3704 = vand.u32 %v3703, 4294901760
    %3705 = vmatpush1.msra.mxu0 %v3704
    %v3706 = vand.u32 %v3199, 4294901760
    %v3707 = vsub.f32 %v3199, %v3706
    %v3708 = vand.u32 %v3707, 4294901760
    %3709 = vmatprep.subr.mxu0 %v3708
    %v3710 = vand.u32 %v3201, 4294901760
    %v3711 = vsub.f32 %v3201, %v3710
    %v3712 = vand.u32 %v3711, 4294901760
    %3713 = vmatpush1.msra.mxu0 %v3712
    %v3714 = vand.u32 %v3198, 4294901760
    %v3715 = vsub.f32 %v3198, %v3714
    %v3716 = vand.u32 %v3715, 4294901760
    %3717 = vmatprep.subr.mxu0 %v3716
    %v3718 = vand.u32 %v3200, 4294901760
    %v3719 = vsub.f32 %v3200, %v3718
    %v3720 = vand.u32 %v3719, 4294901760
    %3721 = vmatpush1.msra.mxu0 %v3720
    %v3722 = vand.u32 %v3147, 4294901760
    %v3723 = vsub.f32 %v3147, %v3722
    %v3724 = vand.u32 %v3723, 4294901760
    %3725 = vmatprep.subr.mxu0 %v3724
    %v3726 = vand.u32 %v3146, 4294901760
    %v3727 = vsub.f32 %v3146, %v3726
    %v3728 = vand.u32 %v3727, 4294901760
    %3729 = vmatpush1.msra.mxu0 %v3728
    %v3730 = vand.u32 %v3143, 4294901760
    %v3731 = vsub.f32 %v3143, %v3730
    %v3732 = vand.u32 %v3731, 4294901760
    %3733 = vmatprep.subr.mxu0 %v3732
    %v3734 = vand.u32 %v3142, 4294901760
    %v3735 = vsub.f32 %v3142, %v3734
    %v3736 = vand.u32 %v3735, 4294901760
    %3737 = vmatpush1.msra.mxu0 %v3736
    %v3738 = vand.u32 %v3172, 4294901760
    %v3739 = vsub.f32 %v3172, %v3738
    %v3740 = vand.u32 %v3739, 4294901760
    %3741 = vmatprep.subr.mxu0 %v3740
    %v3742 = vand.u32 %v3174, 4294901760
    %v3743 = vsub.f32 %v3174, %v3742
    %v3744 = vand.u32 %v3743, 4294901760
    %3745 = vmatpush1.msra.mxu0 %v3744
    %v3746 = vand.u32 %v3171, 4294901760
    %v3747 = vsub.f32 %v3171, %v3746
    %v3748 = vand.u32 %v3747, 4294901760
    %3749 = vmatprep.subr.mxu0 %v3748
    %v3750 = vand.u32 %v3173, 4294901760
    %v3751 = vsub.f32 %v3173, %v3750
    %v3752 = vand.u32 %v3751, 4294901760
    %3753 = vmatpush1.msra.mxu0 %v3752
    %3754 = vmatprep.subr.mxu0 0.0
    %3755 = vmatpush2.msra.mxu0 0.0
    %3756 = vmatprep.subr.mxu0 0.0
    %3757 = vmatpush2.msra.mxu0 0.0
    %3758 = vmatprep.subr.mxu0 0.0
    %3759 = vmatpush2.msra.mxu0 0.0
    %3760 = vmatprep.subr.mxu0 0.0
    %3761 = vmatpush2.msra.mxu0 0.0
    %3762 = vmatprep.subr.mxu0 0.0
    %3763 = vmatpush2.msra.mxu0 0.0
    %3764 = vmatprep.subr.mxu0 0.0
    %3765 = vmatpush2.msra.mxu0 0.0
    %3766 = vmatprep.subr.mxu0 0.0
    %3767 = vmatpush2.msra.mxu0 0.0
    %3768 = vmatprep.subr.mxu0 0.0
    %3769 = vmatpush2.msra.mxu0 0.0
    %3770 = vmatprep.subr.mxu0 0.0
    %3771 = vmatpush2.msra.mxu0 0.0
    %3772 = vmatprep.subr.mxu0 0.0
    %3773 = vmatpush2.msra.mxu0 0.0
    %3774 = vmatprep.subr.mxu0 0.0
    %3775 = vmatpush2.msra.mxu0 0.0
    %3776 = vmatprep.subr.mxu0 0.0
    %3777 = vmatpush2.msra.mxu0 0.0
    %3778 = vmatprep.subr.mxu0 0.0
    %3779 = vmatpush2.msra.mxu0 0.0
    %3780 = vmatprep.subr.mxu0 0.0
    %3781 = vmatpush2.msra.mxu0 0.0
    %3782 = vmatprep.subr.mxu0 0.0
    %3783 = vmatpush2.msra.mxu0 0.0
    %3784 = vmatprep.subr.mxu0 0.0
    %3785 = vmatpush2.msra.mxu0 0.0
    %3786 = vmatprep.mubr.f32.mxu0 0.0
    %v3787 = vand.u32 %v3233, 4294901760
    %3788 = vmatmul.mubr.f32.gmra.mxu0 %v3787
    %v3789 = vpop.f32.mrf.mxu0
    %v3790 = vadd.f32 %v3670, %v3789
    %v3791 = vpop.f32.mrf.mxu0
    %v3792 = vadd.f32 %v3672, %v3791
    %3793 = vdwg.mxu0
    %3794 = vmatprep.subr.mxu0 0.0
    %3795 = vmatpush1.msra.mxu0 0.0
    %3796 = vmatprep.subr.mxu0 0.0
    %3797 = vmatpush1.msra.mxu0 0.0
    %3798 = vmatprep.subr.mxu0 0.0
    %3799 = vmatpush1.msra.mxu0 0.0
    %3800 = vmatprep.subr.mxu0 0.0
    %3801 = vmatpush1.msra.mxu0 0.0
    %3802 = vmatprep.subr.mxu0 0.0
    %3803 = vmatpush1.msra.mxu0 0.0
    %3804 = vmatprep.subr.mxu0 0.0
    %3805 = vmatpush1.msra.mxu0 0.0
    %3806 = vmatprep.subr.mxu0 0.0
    %3807 = vmatpush1.msra.mxu0 0.0
    %3808 = vmatprep.subr.mxu0 1.0
    %3809 = vmatpush1.msra.mxu0 1.0
    %v3810 = vand.u32 %v3224, 4294901760
    %3811 = vmatprep.subr.mxu0 %v3810
    %v3812 = vand.u32 %v3226, 4294901760
    %3813 = vmatpush1.msra.mxu0 %v3812
    %v3814 = vand.u32 %v3223, 4294901760
    %3815 = vmatprep.subr.mxu0 %v3814
    %v3816 = vand.u32 %v3225, 4294901760
    %3817 = vmatpush1.msra.mxu0 %v3816
    %v3818 = vand.u32 %v3199, 4294901760
    %3819 = vmatprep.subr.mxu0 %v3818
    %v3820 = vand.u32 %v3201, 4294901760
    %3821 = vmatpush1.msra.mxu0 %v3820
    %v3822 = vand.u32 %v3198, 4294901760
    %3823 = vmatprep.subr.mxu0 %v3822
    %v3824 = vand.u32 %v3200, 4294901760
    %3825 = vmatpush1.msra.mxu0 %v3824
    %v3826 = vand.u32 %v3147, 4294901760
    %3827 = vmatprep.subr.mxu0 %v3826
    %v3828 = vand.u32 %v3146, 4294901760
    %3829 = vmatpush1.msra.mxu0 %v3828
    %v3830 = vand.u32 %v3143, 4294901760
    %3831 = vmatprep.subr.mxu0 %v3830
    %v3832 = vand.u32 %v3142, 4294901760
    %3833 = vmatpush1.msra.mxu0 %v3832
    %v3834 = vand.u32 %v3172, 4294901760
    %3835 = vmatprep.subr.mxu0 %v3834
    %v3836 = vand.u32 %v3174, 4294901760
    %3837 = vmatpush1.msra.mxu0 %v3836
    %v3838 = vand.u32 %v3171, 4294901760
    %3839 = vmatprep.subr.mxu0 %v3838
    %v3840 = vand.u32 %v3173, 4294901760
    %3841 = vmatpush1.msra.mxu0 %v3840
    %3842 = vmatprep.subr.mxu0 0.0
    %3843 = vmatpush2.msra.mxu0 0.0
    %3844 = vmatprep.subr.mxu0 0.0
    %3845 = vmatpush2.msra.mxu0 0.0
    %3846 = vmatprep.subr.mxu0 0.0
    %3847 = vmatpush2.msra.mxu0 0.0
    %3848 = vmatprep.subr.mxu0 0.0
    %3849 = vmatpush2.msra.mxu0 0.0
    %3850 = vmatprep.subr.mxu0 0.0
    %3851 = vmatpush2.msra.mxu0 0.0
    %3852 = vmatprep.subr.mxu0 0.0
    %3853 = vmatpush2.msra.mxu0 0.0
    %3854 = vmatprep.subr.mxu0 0.0
    %3855 = vmatpush2.msra.mxu0 0.0
    %3856 = vmatprep.subr.mxu0 0.0
    %3857 = vmatpush2.msra.mxu0 0.0
    %3858 = vmatprep.subr.mxu0 0.0
    %3859 = vmatpush2.msra.mxu0 0.0
    %3860 = vmatprep.subr.mxu0 0.0
    %3861 = vmatpush2.msra.mxu0 0.0
    %3862 = vmatprep.subr.mxu0 0.0
    %3863 = vmatpush2.msra.mxu0 0.0
    %3864 = vmatprep.subr.mxu0 0.0
    %3865 = vmatpush2.msra.mxu0 0.0
    %3866 = vmatprep.subr.mxu0 0.0
    %3867 = vmatpush2.msra.mxu0 0.0
    %3868 = vmatprep.subr.mxu0 0.0
    %3869 = vmatpush2.msra.mxu0 0.0
    %3870 = vmatprep.subr.mxu0 0.0
    %3871 = vmatpush2.msra.mxu0 0.0
    %3872 = vmatprep.subr.mxu0 0.0
    %3873 = vmatpush2.msra.mxu0 0.0
    %3874 = vmatprep.mubr.f32.mxu0 0.0
    %v3875 = vand.u32 %v3233, 4294901760
    %3876 = vmatmul.mubr.f32.gmra.mxu0 %v3875
    %v3877 = vpop.f32.mrf.mxu0
    %v3878 = vadd.f32 %v3790, %v3877
    %v3879 = vpop.f32.mrf.mxu0
    %v3880 = vadd.f32 %v3792, %v3879
    %3881 = vdwg.mxu0
    %3882 = vmatprep.subr.mxu0 0.0
    %3883 = vmatpush1.msra.mxu0 0.0
    %3884 = vmatprep.subr.mxu0 0.0
    %3885 = vmatpush1.msra.mxu0 0.0
    %3886 = vmatprep.subr.mxu0 0.0
    %3887 = vmatpush1.msra.mxu0 0.0
    %3888 = vmatprep.subr.mxu0 0.0
    %3889 = vmatpush1.msra.mxu0 0.0
    %3890 = vmatprep.subr.mxu0 0.0
    %3891 = vmatpush1.msra.mxu0 0.0
    %3892 = vmatprep.subr.mxu0 0.0
    %3893 = vmatpush1.msra.mxu0 0.0
    %3894 = vmatprep.subr.mxu0 0.0
    %3895 = vmatpush1.msra.mxu0 0.0
    %3896 = vmatprep.subr.mxu0 1.0
    %3897 = vmatpush1.msra.mxu0 1.0
    %v3898 = vand.u32 %v3220, 4294901760
    %3899 = vmatprep.subr.mxu0 %v3898
    %v3900 = vand.u32 %v3222, 4294901760
    %3901 = vmatpush1.msra.mxu0 %v3900
    %v3902 = vand.u32 %v3219, 4294901760
    %3903 = vmatprep.subr.mxu0 %v3902
    %v3904 = vand.u32 %v3221, 4294901760
    %3905 = vmatpush1.msra.mxu0 %v3904
    %v3906 = vand.u32 %v3195, 4294901760
    %3907 = vmatprep.subr.mxu0 %v3906
    %v3908 = vand.u32 %v3197, 4294901760
    %3909 = vmatpush1.msra.mxu0 %v3908
    %v3910 = vand.u32 %v3194, 4294901760
    %3911 = vmatprep.subr.mxu0 %v3910
    %v3912 = vand.u32 %v3196, 4294901760
    %3913 = vmatpush1.msra.mxu0 %v3912
    %v3914 = vand.u32 %v3149, 4294901760
    %3915 = vmatprep.subr.mxu0 %v3914
    %v3916 = vand.u32 %v3148, 4294901760
    %3917 = vmatpush1.msra.mxu0 %v3916
    %v3918 = vand.u32 %v3145, 4294901760
    %3919 = vmatprep.subr.mxu0 %v3918
    %v3920 = vand.u32 %v3144, 4294901760
    %3921 = vmatpush1.msra.mxu0 %v3920
    %v3922 = vand.u32 %v3176, 4294901760
    %3923 = vmatprep.subr.mxu0 %v3922
    %v3924 = vand.u32 %v3170, 4294901760
    %3925 = vmatpush1.msra.mxu0 %v3924
    %v3926 = vand.u32 %v3175, 4294901760
    %3927 = vmatprep.subr.mxu0 %v3926
    %v3928 = vand.u32 %v3169, 4294901760
    %3929 = vmatpush1.msra.mxu0 %v3928
    %3930 = vmatprep.subr.mxu0 0.0
    %3931 = vmatpush2.msra.mxu0 0.0
    %3932 = vmatprep.subr.mxu0 0.0
    %3933 = vmatpush2.msra.mxu0 0.0
    %3934 = vmatprep.subr.mxu0 0.0
    %3935 = vmatpush2.msra.mxu0 0.0
    %3936 = vmatprep.subr.mxu0 0.0
    %3937 = vmatpush2.msra.mxu0 0.0
    %3938 = vmatprep.subr.mxu0 0.0
    %3939 = vmatpush2.msra.mxu0 0.0
    %3940 = vmatprep.subr.mxu0 0.0
    %3941 = vmatpush2.msra.mxu0 0.0
    %3942 = vmatprep.subr.mxu0 0.0
    %3943 = vmatpush2.msra.mxu0 0.0
    %3944 = vmatprep.subr.mxu0 0.0
    %3945 = vmatpush2.msra.mxu0 0.0
    %3946 = vmatprep.subr.mxu0 0.0
    %3947 = vmatpush2.msra.mxu0 0.0
    %3948 = vmatprep.subr.mxu0 0.0
    %3949 = vmatpush2.msra.mxu0 0.0
    %3950 = vmatprep.subr.mxu0 0.0
    %3951 = vmatpush2.msra.mxu0 0.0
    %3952 = vmatprep.subr.mxu0 0.0
    %3953 = vmatpush2.msra.mxu0 0.0
    %3954 = vmatprep.subr.mxu0 0.0
    %3955 = vmatpush2.msra.mxu0 0.0
    %3956 = vmatprep.subr.mxu0 0.0
    %3957 = vmatpush2.msra.mxu0 0.0
    %3958 = vmatprep.subr.mxu0 0.0
    %3959 = vmatpush2.msra.mxu0 0.0
    %3960 = vmatprep.subr.mxu0 0.0
    %3961 = vmatpush2.msra.mxu0 0.0
    %3962 = vmatprep.mubr.f32.mxu0 0.0
    %v3963 = vand.u32 %v3233, 4294901760
    %v3964 = vsub.f32 %v3233, %v3963
    %v3965 = vand.u32 %v3964, 4294901760
    %v3966 = vsub.f32 %v3964, %v3965
    %v3967 = vand.u32 %v3966, 4294901760
    %3968 = vmatmul.mubr.f32.gmra.mxu0 %v3967
    %v3969 = vpop.f32.mrf.mxu0
    %v3970 = vadd.f32 0.0, %v3969
    %v3971 = vpop.f32.mrf.mxu0
    %v3972 = vadd.f32 0.0, %v3971
    %3973 = vdwg.mxu0
    %3974 = vmatprep.subr.mxu0 0.0
    %3975 = vmatpush1.msra.mxu0 0.0
    %3976 = vmatprep.subr.mxu0 0.0
    %3977 = vmatpush1.msra.mxu0 0.0
    %3978 = vmatprep.subr.mxu0 0.0
    %3979 = vmatpush1.msra.mxu0 0.0
    %3980 = vmatprep.subr.mxu0 0.0
    %3981 = vmatpush1.msra.mxu0 0.0
    %3982 = vmatprep.subr.mxu0 0.0
    %3983 = vmatpush1.msra.mxu0 0.0
    %3984 = vmatprep.subr.mxu0 0.0
    %3985 = vmatpush1.msra.mxu0 0.0
    %3986 = vmatprep.subr.mxu0 0.0
    %3987 = vmatpush1.msra.mxu0 0.0
    %3988 = vmatprep.subr.mxu0 0.0
    %3989 = vmatpush1.msra.mxu0 0.0
    %v3990 = vand.u32 %v3220, 4294901760
    %v3991 = vsub.f32 %v3220, %v3990
    %v3992 = vand.u32 %v3991, 4294901760
    %v3993 = vsub.f32 %v3991, %v3992
    %v3994 = vand.u32 %v3993, 4294901760
    %3995 = vmatprep.subr.mxu0 %v3994
    %v3996 = vand.u32 %v3222, 4294901760
    %v3997 = vsub.f32 %v3222, %v3996
    %v3998 = vand.u32 %v3997, 4294901760
    %v3999 = vsub.f32 %v3997, %v3998
    %v4000 = vand.u32 %v3999, 4294901760
    %4001 = vmatpush1.msra.mxu0 %v4000
    %v4002 = vand.u32 %v3219, 4294901760
    %v4003 = vsub.f32 %v3219, %v4002
    %v4004 = vand.u32 %v4003, 4294901760
    %v4005 = vsub.f32 %v4003, %v4004
    %v4006 = vand.u32 %v4005, 4294901760
    %4007 = vmatprep.subr.mxu0 %v4006
    %v4008 = vand.u32 %v3221, 4294901760
    %v4009 = vsub.f32 %v3221, %v4008
    %v4010 = vand.u32 %v4009, 4294901760
    %v4011 = vsub.f32 %v4009, %v4010
    %v4012 = vand.u32 %v4011, 4294901760
    %4013 = vmatpush1.msra.mxu0 %v4012
    %v4014 = vand.u32 %v3195, 4294901760
    %v4015 = vsub.f32 %v3195, %v4014
    %v4016 = vand.u32 %v4015, 4294901760
    %v4017 = vsub.f32 %v4015, %v4016
    %v4018 = vand.u32 %v4017, 4294901760
    %4019 = vmatprep.subr.mxu0 %v4018
    %v4020 = vand.u32 %v3197, 4294901760
    %v4021 = vsub.f32 %v3197, %v4020
    %v4022 = vand.u32 %v4021, 4294901760
    %v4023 = vsub.f32 %v4021, %v4022
    %v4024 = vand.u32 %v4023, 4294901760
    %4025 = vmatpush1.msra.mxu0 %v4024
    %v4026 = vand.u32 %v3194, 4294901760
    %v4027 = vsub.f32 %v3194, %v4026
    %v4028 = vand.u32 %v4027, 4294901760
    %v4029 = vsub.f32 %v4027, %v4028
    %v4030 = vand.u32 %v4029, 4294901760
    %4031 = vmatprep.subr.mxu0 %v4030
    %v4032 = vand.u32 %v3196, 4294901760
    %v4033 = vsub.f32 %v3196, %v4032
    %v4034 = vand.u32 %v4033, 4294901760
    %v4035 = vsub.f32 %v4033, %v4034
    %v4036 = vand.u32 %v4035, 4294901760
    %4037 = vmatpush1.msra.mxu0 %v4036
    %v4038 = vand.u32 %v3149, 4294901760
    %v4039 = vsub.f32 %v3149, %v4038
    %v4040 = vand.u32 %v4039, 4294901760
    %v4041 = vsub.f32 %v4039, %v4040
    %v4042 = vand.u32 %v4041, 4294901760
    %4043 = vmatprep.subr.mxu0 %v4042
    %v4044 = vand.u32 %v3148, 4294901760
    %v4045 = vsub.f32 %v3148, %v4044
    %v4046 = vand.u32 %v4045, 4294901760
    %v4047 = vsub.f32 %v4045, %v4046
    %v4048 = vand.u32 %v4047, 4294901760
    %4049 = vmatpush1.msra.mxu0 %v4048
    %v4050 = vand.u32 %v3145, 4294901760
    %v4051 = vsub.f32 %v3145, %v4050
    %v4052 = vand.u32 %v4051, 4294901760
    %v4053 = vsub.f32 %v4051, %v4052
    %v4054 = vand.u32 %v4053, 4294901760
    %4055 = vmatprep.subr.mxu0 %v4054
    %v4056 = vand.u32 %v3144, 4294901760
    %v4057 = vsub.f32 %v3144, %v4056
    %v4058 = vand.u32 %v4057, 4294901760
    %v4059 = vsub.f32 %v4057, %v4058
    %v4060 = vand.u32 %v4059, 4294901760
    %4061 = vmatpush1.msra.mxu0 %v4060
    %v4062 = vand.u32 %v3176, 4294901760
    %v4063 = vsub.f32 %v3176, %v4062
    %v4064 = vand.u32 %v4063, 4294901760
    %v4065 = vsub.f32 %v4063, %v4064
    %v4066 = vand.u32 %v4065, 4294901760
    %4067 = vmatprep.subr.mxu0 %v4066
    %v4068 = vand.u32 %v3170, 4294901760
    %v4069 = vsub.f32 %v3170, %v4068
    %v4070 = vand.u32 %v4069, 4294901760
    %v4071 = vsub.f32 %v4069, %v4070
    %v4072 = vand.u32 %v4071, 4294901760
    %4073 = vmatpush1.msra.mxu0 %v4072
    %v4074 = vand.u32 %v3175, 4294901760
    %v4075 = vsub.f32 %v3175, %v4074
    %v4076 = vand.u32 %v4075, 4294901760
    %v4077 = vsub.f32 %v4075, %v4076
    %v4078 = vand.u32 %v4077, 4294901760
    %4079 = vmatprep.subr.mxu0 %v4078
    %v4080 = vand.u32 %v3169, 4294901760
    %v4081 = vsub.f32 %v3169, %v4080
    %v4082 = vand.u32 %v4081, 4294901760
    %v4083 = vsub.f32 %v4081, %v4082
    %v4084 = vand.u32 %v4083, 4294901760
    %4085 = vmatpush1.msra.mxu0 %v4084
    %4086 = vmatprep.subr.mxu0 0.0
    %4087 = vmatpush2.msra.mxu0 0.0
    %4088 = vmatprep.subr.mxu0 0.0
    %4089 = vmatpush2.msra.mxu0 0.0
    %4090 = vmatprep.subr.mxu0 0.0
    %4091 = vmatpush2.msra.mxu0 0.0
    %4092 = vmatprep.subr.mxu0 0.0
    %4093 = vmatpush2.msra.mxu0 0.0
    %4094 = vmatprep.subr.mxu0 0.0
    %4095 = vmatpush2.msra.mxu0 0.0
    %4096 = vmatprep.subr.mxu0 0.0
    %4097 = vmatpush2.msra.mxu0 0.0
    %4098 = vmatprep.subr.mxu0 0.0
    %4099 = vmatpush2.msra.mxu0 0.0
    %4100 = vmatprep.subr.mxu0 0.0
    %4101 = vmatpush2.msra.mxu0 0.0
    %4102 = vmatprep.subr.mxu0 0.0
    %4103 = vmatpush2.msra.mxu0 0.0
    %4104 = vmatprep.subr.mxu0 0.0
    %4105 = vmatpush2.msra.mxu0 0.0
    %4106 = vmatprep.subr.mxu0 0.0
    %4107 = vmatpush2.msra.mxu0 0.0
    %4108 = vmatprep.subr.mxu0 0.0
    %4109 = vmatpush2.msra.mxu0 0.0
    %4110 = vmatprep.subr.mxu0 0.0
    %4111 = vmatpush2.msra.mxu0 0.0
    %4112 = vmatprep.subr.mxu0 0.0
    %4113 = vmatpush2.msra.mxu0 0.0
    %4114 = vmatprep.subr.mxu0 0.0
    %4115 = vmatpush2.msra.mxu0 0.0
    %4116 = vmatprep.subr.mxu0 0.0
    %4117 = vmatpush2.msra.mxu0 0.0
    %4118 = vmatprep.mubr.f32.mxu0 0.0
    %v4119 = vand.u32 %v3233, 4294901760
    %4120 = vmatmul.mubr.f32.gmra.mxu0 %v4119
    %v4121 = vpop.f32.mrf.mxu0
    %v4122 = vadd.f32 %v3970, %v4121
    %v4123 = vpop.f32.mrf.mxu0
    %v4124 = vadd.f32 %v3972, %v4123
    %4125 = vdwg.mxu0
    %4126 = vmatprep.subr.mxu0 0.0
    %4127 = vmatpush1.msra.mxu0 0.0
    %4128 = vmatprep.subr.mxu0 0.0
    %4129 = vmatpush1.msra.mxu0 0.0
    %4130 = vmatprep.subr.mxu0 0.0
    %4131 = vmatpush1.msra.mxu0 0.0
    %4132 = vmatprep.subr.mxu0 0.0
    %4133 = vmatpush1.msra.mxu0 0.0
    %4134 = vmatprep.subr.mxu0 0.0
    %4135 = vmatpush1.msra.mxu0 0.0
    %4136 = vmatprep.subr.mxu0 0.0
    %4137 = vmatpush1.msra.mxu0 0.0
    %4138 = vmatprep.subr.mxu0 0.0
    %4139 = vmatpush1.msra.mxu0 0.0
    %4140 = vmatprep.subr.mxu0 0.0
    %4141 = vmatpush1.msra.mxu0 0.0
    %v4142 = vand.u32 %v3220, 4294901760
    %v4143 = vsub.f32 %v3220, %v4142
    %4144 = vmatprep.subr.mxu0 %v4143
    %v4145 = vand.u32 %v3222, 4294901760
    %v4146 = vsub.f32 %v3222, %v4145
    %4147 = vmatpush1.msra.mxu0 %v4146
    %v4148 = vand.u32 %v3219, 4294901760
    %v4149 = vsub.f32 %v3219, %v4148
    %4150 = vmatprep.subr.mxu0 %v4149
    %v4151 = vand.u32 %v3221, 4294901760
    %v4152 = vsub.f32 %v3221, %v4151
    %4153 = vmatpush1.msra.mxu0 %v4152
    %v4154 = vand.u32 %v3195, 4294901760
    %v4155 = vsub.f32 %v3195, %v4154
    %4156 = vmatprep.subr.mxu0 %v4155
    %v4157 = vand.u32 %v3197, 4294901760
    %v4158 = vsub.f32 %v3197, %v4157
    %4159 = vmatpush1.msra.mxu0 %v4158
    %v4160 = vand.u32 %v3194, 4294901760
    %v4161 = vsub.f32 %v3194, %v4160
    %4162 = vmatprep.subr.mxu0 %v4161
    %v4163 = vand.u32 %v3196, 4294901760
    %v4164 = vsub.f32 %v3196, %v4163
    %4165 = vmatpush1.msra.mxu0 %v4164
    %v4166 = vand.u32 %v3149, 4294901760
    %v4167 = vsub.f32 %v3149, %v4166
    %4168 = vmatprep.subr.mxu0 %v4167
    %v4169 = vand.u32 %v3148, 4294901760
    %v4170 = vsub.f32 %v3148, %v4169
    %4171 = vmatpush1.msra.mxu0 %v4170
    %v4172 = vand.u32 %v3145, 4294901760
    %v4173 = vsub.f32 %v3145, %v4172
    %4174 = vmatprep.subr.mxu0 %v4173
    %v4175 = vand.u32 %v3144, 4294901760
    %v4176 = vsub.f32 %v3144, %v4175
    %4177 = vmatpush1.msra.mxu0 %v4176
    %v4178 = vand.u32 %v3176, 4294901760
    %v4179 = vsub.f32 %v3176, %v4178
    %4180 = vmatprep.subr.mxu0 %v4179
    %v4181 = vand.u32 %v3170, 4294901760
    %v4182 = vsub.f32 %v3170, %v4181
    %4183 = vmatpush1.msra.mxu0 %v4182
    %v4184 = vand.u32 %v3175, 4294901760
    %v4185 = vsub.f32 %v3175, %v4184
    %4186 = vmatprep.subr.mxu0 %v4185
    %v4187 = vand.u32 %v3169, 4294901760
    %v4188 = vsub.f32 %v3169, %v4187
    %4189 = vmatpush1.msra.mxu0 %v4188
    %4190 = vmatprep.subr.mxu0 0.0
    %4191 = vmatpush2.msra.mxu0 0.0
    %4192 = vmatprep.subr.mxu0 0.0
    %4193 = vmatpush2.msra.mxu0 0.0
    %4194 = vmatprep.subr.mxu0 0.0
    %4195 = vmatpush2.msra.mxu0 0.0
    %4196 = vmatprep.subr.mxu0 0.0
    %4197 = vmatpush2.msra.mxu0 0.0
    %4198 = vmatprep.subr.mxu0 0.0
    %4199 = vmatpush2.msra.mxu0 0.0
    %4200 = vmatprep.subr.mxu0 0.0
    %4201 = vmatpush2.msra.mxu0 0.0
    %4202 = vmatprep.subr.mxu0 0.0
    %4203 = vmatpush2.msra.mxu0 0.0
    %4204 = vmatprep.subr.mxu0 0.0
    %4205 = vmatpush2.msra.mxu0 0.0
    %4206 = vmatprep.subr.mxu0 0.0
    %4207 = vmatpush2.msra.mxu0 0.0
    %4208 = vmatprep.subr.mxu0 0.0
    %4209 = vmatpush2.msra.mxu0 0.0
    %4210 = vmatprep.subr.mxu0 0.0
    %4211 = vmatpush2.msra.mxu0 0.0
    %4212 = vmatprep.subr.mxu0 0.0
    %4213 = vmatpush2.msra.mxu0 0.0
    %4214 = vmatprep.subr.mxu0 0.0
    %4215 = vmatpush2.msra.mxu0 0.0
    %4216 = vmatprep.subr.mxu0 0.0
    %4217 = vmatpush2.msra.mxu0 0.0
    %4218 = vmatprep.subr.mxu0 0.0
    %4219 = vmatpush2.msra.mxu0 0.0
    %4220 = vmatprep.subr.mxu0 0.0
    %4221 = vmatpush2.msra.mxu0 0.0
    %4222 = vmatprep.mubr.f32.mxu0 0.0
    %v4223 = vand.u32 %v3233, 4294901760
    %v4224 = vsub.f32 %v3233, %v4223
    %4225 = vmatmul.mubr.f32.gmra.mxu0 %v4224
    %v4226 = vpop.f32.mrf.mxu0
    %v4227 = vadd.f32 %v4122, %v4226
    %v4228 = vpop.f32.mrf.mxu0
    %v4229 = vadd.f32 %v4124, %v4228
    %4230 = vdwg.mxu0
    %4231 = vmatprep.subr.mxu0 0.0
    %4232 = vmatpush1.msra.mxu0 0.0
    %4233 = vmatprep.subr.mxu0 0.0
    %4234 = vmatpush1.msra.mxu0 0.0
    %4235 = vmatprep.subr.mxu0 0.0
    %4236 = vmatpush1.msra.mxu0 0.0
    %4237 = vmatprep.subr.mxu0 0.0
    %4238 = vmatpush1.msra.mxu0 0.0
    %4239 = vmatprep.subr.mxu0 0.0
    %4240 = vmatpush1.msra.mxu0 0.0
    %4241 = vmatprep.subr.mxu0 0.0
    %4242 = vmatpush1.msra.mxu0 0.0
    %4243 = vmatprep.subr.mxu0 0.0
    %4244 = vmatpush1.msra.mxu0 0.0
    %4245 = vmatprep.subr.mxu0 1.0
    %4246 = vmatpush1.msra.mxu0 1.0
    %v4247 = vand.u32 %v3220, 4294901760
    %4248 = vmatprep.subr.mxu0 %v4247
    %v4249 = vand.u32 %v3222, 4294901760
    %4250 = vmatpush1.msra.mxu0 %v4249
    %v4251 = vand.u32 %v3219, 4294901760
    %4252 = vmatprep.subr.mxu0 %v4251
    %v4253 = vand.u32 %v3221, 4294901760
    %4254 = vmatpush1.msra.mxu0 %v4253
    %v4255 = vand.u32 %v3195, 4294901760
    %4256 = vmatprep.subr.mxu0 %v4255
    %v4257 = vand.u32 %v3197, 4294901760
    %4258 = vmatpush1.msra.mxu0 %v4257
    %v4259 = vand.u32 %v3194, 4294901760
    %4260 = vmatprep.subr.mxu0 %v4259
    %v4261 = vand.u32 %v3196, 4294901760
    %4262 = vmatpush1.msra.mxu0 %v4261
    %v4263 = vand.u32 %v3149, 4294901760
    %4264 = vmatprep.subr.mxu0 %v4263
    %v4265 = vand.u32 %v3148, 4294901760
    %4266 = vmatpush1.msra.mxu0 %v4265
    %v4267 = vand.u32 %v3145, 4294901760
    %4268 = vmatprep.subr.mxu0 %v4267
    %v4269 = vand.u32 %v3144, 4294901760
    %4270 = vmatpush1.msra.mxu0 %v4269
    %v4271 = vand.u32 %v3176, 4294901760
    %4272 = vmatprep.subr.mxu0 %v4271
    %v4273 = vand.u32 %v3170, 4294901760
    %4274 = vmatpush1.msra.mxu0 %v4273
    %v4275 = vand.u32 %v3175, 4294901760
    %4276 = vmatprep.subr.mxu0 %v4275
    %v4277 = vand.u32 %v3169, 4294901760
    %4278 = vmatpush1.msra.mxu0 %v4277
    %4279 = vmatprep.subr.mxu0 0.0
    %4280 = vmatpush2.msra.mxu0 0.0
    %4281 = vmatprep.subr.mxu0 0.0
    %4282 = vmatpush2.msra.mxu0 0.0
    %4283 = vmatprep.subr.mxu0 0.0
    %4284 = vmatpush2.msra.mxu0 0.0
    %4285 = vmatprep.subr.mxu0 0.0
    %4286 = vmatpush2.msra.mxu0 0.0
    %4287 = vmatprep.subr.mxu0 0.0
    %4288 = vmatpush2.msra.mxu0 0.0
    %4289 = vmatprep.subr.mxu0 0.0
    %4290 = vmatpush2.msra.mxu0 0.0
    %4291 = vmatprep.subr.mxu0 0.0
    %4292 = vmatpush2.msra.mxu0 0.0
    %4293 = vmatprep.subr.mxu0 0.0
    %4294 = vmatpush2.msra.mxu0 0.0
    %4295 = vmatprep.subr.mxu0 0.0
    %4296 = vmatpush2.msra.mxu0 0.0
    %4297 = vmatprep.subr.mxu0 0.0
    %4298 = vmatpush2.msra.mxu0 0.0
    %4299 = vmatprep.subr.mxu0 0.0
    %4300 = vmatpush2.msra.mxu0 0.0
    %4301 = vmatprep.subr.mxu0 0.0
    %4302 = vmatpush2.msra.mxu0 0.0
    %4303 = vmatprep.subr.mxu0 0.0
    %4304 = vmatpush2.msra.mxu0 0.0
    %4305 = vmatprep.subr.mxu0 0.0
    %4306 = vmatpush2.msra.mxu0 0.0
    %4307 = vmatprep.subr.mxu0 0.0
    %4308 = vmatpush2.msra.mxu0 0.0
    %4309 = vmatprep.subr.mxu0 0.0
    %4310 = vmatpush2.msra.mxu0 0.0
    %4311 = vmatprep.mubr.f32.mxu0 0.0
    %v4312 = vand.u32 %v3233, 4294901760
    %v4313 = vsub.f32 %v3233, %v4312
    %v4314 = vand.u32 %v4313, 4294901760
    %4315 = vmatmul.mubr.f32.gmra.mxu0 %v4314
    %v4316 = vpop.f32.mrf.mxu0
    %v4317 = vadd.f32 %v4227, %v4316
    %v4318 = vpop.f32.mrf.mxu0
    %v4319 = vadd.f32 %v4229, %v4318
    %4320 = vdwg.mxu0
    %4321 = vmatprep.subr.mxu0 0.0
    %4322 = vmatpush1.msra.mxu0 0.0
    %4323 = vmatprep.subr.mxu0 0.0
    %4324 = vmatpush1.msra.mxu0 0.0
    %4325 = vmatprep.subr.mxu0 0.0
    %4326 = vmatpush1.msra.mxu0 0.0
    %4327 = vmatprep.subr.mxu0 0.0
    %4328 = vmatpush1.msra.mxu0 0.0
    %4329 = vmatprep.subr.mxu0 0.0
    %4330 = vmatpush1.msra.mxu0 0.0
    %4331 = vmatprep.subr.mxu0 0.0
    %4332 = vmatpush1.msra.mxu0 0.0
    %4333 = vmatprep.subr.mxu0 0.0
    %4334 = vmatpush1.msra.mxu0 0.0
    %4335 = vmatprep.subr.mxu0 0.0
    %4336 = vmatpush1.msra.mxu0 0.0
    %v4337 = vand.u32 %v3220, 4294901760
    %v4338 = vsub.f32 %v3220, %v4337
    %v4339 = vand.u32 %v4338, 4294901760
    %4340 = vmatprep.subr.mxu0 %v4339
    %v4341 = vand.u32 %v3222, 4294901760
    %v4342 = vsub.f32 %v3222, %v4341
    %v4343 = vand.u32 %v4342, 4294901760
    %4344 = vmatpush1.msra.mxu0 %v4343
    %v4345 = vand.u32 %v3219, 4294901760
    %v4346 = vsub.f32 %v3219, %v4345
    %v4347 = vand.u32 %v4346, 4294901760
    %4348 = vmatprep.subr.mxu0 %v4347
    %v4349 = vand.u32 %v3221, 4294901760
    %v4350 = vsub.f32 %v3221, %v4349
    %v4351 = vand.u32 %v4350, 4294901760
    %4352 = vmatpush1.msra.mxu0 %v4351
    %v4353 = vand.u32 %v3195, 4294901760
    %v4354 = vsub.f32 %v3195, %v4353
    %v4355 = vand.u32 %v4354, 4294901760
    %4356 = vmatprep.subr.mxu0 %v4355
    %v4357 = vand.u32 %v3197, 4294901760
    %v4358 = vsub.f32 %v3197, %v4357
    %v4359 = vand.u32 %v4358, 4294901760
    %4360 = vmatpush1.msra.mxu0 %v4359
    %v4361 = vand.u32 %v3194, 4294901760
    %v4362 = vsub.f32 %v3194, %v4361
    %v4363 = vand.u32 %v4362, 4294901760
    %4364 = vmatprep.subr.mxu0 %v4363
    %v4365 = vand.u32 %v3196, 4294901760
    %v4366 = vsub.f32 %v3196, %v4365
    %v4367 = vand.u32 %v4366, 4294901760
    %4368 = vmatpush1.msra.mxu0 %v4367
    %v4369 = vand.u32 %v3149, 4294901760
    %v4370 = vsub.f32 %v3149, %v4369
    %v4371 = vand.u32 %v4370, 4294901760
    %4372 = vmatprep.subr.mxu0 %v4371
    %v4373 = vand.u32 %v3148, 4294901760
    %v4374 = vsub.f32 %v3148, %v4373
    %v4375 = vand.u32 %v4374, 4294901760
    %4376 = vmatpush1.msra.mxu0 %v4375
    %v4377 = vand.u32 %v3145, 4294901760
    %v4378 = vsub.f32 %v3145, %v4377
    %v4379 = vand.u32 %v4378, 4294901760
    %4380 = vmatprep.subr.mxu0 %v4379
    %v4381 = vand.u32 %v3144, 4294901760
    %v4382 = vsub.f32 %v3144, %v4381
    %v4383 = vand.u32 %v4382, 4294901760
    %4384 = vmatpush1.msra.mxu0 %v4383
    %v4385 = vand.u32 %v3176, 4294901760
    %v4386 = vsub.f32 %v3176, %v4385
    %v4387 = vand.u32 %v4386, 4294901760
    %4388 = vmatprep.subr.mxu0 %v4387
    %v4389 = vand.u32 %v3170, 4294901760
    %v4390 = vsub.f32 %v3170, %v4389
    %v4391 = vand.u32 %v4390, 4294901760
    %4392 = vmatpush1.msra.mxu0 %v4391
    %v4393 = vand.u32 %v3175, 4294901760
    %v4394 = vsub.f32 %v3175, %v4393
    %v4395 = vand.u32 %v4394, 4294901760
    %4396 = vmatprep.subr.mxu0 %v4395
    %v4397 = vand.u32 %v3169, 4294901760
    %v4398 = vsub.f32 %v3169, %v4397
    %v4399 = vand.u32 %v4398, 4294901760
    %4400 = vmatpush1.msra.mxu0 %v4399
    %4401 = vmatprep.subr.mxu0 0.0
    %4402 = vmatpush2.msra.mxu0 0.0
    %4403 = vmatprep.subr.mxu0 0.0
    %4404 = vmatpush2.msra.mxu0 0.0
    %4405 = vmatprep.subr.mxu0 0.0
    %4406 = vmatpush2.msra.mxu0 0.0
    %4407 = vmatprep.subr.mxu0 0.0
    %4408 = vmatpush2.msra.mxu0 0.0
    %4409 = vmatprep.subr.mxu0 0.0
    %4410 = vmatpush2.msra.mxu0 0.0
    %4411 = vmatprep.subr.mxu0 0.0
    %4412 = vmatpush2.msra.mxu0 0.0
    %4413 = vmatprep.subr.mxu0 0.0
    %4414 = vmatpush2.msra.mxu0 0.0
    %4415 = vmatprep.subr.mxu0 0.0
    %4416 = vmatpush2.msra.mxu0 0.0
    %4417 = vmatprep.subr.mxu0 0.0
    %4418 = vmatpush2.msra.mxu0 0.0
    %4419 = vmatprep.subr.mxu0 0.0
    %4420 = vmatpush2.msra.mxu0 0.0
    %4421 = vmatprep.subr.mxu0 0.0
    %4422 = vmatpush2.msra.mxu0 0.0
    %4423 = vmatprep.subr.mxu0 0.0
    %4424 = vmatpush2.msra.mxu0 0.0
    %4425 = vmatprep.subr.mxu0 0.0
    %4426 = vmatpush2.msra.mxu0 0.0
    %4427 = vmatprep.subr.mxu0 0.0
    %4428 = vmatpush2.msra.mxu0 0.0
    %4429 = vmatprep.subr.mxu0 0.0
    %4430 = vmatpush2.msra.mxu0 0.0
    %4431 = vmatprep.subr.mxu0 0.0
    %4432 = vmatpush2.msra.mxu0 0.0
    %4433 = vmatprep.mubr.f32.mxu0 0.0
    %v4434 = vand.u32 %v3233, 4294901760
    %4435 = vmatmul.mubr.f32.gmra.mxu0 %v4434
    %v4436 = vpop.f32.mrf.mxu0
    %v4437 = vadd.f32 %v4317, %v4436
    %v4438 = vpop.f32.mrf.mxu0
    %v4439 = vadd.f32 %v4319, %v4438
    %4440 = vdwg.mxu0
    %4441 = vmatprep.subr.mxu0 0.0
    %4442 = vmatpush1.msra.mxu0 0.0
    %4443 = vmatprep.subr.mxu0 0.0
    %4444 = vmatpush1.msra.mxu0 0.0
    %4445 = vmatprep.subr.mxu0 0.0
    %4446 = vmatpush1.msra.mxu0 0.0
    %4447 = vmatprep.subr.mxu0 0.0
    %4448 = vmatpush1.msra.mxu0 0.0
    %4449 = vmatprep.subr.mxu0 0.0
    %4450 = vmatpush1.msra.mxu0 0.0
    %4451 = vmatprep.subr.mxu0 0.0
    %4452 = vmatpush1.msra.mxu0 0.0
    %4453 = vmatprep.subr.mxu0 0.0
    %4454 = vmatpush1.msra.mxu0 0.0
    %4455 = vmatprep.subr.mxu0 1.0
    %4456 = vmatpush1.msra.mxu0 1.0
    %v4457 = vand.u32 %v3220, 4294901760
    %4458 = vmatprep.subr.mxu0 %v4457
    %v4459 = vand.u32 %v3222, 4294901760
    %4460 = vmatpush1.msra.mxu0 %v4459
    %v4461 = vand.u32 %v3219, 4294901760
    %4462 = vmatprep.subr.mxu0 %v4461
    %v4463 = vand.u32 %v3221, 4294901760
    %4464 = vmatpush1.msra.mxu0 %v4463
    %v4465 = vand.u32 %v3195, 4294901760
    %4466 = vmatprep.subr.mxu0 %v4465
    %v4467 = vand.u32 %v3197, 4294901760
    %4468 = vmatpush1.msra.mxu0 %v4467
    %v4469 = vand.u32 %v3194, 4294901760
    %4470 = vmatprep.subr.mxu0 %v4469
    %v4471 = vand.u32 %v3196, 4294901760
    %4472 = vmatpush1.msra.mxu0 %v4471
    %v4473 = vand.u32 %v3149, 4294901760
    %4474 = vmatprep.subr.mxu0 %v4473
    %v4475 = vand.u32 %v3148, 4294901760
    %4476 = vmatpush1.msra.mxu0 %v4475
    %v4477 = vand.u32 %v3145, 4294901760
    %4478 = vmatprep.subr.mxu0 %v4477
    %v4479 = vand.u32 %v3144, 4294901760
    %4480 = vmatpush1.msra.mxu0 %v4479
    %v4481 = vand.u32 %v3176, 4294901760
    %4482 = vmatprep.subr.mxu0 %v4481
    %v4483 = vand.u32 %v3170, 4294901760
    %4484 = vmatpush1.msra.mxu0 %v4483
    %v4485 = vand.u32 %v3175, 4294901760
    %4486 = vmatprep.subr.mxu0 %v4485
    %v4487 = vand.u32 %v3169, 4294901760
    %4488 = vmatpush1.msra.mxu0 %v4487
    %4489 = vmatprep.subr.mxu0 0.0
    %4490 = vmatpush2.msra.mxu0 0.0
    %4491 = vmatprep.subr.mxu0 0.0
    %4492 = vmatpush2.msra.mxu0 0.0
    %4493 = vmatprep.subr.mxu0 0.0
    %4494 = vmatpush2.msra.mxu0 0.0
    %4495 = vmatprep.subr.mxu0 0.0
    %4496 = vmatpush2.msra.mxu0 0.0
    %4497 = vmatprep.subr.mxu0 0.0
    %4498 = vmatpush2.msra.mxu0 0.0
    %4499 = vmatprep.subr.mxu0 0.0
    %4500 = vmatpush2.msra.mxu0 0.0
    %4501 = vmatprep.subr.mxu0 0.0
    %4502 = vmatpush2.msra.mxu0 0.0
    %4503 = vmatprep.subr.mxu0 0.0
    %4504 = vmatpush2.msra.mxu0 0.0
    %4505 = vmatprep.subr.mxu0 0.0
    %4506 = vmatpush2.msra.mxu0 0.0
    %4507 = vmatprep.subr.mxu0 0.0
    %4508 = vmatpush2.msra.mxu0 0.0
    %4509 = vmatprep.subr.mxu0 0.0
    %4510 = vmatpush2.msra.mxu0 0.0
    %4511 = vmatprep.subr.mxu0 0.0
    %4512 = vmatpush2.msra.mxu0 0.0
    %4513 = vmatprep.subr.mxu0 0.0
    %4514 = vmatpush2.msra.mxu0 0.0
    %4515 = vmatprep.subr.mxu0 0.0
    %4516 = vmatpush2.msra.mxu0 0.0
    %4517 = vmatprep.subr.mxu0 0.0
    %4518 = vmatpush2.msra.mxu0 0.0
    %4519 = vmatprep.subr.mxu0 0.0
    %4520 = vmatpush2.msra.mxu0 0.0
    %4521 = vmatprep.mubr.f32.mxu0 0.0
    %v4522 = vand.u32 %v3233, 4294901760
    %4523 = vmatmul.mubr.f32.gmra.mxu0 %v4522
    %v4524 = vpop.f32.mrf.mxu0
    %v4525 = vadd.f32 %v4437, %v4524
    %v4526 = vpop.f32.mrf.mxu0
    %v4527 = vadd.f32 %v4439, %v4526
    %4528 = vdwg.mxu0
    %v4529 = vmul.f32 %v3878, 0.5
    %v4530 = vmul.f32 %v3880, 0.5
    %v4531 = vmul.f32 %v4525, 0.5
    %v4532 = vmul.f32 %v4527, 0.5
    %v4533 = vmul.f32 %v3878, 0.70710677
    %v4534 = vmul.f32 %v3880, 0.70710677
    %v4535 = vmul.f32 %v4525, 0.70710677
    %v4536 = vmul.f32 %v4527, 0.70710677
    %vm4537 = vcmp.ge.f32.partialorder %v4533, 0.0
    %vm4538 = vcmp.ge.f32.partialorder %v4534, 0.0
    %vm4539 = vcmp.ge.f32.partialorder %v4535, 0.0
    %vm4540 = vcmp.ge.f32.partialorder %v4536, 0.0
    %v4541 = vsel %vm4537, 1.0, -1.0
    %v4542 = vsel %vm4538, 1.0, -1.0
    %v4543 = vsel %vm4539, 1.0, -1.0
    %v4544 = vsel %vm4540, 1.0, -1.0
    %v4545 = vand.u32 2147483647, %v4533
    %v4546 = vand.u32 2147483647, %v4534
    %v4547 = vand.u32 2147483647, %v4535
    %v4548 = vand.u32 2147483647, %v4536
    %v4549 = vmul.f32 %v4545, 0.3275911
    %v4550 = vmul.f32 %v4546, 0.3275911
    %v4551 = vmul.f32 %v4547, 0.3275911
    %v4552 = vmul.f32 %v4548, 0.3275911
    %v4553 = vadd.f32 %v4549, 1.0
    %v4554 = vadd.f32 %v4550, 1.0
    %v4555 = vadd.f32 %v4551, 1.0
    %v4556 = vadd.f32 %v4552, 1.0
    %v4557 = vrcp.pop %v4553
    %v4558 = vrcp.pop %v4554
    %v4559 = vrcp.pop %v4555
    %v4560 = vrcp.pop %v4556
    %v4561 = vmul.f32 %v4557, 1.0614054
    %v4562 = vmul.f32 %v4558, 1.0614054
    %v4563 = vmul.f32 %v4559, 1.0614054
    %v4564 = vmul.f32 %v4560, 1.0614054
    %v4565 = vadd.f32 %v4561, -1.4531521
    %v4566 = vadd.f32 %v4562, -1.4531521
    %v4567 = vadd.f32 %v4563, -1.4531521
    %v4568 = vadd.f32 %v4564, -1.4531521
    %v4569 = vmul.f32 %v4565, %v4557
    %v4570 = vmul.f32 %v4566, %v4558
    %v4571 = vmul.f32 %v4567, %v4559
    %v4572 = vmul.f32 %v4568, %v4560
    %v4573 = vadd.f32 %v4569, 1.4214138
    %v4574 = vadd.f32 %v4570, 1.4214138
    %v4575 = vadd.f32 %v4571, 1.4214138
    %v4576 = vadd.f32 %v4572, 1.4214138
    %v4577 = vmul.f32 %v4573, %v4557
    %v4578 = vmul.f32 %v4574, %v4558
    %v4579 = vmul.f32 %v4575, %v4559
    %v4580 = vmul.f32 %v4576, %v4560
    %v4581 = vadd.f32 %v4577, -0.28449672
    %v4582 = vadd.f32 %v4578, -0.28449672
    %v4583 = vadd.f32 %v4579, -0.28449672
    %v4584 = vadd.f32 %v4580, -0.28449672
    %v4585 = vmul.f32 %v4581, %v4557
    %v4586 = vmul.f32 %v4582, %v4558
    %v4587 = vmul.f32 %v4583, %v4559
    %v4588 = vmul.f32 %v4584, %v4560
    %v4589 = vadd.f32 %v4585, 0.2548296
    %v4590 = vadd.f32 %v4586, 0.2548296
    %v4591 = vadd.f32 %v4587, 0.2548296
    %v4592 = vadd.f32 %v4588, 0.2548296
    %v4593 = vmul.f32 %v4589, %v4557
    %v4594 = vmul.f32 %v4590, %v4558
    %v4595 = vmul.f32 %v4591, %v4559
    %v4596 = vmul.f32 %v4592, %v4560
    %v4597 = vsub.f32 0.0, %v4545
    %v4598 = vsub.f32 0.0, %v4546
    %v4599 = vsub.f32 0.0, %v4547
    %v4600 = vsub.f32 0.0, %v4548
    %v4601 = vmul.f32 %v4597, %v4545
    %v4602 = vmul.f32 %v4598, %v4546
    %v4603 = vmul.f32 %v4599, %v4547
    %v4604 = vmul.f32 %v4600, %v4548
    %v4605 = vmul.f32 %v4601, 1.442695
    %v4606 = vpow.pop %v4605
    %v4607 = vmul.f32 %v4602, 1.442695
    %v4608 = vpow.pop %v4607
    %v4609 = vmul.f32 %v4603, 1.442695
    %v4610 = vpow.pop %v4609
    %v4611 = vmul.f32 %v4604, 1.442695
    %v4612 = vpow.pop %v4611
    %v4613 = vmul.f32 %v4593, %v4606
    %v4614 = vmul.f32 %v4594, %v4608
    %v4615 = vmul.f32 %v4595, %v4610
    %v4616 = vmul.f32 %v4596, %v4612
    %v4617 = vsub.f32 1.0, %v4613
    %v4618 = vsub.f32 1.0, %v4614
    %v4619 = vsub.f32 1.0, %v4615
    %v4620 = vsub.f32 1.0, %v4616
    %v4621 = vmul.f32 %v4541, %v4617
    %v4622 = vmul.f32 %v4542, %v4618
    %v4623 = vmul.f32 %v4543, %v4619
    %v4624 = vmul.f32 %v4544, %v4620
    %v4625 = vadd.f32 %v4621, 1.0
    %v4626 = vadd.f32 %v4622, 1.0
    %v4627 = vadd.f32 %v4623, 1.0
    %v4628 = vadd.f32 %v4624, 1.0
    %v4629 = vmul.f32 %v4529, %v4625
    %v4630 = vmul.f32 %v4530, %v4626
    %v4631 = vmul.f32 %v4531, %v4627
    %v4632 = vmul.f32 %v4532, %v4628
    %v4633 = vsel %vm3227, %v4629, 0.0
    %v4634 = vsel %vm3228, %v4630, 0.0
    %v4635 = vsel %vm3229, %v4631, 0.0
    %v4636 = vsel %vm3230, %v4632, 0.0
    %4637 = vrot.lane.b32.xlu0 %v4633, 1
    %v4638 = vpop.permute.xlu0 %4637
    %4639 = vrot.lane.b32.xlu0 %v4634, 1
    %v4640 = vpop.permute.xlu0 %4639
    %4641 = vrot.lane.b32.xlu0 %v4635, 1
    %v4642 = vpop.permute.xlu0 %4641
    %4643 = vrot.lane.b32.xlu0 %v4636, 1
    %v4644 = vpop.permute.xlu0 %4643
    %v4645 = vsel %vm3193, %v4642, %v4644
    %v4646 = vsel %vm3193, %v4640, %v4642
    %v4647 = vsel %vm3193, %v4638, %v4640
    %v4648 = vsel %vm3193, %v4644, %v4638
    %v4649 = vld [vmem:[%s4] sm:$0x3]
    %vm4650 = vcmask 195584
    %v4652 = vsel %vm4650, %v4649, 0
    %4654 = vmatprep.subr.mxu0 0.0
    %4655 = vmatpush1.msra.mxu0 0.0
    %4656 = vmatprep.subr.mxu0 0.0
    %4657 = vmatpush1.msra.mxu0 0.0
    %4658 = vmatprep.subr.mxu0 0.0
    %4659 = vmatpush1.msra.mxu0 0.0
    %4660 = vmatprep.subr.mxu0 0.0
    %4661 = vmatpush1.msra.mxu0 0.0
    %4662 = vmatprep.subr.mxu0 0.0
    %4663 = vmatpush1.msra.mxu0 0.0
    %4664 = vmatprep.subr.mxu0 0.0
    %4665 = vmatpush1.msra.mxu0 0.0
    %4666 = vmatprep.subr.mxu0 0.0
    %4667 = vmatpush1.msra.mxu0 0.0
    %4668 = vmatprep.subr.mxu0 0.0
    %4669 = vmatpush1.msra.mxu0 0.0
    %4670 = vmatprep.subr.mxu0 0.0
    %4671 = vmatpush1.msra.mxu0 0.0
    %4672 = vmatprep.subr.mxu0 0.0
    %4673 = vmatpush1.msra.mxu0 0.0
    %4674 = vmatprep.subr.mxu0 0.0
    %4675 = vmatpush1.msra.mxu0 0.0
    %4676 = vmatprep.subr.mxu0 0.0
    %4677 = vmatpush1.msra.mxu0 0.0
    %4678 = vmatprep.subr.mxu0 0.0
    %4679 = vmatpush1.msra.mxu0 0.0
    %4680 = vmatprep.subr.mxu0 1.0
    %4681 = vmatpush1.msra.mxu0 1.0
    %v4682 = vand.u32 %v4647, 4294901760
    %4683 = vmatprep.subr.mxu0 %v4682
    %v4684 = vand.u32 %v4648, 4294901760
    %4685 = vmatpush1.msra.mxu0 %v4684
    %v4686 = vand.u32 %v4634, 4294901760
    %4687 = vmatprep.subr.mxu0 %v4686
    %v4688 = vand.u32 %v4633, 4294901760
    %4689 = vmatpush1.msra.mxu0 %v4688
    %4690 = vmatprep.subr.mxu0 0.0
    %4691 = vmatpush2.msra.mxu0 0.0
    %4692 = vmatprep.subr.mxu0 0.0
    %4693 = vmatpush2.msra.mxu0 0.0
    %4694 = vmatprep.subr.mxu0 0.0
    %4695 = vmatpush2.msra.mxu0 0.0
    %4696 = vmatprep.subr.mxu0 0.0
    %4697 = vmatpush2.msra.mxu0 0.0
    %4698 = vmatprep.subr.mxu0 0.0
    %4699 = vmatpush2.msra.mxu0 0.0
    %4700 = vmatprep.subr.mxu0 0.0
    %4701 = vmatpush2.msra.mxu0 0.0
    %4702 = vmatprep.subr.mxu0 0.0
    %4703 = vmatpush2.msra.mxu0 0.0
    %4704 = vmatprep.subr.mxu0 0.0
    %4705 = vmatpush2.msra.mxu0 0.0
    %4706 = vmatprep.subr.mxu0 0.0
    %4707 = vmatpush2.msra.mxu0 0.0
    %4708 = vmatprep.subr.mxu0 0.0
    %4709 = vmatpush2.msra.mxu0 0.0
    %4710 = vmatprep.subr.mxu0 0.0
    %4711 = vmatpush2.msra.mxu0 0.0
    %4712 = vmatprep.subr.mxu0 0.0
    %4713 = vmatpush2.msra.mxu0 0.0
    %4714 = vmatprep.subr.mxu0 0.0
    %4715 = vmatpush2.msra.mxu0 0.0
    %4716 = vmatprep.subr.mxu0 0.0
    %4717 = vmatpush2.msra.mxu0 0.0
    %4718 = vmatprep.subr.mxu0 0.0
    %4719 = vmatpush2.msra.mxu0 0.0
    %4720 = vmatprep.subr.mxu0 0.0
    %4721 = vmatpush2.msra.mxu0 0.0
    %4722 = vmatprep.mubr.f32.mxu0 0.0
    %v4723 = vand.u32 %v4652, 4294901760
    %v4724 = vsub.f32 %v4652, %v4723
    %v4725 = vand.u32 %v4724, 4294901760
    %v4726 = vsub.f32 %v4724, %v4725
    %v4727 = vand.u32 %v4726, 4294901760
    %4728 = vmatmul.mubr.f32.gmra.mxu0 %v4727
    %v4729 = vpop.f32.mrf.mxu0
    %v4730 = vadd.f32 0.0, %v4729
    %v4731 = vpop.f32.mrf.mxu0
    %v4732 = vadd.f32 0.0, %v4731
    %4733 = vdwg.mxu0
    %4734 = vmatprep.subr.mxu0 0.0
    %4735 = vmatpush1.msra.mxu0 0.0
    %4736 = vmatprep.subr.mxu0 0.0
    %4737 = vmatpush1.msra.mxu0 0.0
    %4738 = vmatprep.subr.mxu0 0.0
    %4739 = vmatpush1.msra.mxu0 0.0
    %4740 = vmatprep.subr.mxu0 0.0
    %4741 = vmatpush1.msra.mxu0 0.0
    %4742 = vmatprep.subr.mxu0 0.0
    %4743 = vmatpush1.msra.mxu0 0.0
    %4744 = vmatprep.subr.mxu0 0.0
    %4745 = vmatpush1.msra.mxu0 0.0
    %4746 = vmatprep.subr.mxu0 0.0
    %4747 = vmatpush1.msra.mxu0 0.0
    %4748 = vmatprep.subr.mxu0 0.0
    %4749 = vmatpush1.msra.mxu0 0.0
    %4750 = vmatprep.subr.mxu0 0.0
    %4751 = vmatpush1.msra.mxu0 0.0
    %4752 = vmatprep.subr.mxu0 0.0
    %4753 = vmatpush1.msra.mxu0 0.0
    %4754 = vmatprep.subr.mxu0 0.0
    %4755 = vmatpush1.msra.mxu0 0.0
    %4756 = vmatprep.subr.mxu0 0.0
    %4757 = vmatpush1.msra.mxu0 0.0
    %4758 = vmatprep.subr.mxu0 0.0
    %4759 = vmatpush1.msra.mxu0 0.0
    %4760 = vmatprep.subr.mxu0 0.0
    %4761 = vmatpush1.msra.mxu0 0.0
    %v4762 = vand.u32 %v4647, 4294901760
    %v4763 = vsub.f32 %v4647, %v4762
    %v4764 = vand.u32 %v4763, 4294901760
    %v4765 = vsub.f32 %v4763, %v4764
    %v4766 = vand.u32 %v4765, 4294901760
    %4767 = vmatprep.subr.mxu0 %v4766
    %v4768 = vand.u32 %v4648, 4294901760
    %v4769 = vsub.f32 %v4648, %v4768
    %v4770 = vand.u32 %v4769, 4294901760
    %v4771 = vsub.f32 %v4769, %v4770
    %v4772 = vand.u32 %v4771, 4294901760
    %4773 = vmatpush1.msra.mxu0 %v4772
    %v4774 = vand.u32 %v4634, 4294901760
    %v4775 = vsub.f32 %v4634, %v4774
    %v4776 = vand.u32 %v4775, 4294901760
    %v4777 = vsub.f32 %v4775, %v4776
    %v4778 = vand.u32 %v4777, 4294901760
    %4779 = vmatprep.subr.mxu0 %v4778
    %v4780 = vand.u32 %v4633, 4294901760
    %v4781 = vsub.f32 %v4633, %v4780
    %v4782 = vand.u32 %v4781, 4294901760
    %v4783 = vsub.f32 %v4781, %v4782
    %v4784 = vand.u32 %v4783, 4294901760
    %4785 = vmatpush1.msra.mxu0 %v4784
    %4786 = vmatprep.subr.mxu0 0.0
    %4787 = vmatpush2.msra.mxu0 0.0
    %4788 = vmatprep.subr.mxu0 0.0
    %4789 = vmatpush2.msra.mxu0 0.0
    %4790 = vmatprep.subr.mxu0 0.0
    %4791 = vmatpush2.msra.mxu0 0.0
    %4792 = vmatprep.subr.mxu0 0.0
    %4793 = vmatpush2.msra.mxu0 0.0
    %4794 = vmatprep.subr.mxu0 0.0
    %4795 = vmatpush2.msra.mxu0 0.0
    %4796 = vmatprep.subr.mxu0 0.0
    %4797 = vmatpush2.msra.mxu0 0.0
    %4798 = vmatprep.subr.mxu0 0.0
    %4799 = vmatpush2.msra.mxu0 0.0
    %4800 = vmatprep.subr.mxu0 0.0
    %4801 = vmatpush2.msra.mxu0 0.0
    %4802 = vmatprep.subr.mxu0 0.0
    %4803 = vmatpush2.msra.mxu0 0.0
    %4804 = vmatprep.subr.mxu0 0.0
    %4805 = vmatpush2.msra.mxu0 0.0
    %4806 = vmatprep.subr.mxu0 0.0
    %4807 = vmatpush2.msra.mxu0 0.0
    %4808 = vmatprep.subr.mxu0 0.0
    %4809 = vmatpush2.msra.mxu0 0.0
    %4810 = vmatprep.subr.mxu0 0.0
    %4811 = vmatpush2.msra.mxu0 0.0
    %4812 = vmatprep.subr.mxu0 0.0
    %4813 = vmatpush2.msra.mxu0 0.0
    %4814 = vmatprep.subr.mxu0 0.0
    %4815 = vmatpush2.msra.mxu0 0.0
    %4816 = vmatprep.subr.mxu0 0.0
    %4817 = vmatpush2.msra.mxu0 0.0
    %4818 = vmatprep.mubr.f32.mxu0 0.0
    %v4819 = vand.u32 %v4652, 4294901760
    %4820 = vmatmul.mubr.f32.gmra.mxu0 %v4819
    %v4821 = vpop.f32.mrf.mxu0
    %v4822 = vadd.f32 %v4730, %v4821
    %v4823 = vpop.f32.mrf.mxu0
    %v4824 = vadd.f32 %v4732, %v4823
    %4825 = vdwg.mxu0
    %4826 = vmatprep.subr.mxu0 0.0
    %4827 = vmatpush1.msra.mxu0 0.0
    %4828 = vmatprep.subr.mxu0 0.0
    %4829 = vmatpush1.msra.mxu0 0.0
    %4830 = vmatprep.subr.mxu0 0.0
    %4831 = vmatpush1.msra.mxu0 0.0
    %4832 = vmatprep.subr.mxu0 0.0
    %4833 = vmatpush1.msra.mxu0 0.0
    %4834 = vmatprep.subr.mxu0 0.0
    %4835 = vmatpush1.msra.mxu0 0.0
    %4836 = vmatprep.subr.mxu0 0.0
    %4837 = vmatpush1.msra.mxu0 0.0
    %4838 = vmatprep.subr.mxu0 0.0
    %4839 = vmatpush1.msra.mxu0 0.0
    %4840 = vmatprep.subr.mxu0 0.0
    %4841 = vmatpush1.msra.mxu0 0.0
    %4842 = vmatprep.subr.mxu0 0.0
    %4843 = vmatpush1.msra.mxu0 0.0
    %4844 = vmatprep.subr.mxu0 0.0
    %4845 = vmatpush1.msra.mxu0 0.0
    %4846 = vmatprep.subr.mxu0 0.0
    %4847 = vmatpush1.msra.mxu0 0.0
    %4848 = vmatprep.subr.mxu0 0.0
    %4849 = vmatpush1.msra.mxu0 0.0
    %4850 = vmatprep.subr.mxu0 0.0
    %4851 = vmatpush1.msra.mxu0 0.0
    %4852 = vmatprep.subr.mxu0 0.0
    %4853 = vmatpush1.msra.mxu0 0.0
    %v4854 = vand.u32 %v4647, 4294901760
    %v4855 = vsub.f32 %v4647, %v4854
    %4856 = vmatprep.subr.mxu0 %v4855
    %v4857 = vand.u32 %v4648, 4294901760
    %v4858 = vsub.f32 %v4648, %v4857
    %4859 = vmatpush1.msra.mxu0 %v4858
    %v4860 = vand.u32 %v4634, 4294901760
    %v4861 = vsub.f32 %v4634, %v4860
    %4862 = vmatprep.subr.mxu0 %v4861
    %v4863 = vand.u32 %v4633, 4294901760
    %v4864 = vsub.f32 %v4633, %v4863
    %4865 = vmatpush1.msra.mxu0 %v4864
    %4866 = vmatprep.subr.mxu0 0.0
    %4867 = vmatpush2.msra.mxu0 0.0
    %4868 = vmatprep.subr.mxu0 0.0
    %4869 = vmatpush2.msra.mxu0 0.0
    %4870 = vmatprep.subr.mxu0 0.0
    %4871 = vmatpush2.msra.mxu0 0.0
    %4872 = vmatprep.subr.mxu0 0.0
    %4873 = vmatpush2.msra.mxu0 0.0
    %4874 = vmatprep.subr.mxu0 0.0
    %4875 = vmatpush2.msra.mxu0 0.0
    %4876 = vmatprep.subr.mxu0 0.0
    %4877 = vmatpush2.msra.mxu0 0.0
    %4878 = vmatprep.subr.mxu0 0.0
    %4879 = vmatpush2.msra.mxu0 0.0
    %4880 = vmatprep.subr.mxu0 0.0
    %4881 = vmatpush2.msra.mxu0 0.0
    %4882 = vmatprep.subr.mxu0 0.0
    %4883 = vmatpush2.msra.mxu0 0.0
    %4884 = vmatprep.subr.mxu0 0.0
    %4885 = vmatpush2.msra.mxu0 0.0
    %4886 = vmatprep.subr.mxu0 0.0
    %4887 = vmatpush2.msra.mxu0 0.0
    %4888 = vmatprep.subr.mxu0 0.0
    %4889 = vmatpush2.msra.mxu0 0.0
    %4890 = vmatprep.subr.mxu0 0.0
    %4891 = vmatpush2.msra.mxu0 0.0
    %4892 = vmatprep.subr.mxu0 0.0
    %4893 = vmatpush2.msra.mxu0 0.0
    %4894 = vmatprep.subr.mxu0 0.0
    %4895 = vmatpush2.msra.mxu0 0.0
    %4896 = vmatprep.subr.mxu0 0.0
    %4897 = vmatpush2.msra.mxu0 0.0
    %4898 = vmatprep.mubr.f32.mxu0 0.0
    %v4899 = vand.u32 %v4652, 4294901760
    %v4900 = vsub.f32 %v4652, %v4899
    %4901 = vmatmul.mubr.f32.gmra.mxu0 %v4900
    %v4902 = vpop.f32.mrf.mxu0
    %v4903 = vadd.f32 %v4822, %v4902
    %v4904 = vpop.f32.mrf.mxu0
    %v4905 = vadd.f32 %v4824, %v4904
    %4906 = vdwg.mxu0
    %4907 = vmatprep.subr.mxu0 0.0
    %4908 = vmatpush1.msra.mxu0 0.0
    %4909 = vmatprep.subr.mxu0 0.0
    %4910 = vmatpush1.msra.mxu0 0.0
    %4911 = vmatprep.subr.mxu0 0.0
    %4912 = vmatpush1.msra.mxu0 0.0
    %4913 = vmatprep.subr.mxu0 0.0
    %4914 = vmatpush1.msra.mxu0 0.0
    %4915 = vmatprep.subr.mxu0 0.0
    %4916 = vmatpush1.msra.mxu0 0.0
    %4917 = vmatprep.subr.mxu0 0.0
    %4918 = vmatpush1.msra.mxu0 0.0
    %4919 = vmatprep.subr.mxu0 0.0
    %4920 = vmatpush1.msra.mxu0 0.0
    %4921 = vmatprep.subr.mxu0 0.0
    %4922 = vmatpush1.msra.mxu0 0.0
    %4923 = vmatprep.subr.mxu0 0.0
    %4924 = vmatpush1.msra.mxu0 0.0
    %4925 = vmatprep.subr.mxu0 0.0
    %4926 = vmatpush1.msra.mxu0 0.0
    %4927 = vmatprep.subr.mxu0 0.0
    %4928 = vmatpush1.msra.mxu0 0.0
    %4929 = vmatprep.subr.mxu0 0.0
    %4930 = vmatpush1.msra.mxu0 0.0
    %4931 = vmatprep.subr.mxu0 0.0
    %4932 = vmatpush1.msra.mxu0 0.0
    %4933 = vmatprep.subr.mxu0 1.0
    %4934 = vmatpush1.msra.mxu0 1.0
    %v4935 = vand.u32 %v4647, 4294901760
    %4936 = vmatprep.subr.mxu0 %v4935
    %v4937 = vand.u32 %v4648, 4294901760
    %4938 = vmatpush1.msra.mxu0 %v4937
    %v4939 = vand.u32 %v4634, 4294901760
    %4940 = vmatprep.subr.mxu0 %v4939
    %v4941 = vand.u32 %v4633, 4294901760
    %4942 = vmatpush1.msra.mxu0 %v4941
    %4943 = vmatprep.subr.mxu0 0.0
    %4944 = vmatpush2.msra.mxu0 0.0
    %4945 = vmatprep.subr.mxu0 0.0
    %4946 = vmatpush2.msra.mxu0 0.0
    %4947 = vmatprep.subr.mxu0 0.0
    %4948 = vmatpush2.msra.mxu0 0.0
    %4949 = vmatprep.subr.mxu0 0.0
    %4950 = vmatpush2.msra.mxu0 0.0
    %4951 = vmatprep.subr.mxu0 0.0
    %4952 = vmatpush2.msra.mxu0 0.0
    %4953 = vmatprep.subr.mxu0 0.0
    %4954 = vmatpush2.msra.mxu0 0.0
    %4955 = vmatprep.subr.mxu0 0.0
    %4956 = vmatpush2.msra.mxu0 0.0
    %4957 = vmatprep.subr.mxu0 0.0
    %4958 = vmatpush2.msra.mxu0 0.0
    %4959 = vmatprep.subr.mxu0 0.0
    %4960 = vmatpush2.msra.mxu0 0.0
    %4961 = vmatprep.subr.mxu0 0.0
    %4962 = vmatpush2.msra.mxu0 0.0
    %4963 = vmatprep.subr.mxu0 0.0
    %4964 = vmatpush2.msra.mxu0 0.0
    %4965 = vmatprep.subr.mxu0 0.0
    %4966 = vmatpush2.msra.mxu0 0.0
    %4967 = vmatprep.subr.mxu0 0.0
    %4968 = vmatpush2.msra.mxu0 0.0
    %4969 = vmatprep.subr.mxu0 0.0
    %4970 = vmatpush2.msra.mxu0 0.0
    %4971 = vmatprep.subr.mxu0 0.0
    %4972 = vmatpush2.msra.mxu0 0.0
    %4973 = vmatprep.subr.mxu0 0.0
    %4974 = vmatpush2.msra.mxu0 0.0
    %4975 = vmatprep.mubr.f32.mxu0 0.0
    %v4976 = vand.u32 %v4652, 4294901760
    %v4977 = vsub.f32 %v4652, %v4976
    %v4978 = vand.u32 %v4977, 4294901760
    %4979 = vmatmul.mubr.f32.gmra.mxu0 %v4978
    %v4980 = vpop.f32.mrf.mxu0
    %v4981 = vadd.f32 %v4903, %v4980
    %v4982 = vpop.f32.mrf.mxu0
    %v4983 = vadd.f32 %v4905, %v4982
    %4984 = vdwg.mxu0
    %4985 = vmatprep.subr.mxu0 0.0
    %4986 = vmatpush1.msra.mxu0 0.0
    %4987 = vmatprep.subr.mxu0 0.0
    %4988 = vmatpush1.msra.mxu0 0.0
    %4989 = vmatprep.subr.mxu0 0.0
    %4990 = vmatpush1.msra.mxu0 0.0
    %4991 = vmatprep.subr.mxu0 0.0
    %4992 = vmatpush1.msra.mxu0 0.0
    %4993 = vmatprep.subr.mxu0 0.0
    %4994 = vmatpush1.msra.mxu0 0.0
    %4995 = vmatprep.subr.mxu0 0.0
    %4996 = vmatpush1.msra.mxu0 0.0
    %4997 = vmatprep.subr.mxu0 0.0
    %4998 = vmatpush1.msra.mxu0 0.0
    %4999 = vmatprep.subr.mxu0 0.0
    %5000 = vmatpush1.msra.mxu0 0.0
    %5001 = vmatprep.subr.mxu0 0.0
    %5002 = vmatpush1.msra.mxu0 0.0
    %5003 = vmatprep.subr.mxu0 0.0
    %5004 = vmatpush1.msra.mxu0 0.0
    %5005 = vmatprep.subr.mxu0 0.0
    %5006 = vmatpush1.msra.mxu0 0.0
    %5007 = vmatprep.subr.mxu0 0.0
    %5008 = vmatpush1.msra.mxu0 0.0
    %5009 = vmatprep.subr.mxu0 0.0
    %5010 = vmatpush1.msra.mxu0 0.0
    %5011 = vmatprep.subr.mxu0 0.0
    %5012 = vmatpush1.msra.mxu0 0.0
    %v5013 = vand.u32 %v4647, 4294901760
    %v5014 = vsub.f32 %v4647, %v5013
    %v5015 = vand.u32 %v5014, 4294901760
    %5016 = vmatprep.subr.mxu0 %v5015
    %v5017 = vand.u32 %v4648, 4294901760
    %v5018 = vsub.f32 %v4648, %v5017
    %v5019 = vand.u32 %v5018, 4294901760
    %5020 = vmatpush1.msra.mxu0 %v5019
    %v5021 = vand.u32 %v4634, 4294901760
    %v5022 = vsub.f32 %v4634, %v5021
    %v5023 = vand.u32 %v5022, 4294901760
    %5024 = vmatprep.subr.mxu0 %v5023
    %v5025 = vand.u32 %v4633, 4294901760
    %v5026 = vsub.f32 %v4633, %v5025
    %v5027 = vand.u32 %v5026, 4294901760
    %5028 = vmatpush1.msra.mxu0 %v5027
    %5029 = vmatprep.subr.mxu0 0.0
    %5030 = vmatpush2.msra.mxu0 0.0
    %5031 = vmatprep.subr.mxu0 0.0
    %5032 = vmatpush2.msra.mxu0 0.0
    %5033 = vmatprep.subr.mxu0 0.0
    %5034 = vmatpush2.msra.mxu0 0.0
    %5035 = vmatprep.subr.mxu0 0.0
    %5036 = vmatpush2.msra.mxu0 0.0
    %5037 = vmatprep.subr.mxu0 0.0
    %5038 = vmatpush2.msra.mxu0 0.0
    %5039 = vmatprep.subr.mxu0 0.0
    %5040 = vmatpush2.msra.mxu0 0.0
    %5041 = vmatprep.subr.mxu0 0.0
    %5042 = vmatpush2.msra.mxu0 0.0
    %5043 = vmatprep.subr.mxu0 0.0
    %5044 = vmatpush2.msra.mxu0 0.0
    %5045 = vmatprep.subr.mxu0 0.0
    %5046 = vmatpush2.msra.mxu0 0.0
    %5047 = vmatprep.subr.mxu0 0.0
    %5048 = vmatpush2.msra.mxu0 0.0
    %5049 = vmatprep.subr.mxu0 0.0
    %5050 = vmatpush2.msra.mxu0 0.0
    %5051 = vmatprep.subr.mxu0 0.0
    %5052 = vmatpush2.msra.mxu0 0.0
    %5053 = vmatprep.subr.mxu0 0.0
    %5054 = vmatpush2.msra.mxu0 0.0
    %5055 = vmatprep.subr.mxu0 0.0
    %5056 = vmatpush2.msra.mxu0 0.0
    %5057 = vmatprep.subr.mxu0 0.0
    %5058 = vmatpush2.msra.mxu0 0.0
    %5059 = vmatprep.subr.mxu0 0.0
    %5060 = vmatpush2.msra.mxu0 0.0
    %5061 = vmatprep.mubr.f32.mxu0 0.0
    %v5062 = vand.u32 %v4652, 4294901760
    %5063 = vmatmul.mubr.f32.gmra.mxu0 %v5062
    %v5064 = vpop.f32.mrf.mxu0
    %v5065 = vadd.f32 %v4981, %v5064
    %v5066 = vpop.f32.mrf.mxu0
    %v5067 = vadd.f32 %v4983, %v5066
    %5068 = vdwg.mxu0
    %5069 = vmatprep.subr.mxu0 0.0
    %5070 = vmatpush1.msra.mxu0 0.0
    %5071 = vmatprep.subr.mxu0 0.0
    %5072 = vmatpush1.msra.mxu0 0.0
    %5073 = vmatprep.subr.mxu0 0.0
    %5074 = vmatpush1.msra.mxu0 0.0
    %5075 = vmatprep.subr.mxu0 0.0
    %5076 = vmatpush1.msra.mxu0 0.0
    %5077 = vmatprep.subr.mxu0 0.0
    %5078 = vmatpush1.msra.mxu0 0.0
    %5079 = vmatprep.subr.mxu0 0.0
    %5080 = vmatpush1.msra.mxu0 0.0
    %5081 = vmatprep.subr.mxu0 0.0
    %5082 = vmatpush1.msra.mxu0 0.0
    %5083 = vmatprep.subr.mxu0 0.0
    %5084 = vmatpush1.msra.mxu0 0.0
    %5085 = vmatprep.subr.mxu0 0.0
    %5086 = vmatpush1.msra.mxu0 0.0
    %5087 = vmatprep.subr.mxu0 0.0
    %5088 = vmatpush1.msra.mxu0 0.0
    %5089 = vmatprep.subr.mxu0 0.0
    %5090 = vmatpush1.msra.mxu0 0.0
    %5091 = vmatprep.subr.mxu0 0.0
    %5092 = vmatpush1.msra.mxu0 0.0
    %5093 = vmatprep.subr.mxu0 0.0
    %5094 = vmatpush1.msra.mxu0 0.0
    %5095 = vmatprep.subr.mxu0 1.0
    %5096 = vmatpush1.msra.mxu0 1.0
    %v5097 = vand.u32 %v4647, 4294901760
    %5098 = vmatprep.subr.mxu0 %v5097
    %v5099 = vand.u32 %v4648, 4294901760
    %5100 = vmatpush1.msra.mxu0 %v5099
    %v5101 = vand.u32 %v4634, 4294901760
    %5102 = vmatprep.subr.mxu0 %v5101
    %v5103 = vand.u32 %v4633, 4294901760
    %5104 = vmatpush1.msra.mxu0 %v5103
    %5105 = vmatprep.subr.mxu0 0.0
    %5106 = vmatpush2.msra.mxu0 0.0
    %5107 = vmatprep.subr.mxu0 0.0
    %5108 = vmatpush2.msra.mxu0 0.0
    %5109 = vmatprep.subr.mxu0 0.0
    %5110 = vmatpush2.msra.mxu0 0.0
    %5111 = vmatprep.subr.mxu0 0.0
    %5112 = vmatpush2.msra.mxu0 0.0
    %5113 = vmatprep.subr.mxu0 0.0
    %5114 = vmatpush2.msra.mxu0 0.0
    %5115 = vmatprep.subr.mxu0 0.0
    %5116 = vmatpush2.msra.mxu0 0.0
    %5117 = vmatprep.subr.mxu0 0.0
    %5118 = vmatpush2.msra.mxu0 0.0
    %5119 = vmatprep.subr.mxu0 0.0
    %5120 = vmatpush2.msra.mxu0 0.0
    %5121 = vmatprep.subr.mxu0 0.0
    %5122 = vmatpush2.msra.mxu0 0.0
    %5123 = vmatprep.subr.mxu0 0.0
    %5124 = vmatpush2.msra.mxu0 0.0
    %5125 = vmatprep.subr.mxu0 0.0
    %5126 = vmatpush2.msra.mxu0 0.0
    %5127 = vmatprep.subr.mxu0 0.0
    %5128 = vmatpush2.msra.mxu0 0.0
    %5129 = vmatprep.subr.mxu0 0.0
    %5130 = vmatpush2.msra.mxu0 0.0
    %5131 = vmatprep.subr.mxu0 0.0
    %5132 = vmatpush2.msra.mxu0 0.0
    %5133 = vmatprep.subr.mxu0 0.0
    %5134 = vmatpush2.msra.mxu0 0.0
    %5135 = vmatprep.subr.mxu0 0.0
    %5136 = vmatpush2.msra.mxu0 0.0
    %5137 = vmatprep.mubr.f32.mxu0 0.0
    %v5138 = vand.u32 %v4652, 4294901760
    %5139 = vmatmul.mubr.f32.gmra.mxu0 %v5138
    %v5140 = vpop.f32.mrf.mxu0
    %v5141 = vadd.f32 %v5065, %v5140
    %v5142 = vpop.f32.mrf.mxu0
    %v5143 = vadd.f32 %v5067, %v5142
    %5144 = vdwg.mxu0
    %5145 = vmatprep.subr.mxu0 0.0
    %5146 = vmatpush1.msra.mxu0 0.0
    %5147 = vmatprep.subr.mxu0 0.0
    %5148 = vmatpush1.msra.mxu0 0.0
    %5149 = vmatprep.subr.mxu0 0.0
    %5150 = vmatpush1.msra.mxu0 0.0
    %5151 = vmatprep.subr.mxu0 0.0
    %5152 = vmatpush1.msra.mxu0 0.0
    %5153 = vmatprep.subr.mxu0 0.0
    %5154 = vmatpush1.msra.mxu0 0.0
    %5155 = vmatprep.subr.mxu0 0.0
    %5156 = vmatpush1.msra.mxu0 0.0
    %5157 = vmatprep.subr.mxu0 0.0
    %5158 = vmatpush1.msra.mxu0 0.0
    %5159 = vmatprep.subr.mxu0 0.0
    %5160 = vmatpush1.msra.mxu0 0.0
    %5161 = vmatprep.subr.mxu0 0.0
    %5162 = vmatpush1.msra.mxu0 0.0
    %5163 = vmatprep.subr.mxu0 0.0
    %5164 = vmatpush1.msra.mxu0 0.0
    %5165 = vmatprep.subr.mxu0 0.0
    %5166 = vmatpush1.msra.mxu0 0.0
    %5167 = vmatprep.subr.mxu0 0.0
    %5168 = vmatpush1.msra.mxu0 0.0
    %5169 = vmatprep.subr.mxu0 0.0
    %5170 = vmatpush1.msra.mxu0 0.0
    %5171 = vmatprep.subr.mxu0 1.0
    %5172 = vmatpush1.msra.mxu0 1.0
    %v5173 = vand.u32 %v4645, 4294901760
    %5174 = vmatprep.subr.mxu0 %v5173
    %v5175 = vand.u32 %v4646, 4294901760
    %5176 = vmatpush1.msra.mxu0 %v5175
    %v5177 = vand.u32 %v4636, 4294901760
    %5178 = vmatprep.subr.mxu0 %v5177
    %v5179 = vand.u32 %v4635, 4294901760
    %5180 = vmatpush1.msra.mxu0 %v5179
    %5181 = vmatprep.subr.mxu0 0.0
    %5182 = vmatpush2.msra.mxu0 0.0
    %5183 = vmatprep.subr.mxu0 0.0
    %5184 = vmatpush2.msra.mxu0 0.0
    %5185 = vmatprep.subr.mxu0 0.0
    %5186 = vmatpush2.msra.mxu0 0.0
    %5187 = vmatprep.subr.mxu0 0.0
    %5188 = vmatpush2.msra.mxu0 0.0
    %5189 = vmatprep.subr.mxu0 0.0
    %5190 = vmatpush2.msra.mxu0 0.0
    %5191 = vmatprep.subr.mxu0 0.0
    %5192 = vmatpush2.msra.mxu0 0.0
    %5193 = vmatprep.subr.mxu0 0.0
    %5194 = vmatpush2.msra.mxu0 0.0
    %5195 = vmatprep.subr.mxu0 0.0
    %5196 = vmatpush2.msra.mxu0 0.0
    %5197 = vmatprep.subr.mxu0 0.0
    %5198 = vmatpush2.msra.mxu0 0.0
    %5199 = vmatprep.subr.mxu0 0.0
    %5200 = vmatpush2.msra.mxu0 0.0
    %5201 = vmatprep.subr.mxu0 0.0
    %5202 = vmatpush2.msra.mxu0 0.0
    %5203 = vmatprep.subr.mxu0 0.0
    %5204 = vmatpush2.msra.mxu0 0.0
    %5205 = vmatprep.subr.mxu0 0.0
    %5206 = vmatpush2.msra.mxu0 0.0
    %5207 = vmatprep.subr.mxu0 0.0
    %5208 = vmatpush2.msra.mxu0 0.0
    %5209 = vmatprep.subr.mxu0 0.0
    %5210 = vmatpush2.msra.mxu0 0.0
    %5211 = vmatprep.subr.mxu0 0.0
    %5212 = vmatpush2.msra.mxu0 0.0
    %5213 = vmatprep.mubr.f32.mxu0 0.0
    %v5214 = vand.u32 %v4652, 4294901760
    %v5215 = vsub.f32 %v4652, %v5214
    %v5216 = vand.u32 %v5215, 4294901760
    %v5217 = vsub.f32 %v5215, %v5216
    %v5218 = vand.u32 %v5217, 4294901760
    %5219 = vmatmul.mubr.f32.gmra.mxu0 %v5218
    %v5220 = vpop.f32.mrf.mxu0
    %v5221 = vadd.f32 0.0, %v5220
    %v5222 = vpop.f32.mrf.mxu0
    %v5223 = vadd.f32 0.0, %v5222
    %5224 = vdwg.mxu0
    %5225 = vmatprep.subr.mxu0 0.0
    %5226 = vmatpush1.msra.mxu0 0.0
    %5227 = vmatprep.subr.mxu0 0.0
    %5228 = vmatpush1.msra.mxu0 0.0
    %5229 = vmatprep.subr.mxu0 0.0
    %5230 = vmatpush1.msra.mxu0 0.0
    %5231 = vmatprep.subr.mxu0 0.0
    %5232 = vmatpush1.msra.mxu0 0.0
    %5233 = vmatprep.subr.mxu0 0.0
    %5234 = vmatpush1.msra.mxu0 0.0
    %5235 = vmatprep.subr.mxu0 0.0
    %5236 = vmatpush1.msra.mxu0 0.0
    %5237 = vmatprep.subr.mxu0 0.0
    %5238 = vmatpush1.msra.mxu0 0.0
    %5239 = vmatprep.subr.mxu0 0.0
    %5240 = vmatpush1.msra.mxu0 0.0
    %5241 = vmatprep.subr.mxu0 0.0
    %5242 = vmatpush1.msra.mxu0 0.0
    %5243 = vmatprep.subr.mxu0 0.0
    %5244 = vmatpush1.msra.mxu0 0.0
    %5245 = vmatprep.subr.mxu0 0.0
    %5246 = vmatpush1.msra.mxu0 0.0
    %5247 = vmatprep.subr.mxu0 0.0
    %5248 = vmatpush1.msra.mxu0 0.0
    %5249 = vmatprep.subr.mxu0 0.0
    %5250 = vmatpush1.msra.mxu0 0.0
    %5251 = vmatprep.subr.mxu0 0.0
    %5252 = vmatpush1.msra.mxu0 0.0
    %v5253 = vand.u32 %v4645, 4294901760
    %v5254 = vsub.f32 %v4645, %v5253
    %v5255 = vand.u32 %v5254, 4294901760
    %v5256 = vsub.f32 %v5254, %v5255
    %v5257 = vand.u32 %v5256, 4294901760
    %5258 = vmatprep.subr.mxu0 %v5257
    %v5259 = vand.u32 %v4646, 4294901760
    %v5260 = vsub.f32 %v4646, %v5259
    %v5261 = vand.u32 %v5260, 4294901760
    %v5262 = vsub.f32 %v5260, %v5261
    %v5263 = vand.u32 %v5262, 4294901760
    %5264 = vmatpush1.msra.mxu0 %v5263
    %v5265 = vand.u32 %v4636, 4294901760
    %v5266 = vsub.f32 %v4636, %v5265
    %v5267 = vand.u32 %v5266, 4294901760
    %v5268 = vsub.f32 %v5266, %v5267
    %v5269 = vand.u32 %v5268, 4294901760
    %5270 = vmatprep.subr.mxu0 %v5269
    %v5271 = vand.u32 %v4635, 4294901760
    %v5272 = vsub.f32 %v4635, %v5271
    %v5273 = vand.u32 %v5272, 4294901760
    %v5274 = vsub.f32 %v5272, %v5273
    %v5275 = vand.u32 %v5274, 4294901760
    %5276 = vmatpush1.msra.mxu0 %v5275
    %5277 = vmatprep.subr.mxu0 0.0
    %5278 = vmatpush2.msra.mxu0 0.0
    %5279 = vmatprep.subr.mxu0 0.0
    %5280 = vmatpush2.msra.mxu0 0.0
    %5281 = vmatprep.subr.mxu0 0.0
    %5282 = vmatpush2.msra.mxu0 0.0
    %5283 = vmatprep.subr.mxu0 0.0
    %5284 = vmatpush2.msra.mxu0 0.0
    %5285 = vmatprep.subr.mxu0 0.0
    %5286 = vmatpush2.msra.mxu0 0.0
    %5287 = vmatprep.subr.mxu0 0.0
    %5288 = vmatpush2.msra.mxu0 0.0
    %5289 = vmatprep.subr.mxu0 0.0
    %5290 = vmatpush2.msra.mxu0 0.0
    %5291 = vmatprep.subr.mxu0 0.0
    %5292 = vmatpush2.msra.mxu0 0.0
    %5293 = vmatprep.subr.mxu0 0.0
    %5294 = vmatpush2.msra.mxu0 0.0
    %5295 = vmatprep.subr.mxu0 0.0
    %5296 = vmatpush2.msra.mxu0 0.0
    %5297 = vmatprep.subr.mxu0 0.0
    %5298 = vmatpush2.msra.mxu0 0.0
    %5299 = vmatprep.subr.mxu0 0.0
    %5300 = vmatpush2.msra.mxu0 0.0
    %5301 = vmatprep.subr.mxu0 0.0
    %5302 = vmatpush2.msra.mxu0 0.0
    %5303 = vmatprep.subr.mxu0 0.0
    %5304 = vmatpush2.msra.mxu0 0.0
    %5305 = vmatprep.subr.mxu0 0.0
    %5306 = vmatpush2.msra.mxu0 0.0
    %5307 = vmatprep.subr.mxu0 0.0
    %5308 = vmatpush2.msra.mxu0 0.0
    %5309 = vmatprep.mubr.f32.mxu0 0.0
    %v5310 = vand.u32 %v4652, 4294901760
    %5311 = vmatmul.mubr.f32.gmra.mxu0 %v5310
    %v5312 = vpop.f32.mrf.mxu0
    %v5313 = vadd.f32 %v5221, %v5312
    %v5314 = vpop.f32.mrf.mxu0
    %v5315 = vadd.f32 %v5223, %v5314
    %5316 = vdwg.mxu0
    %5317 = vmatprep.subr.mxu0 0.0
    %5318 = vmatpush1.msra.mxu0 0.0
    %5319 = vmatprep.subr.mxu0 0.0
    %5320 = vmatpush1.msra.mxu0 0.0
    %5321 = vmatprep.subr.mxu0 0.0
    %5322 = vmatpush1.msra.mxu0 0.0
    %5323 = vmatprep.subr.mxu0 0.0
    %5324 = vmatpush1.msra.mxu0 0.0
    %5325 = vmatprep.subr.mxu0 0.0
    %5326 = vmatpush1.msra.mxu0 0.0
    %5327 = vmatprep.subr.mxu0 0.0
    %5328 = vmatpush1.msra.mxu0 0.0
    %5329 = vmatprep.subr.mxu0 0.0
    %5330 = vmatpush1.msra.mxu0 0.0
    %5331 = vmatprep.subr.mxu0 0.0
    %5332 = vmatpush1.msra.mxu0 0.0
    %5333 = vmatprep.subr.mxu0 0.0
    %5334 = vmatpush1.msra.mxu0 0.0
    %5335 = vmatprep.subr.mxu0 0.0
    %5336 = vmatpush1.msra.mxu0 0.0
    %5337 = vmatprep.subr.mxu0 0.0
    %5338 = vmatpush1.msra.mxu0 0.0
    %5339 = vmatprep.subr.mxu0 0.0
    %5340 = vmatpush1.msra.mxu0 0.0
    %5341 = vmatprep.subr.mxu0 0.0
    %5342 = vmatpush1.msra.mxu0 0.0
    %5343 = vmatprep.subr.mxu0 0.0
    %5344 = vmatpush1.msra.mxu0 0.0
    %v5345 = vand.u32 %v4645, 4294901760
    %v5346 = vsub.f32 %v4645, %v5345
    %5347 = vmatprep.subr.mxu0 %v5346
    %v5348 = vand.u32 %v4646, 4294901760
    %v5349 = vsub.f32 %v4646, %v5348
    %5350 = vmatpush1.msra.mxu0 %v5349
    %v5351 = vand.u32 %v4636, 4294901760
    %v5352 = vsub.f32 %v4636, %v5351
    %5353 = vmatprep.subr.mxu0 %v5352
    %v5354 = vand.u32 %v4635, 4294901760
    %v5355 = vsub.f32 %v4635, %v5354
    %5356 = vmatpush1.msra.mxu0 %v5355
    %5357 = vmatprep.subr.mxu0 0.0
    %5358 = vmatpush2.msra.mxu0 0.0
    %5359 = vmatprep.subr.mxu0 0.0
    %5360 = vmatpush2.msra.mxu0 0.0
    %5361 = vmatprep.subr.mxu0 0.0
    %5362 = vmatpush2.msra.mxu0 0.0
    %5363 = vmatprep.subr.mxu0 0.0
    %5364 = vmatpush2.msra.mxu0 0.0
    %5365 = vmatprep.subr.mxu0 0.0
    %5366 = vmatpush2.msra.mxu0 0.0
    %5367 = vmatprep.subr.mxu0 0.0
    %5368 = vmatpush2.msra.mxu0 0.0
    %5369 = vmatprep.subr.mxu0 0.0
    %5370 = vmatpush2.msra.mxu0 0.0
    %5371 = vmatprep.subr.mxu0 0.0
    %5372 = vmatpush2.msra.mxu0 0.0
    %5373 = vmatprep.subr.mxu0 0.0
    %5374 = vmatpush2.msra.mxu0 0.0
    %5375 = vmatprep.subr.mxu0 0.0
    %5376 = vmatpush2.msra.mxu0 0.0
    %5377 = vmatprep.subr.mxu0 0.0
    %5378 = vmatpush2.msra.mxu0 0.0
    %5379 = vmatprep.subr.mxu0 0.0
    %5380 = vmatpush2.msra.mxu0 0.0
    %5381 = vmatprep.subr.mxu0 0.0
    %5382 = vmatpush2.msra.mxu0 0.0
    %5383 = vmatprep.subr.mxu0 0.0
    %5384 = vmatpush2.msra.mxu0 0.0
    %5385 = vmatprep.subr.mxu0 0.0
    %5386 = vmatpush2.msra.mxu0 0.0
    %5387 = vmatprep.subr.mxu0 0.0
    %5388 = vmatpush2.msra.mxu0 0.0
    %5389 = vmatprep.mubr.f32.mxu0 0.0
    %v5390 = vand.u32 %v4652, 4294901760
    %v5391 = vsub.f32 %v4652, %v5390
    %5392 = vmatmul.mubr.f32.gmra.mxu0 %v5391
    %v5393 = vpop.f32.mrf.mxu0
    %v5394 = vadd.f32 %v5313, %v5393
    %v5395 = vpop.f32.mrf.mxu0
    %v5396 = vadd.f32 %v5315, %v5395
    %5397 = vdwg.mxu0
    %5398 = vmatprep.subr.mxu0 0.0
    %5399 = vmatpush1.msra.mxu0 0.0
    %5400 = vmatprep.subr.mxu0 0.0
    %5401 = vmatpush1.msra.mxu0 0.0
    %5402 = vmatprep.subr.mxu0 0.0
    %5403 = vmatpush1.msra.mxu0 0.0
    %5404 = vmatprep.subr.mxu0 0.0
    %5405 = vmatpush1.msra.mxu0 0.0
    %5406 = vmatprep.subr.mxu0 0.0
    %5407 = vmatpush1.msra.mxu0 0.0
    %5408 = vmatprep.subr.mxu0 0.0
    %5409 = vmatpush1.msra.mxu0 0.0
    %5410 = vmatprep.subr.mxu0 0.0
    %5411 = vmatpush1.msra.mxu0 0.0
    %5412 = vmatprep.subr.mxu0 0.0
    %5413 = vmatpush1.msra.mxu0 0.0
    %5414 = vmatprep.subr.mxu0 0.0
    %5415 = vmatpush1.msra.mxu0 0.0
    %5416 = vmatprep.subr.mxu0 0.0
    %5417 = vmatpush1.msra.mxu0 0.0
    %5418 = vmatprep.subr.mxu0 0.0
    %5419 = vmatpush1.msra.mxu0 0.0
    %5420 = vmatprep.subr.mxu0 0.0
    %5421 = vmatpush1.msra.mxu0 0.0
    %5422 = vmatprep.subr.mxu0 0.0
    %5423 = vmatpush1.msra.mxu0 0.0
    %5424 = vmatprep.subr.mxu0 1.0
    %5425 = vmatpush1.msra.mxu0 1.0
    %v5426 = vand.u32 %v4645, 4294901760
    %5427 = vmatprep.subr.mxu0 %v5426
    %v5428 = vand.u32 %v4646, 4294901760
    %5429 = vmatpush1.msra.mxu0 %v5428
    %v5430 = vand.u32 %v4636, 4294901760
    %5431 = vmatprep.subr.mxu0 %v5430
    %v5432 = vand.u32 %v4635, 4294901760
    %5433 = vmatpush1.msra.mxu0 %v5432
    %5434 = vmatprep.subr.mxu0 0.0
    %5435 = vmatpush2.msra.mxu0 0.0
    %5436 = vmatprep.subr.mxu0 0.0
    %5437 = vmatpush2.msra.mxu0 0.0
    %5438 = vmatprep.subr.mxu0 0.0
    %5439 = vmatpush2.msra.mxu0 0.0
    %5440 = vmatprep.subr.mxu0 0.0
    %5441 = vmatpush2.msra.mxu0 0.0
    %5442 = vmatprep.subr.mxu0 0.0
    %5443 = vmatpush2.msra.mxu0 0.0
    %5444 = vmatprep.subr.mxu0 0.0
    %5445 = vmatpush2.msra.mxu0 0.0
    %5446 = vmatprep.subr.mxu0 0.0
    %5447 = vmatpush2.msra.mxu0 0.0
    %5448 = vmatprep.subr.mxu0 0.0
    %5449 = vmatpush2.msra.mxu0 0.0
    %5450 = vmatprep.subr.mxu0 0.0
    %5451 = vmatpush2.msra.mxu0 0.0
    %5452 = vmatprep.subr.mxu0 0.0
    %5453 = vmatpush2.msra.mxu0 0.0
    %5454 = vmatprep.subr.mxu0 0.0
    %5455 = vmatpush2.msra.mxu0 0.0
    %5456 = vmatprep.subr.mxu0 0.0
    %5457 = vmatpush2.msra.mxu0 0.0
    %5458 = vmatprep.subr.mxu0 0.0
    %5459 = vmatpush2.msra.mxu0 0.0
    %5460 = vmatprep.subr.mxu0 0.0
    %5461 = vmatpush2.msra.mxu0 0.0
    %5462 = vmatprep.subr.mxu0 0.0
    %5463 = vmatpush2.msra.mxu0 0.0
    %5464 = vmatprep.subr.mxu0 0.0
    %5465 = vmatpush2.msra.mxu0 0.0
    %5466 = vmatprep.mubr.f32.mxu0 0.0
    %v5467 = vand.u32 %v4652, 4294901760
    %v5468 = vsub.f32 %v4652, %v5467
    %v5469 = vand.u32 %v5468, 4294901760
    %5470 = vmatmul.mubr.f32.gmra.mxu0 %v5469
    %v5471 = vpop.f32.mrf.mxu0
    %v5472 = vadd.f32 %v5394, %v5471
    %v5473 = vpop.f32.mrf.mxu0
    %v5474 = vadd.f32 %v5396, %v5473
    %5475 = vdwg.mxu0
    %5476 = vmatprep.subr.mxu0 0.0
    %5477 = vmatpush1.msra.mxu0 0.0
    %5478 = vmatprep.subr.mxu0 0.0
    %5479 = vmatpush1.msra.mxu0 0.0
    %5480 = vmatprep.subr.mxu0 0.0
    %5481 = vmatpush1.msra.mxu0 0.0
    %5482 = vmatprep.subr.mxu0 0.0
    %5483 = vmatpush1.msra.mxu0 0.0
    %5484 = vmatprep.subr.mxu0 0.0
    %5485 = vmatpush1.msra.mxu0 0.0
    %5486 = vmatprep.subr.mxu0 0.0
    %5487 = vmatpush1.msra.mxu0 0.0
    %5488 = vmatprep.subr.mxu0 0.0
    %5489 = vmatpush1.msra.mxu0 0.0
    %5490 = vmatprep.subr.mxu0 0.0
    %5491 = vmatpush1.msra.mxu0 0.0
    %5492 = vmatprep.subr.mxu0 0.0
    %5493 = vmatpush1.msra.mxu0 0.0
    %5494 = vmatprep.subr.mxu0 0.0
    %5495 = vmatpush1.msra.mxu0 0.0
    %5496 = vmatprep.subr.mxu0 0.0
    %5497 = vmatpush1.msra.mxu0 0.0
    %5498 = vmatprep.subr.mxu0 0.0
    %5499 = vmatpush1.msra.mxu0 0.0
    %5500 = vmatprep.subr.mxu0 0.0
    %5501 = vmatpush1.msra.mxu0 0.0
    %5502 = vmatprep.subr.mxu0 0.0
    %5503 = vmatpush1.msra.mxu0 0.0
    %v5504 = vand.u32 %v4645, 4294901760
    %v5505 = vsub.f32 %v4645, %v5504
    %v5506 = vand.u32 %v5505, 4294901760
    %5507 = vmatprep.subr.mxu0 %v5506
    %v5508 = vand.u32 %v4646, 4294901760
    %v5509 = vsub.f32 %v4646, %v5508
    %v5510 = vand.u32 %v5509, 4294901760
    %5511 = vmatpush1.msra.mxu0 %v5510
    %v5512 = vand.u32 %v4636, 4294901760
    %v5513 = vsub.f32 %v4636, %v5512
    %v5514 = vand.u32 %v5513, 4294901760
    %5515 = vmatprep.subr.mxu0 %v5514
    %v5516 = vand.u32 %v4635, 4294901760
    %v5517 = vsub.f32 %v4635, %v5516
    %v5518 = vand.u32 %v5517, 4294901760
    %5519 = vmatpush1.msra.mxu0 %v5518
    %5520 = vmatprep.subr.mxu0 0.0
    %5521 = vmatpush2.msra.mxu0 0.0
    %5522 = vmatprep.subr.mxu0 0.0
    %5523 = vmatpush2.msra.mxu0 0.0
    %5524 = vmatprep.subr.mxu0 0.0
    %5525 = vmatpush2.msra.mxu0 0.0
    %5526 = vmatprep.subr.mxu0 0.0
    %5527 = vmatpush2.msra.mxu0 0.0
    %5528 = vmatprep.subr.mxu0 0.0
    %5529 = vmatpush2.msra.mxu0 0.0
    %5530 = vmatprep.subr.mxu0 0.0
    %5531 = vmatpush2.msra.mxu0 0.0
    %5532 = vmatprep.subr.mxu0 0.0
    %5533 = vmatpush2.msra.mxu0 0.0
    %5534 = vmatprep.subr.mxu0 0.0
    %5535 = vmatpush2.msra.mxu0 0.0
    %5536 = vmatprep.subr.mxu0 0.0
    %5537 = vmatpush2.msra.mxu0 0.0
    %5538 = vmatprep.subr.mxu0 0.0
    %5539 = vmatpush2.msra.mxu0 0.0
    %5540 = vmatprep.subr.mxu0 0.0
    %5541 = vmatpush2.msra.mxu0 0.0
    %5542 = vmatprep.subr.mxu0 0.0
    %5543 = vmatpush2.msra.mxu0 0.0
    %5544 = vmatprep.subr.mxu0 0.0
    %5545 = vmatpush2.msra.mxu0 0.0
    %5546 = vmatprep.subr.mxu0 0.0
    %5547 = vmatpush2.msra.mxu0 0.0
    %5548 = vmatprep.subr.mxu0 0.0
    %5549 = vmatpush2.msra.mxu0 0.0
    %5550 = vmatprep.subr.mxu0 0.0
    %5551 = vmatpush2.msra.mxu0 0.0
    %5552 = vmatprep.mubr.f32.mxu0 0.0
    %v5553 = vand.u32 %v4652, 4294901760
    %5554 = vmatmul.mubr.f32.gmra.mxu0 %v5553
    %v5555 = vpop.f32.mrf.mxu0
    %v5556 = vadd.f32 %v5472, %v5555
    %v5557 = vpop.f32.mrf.mxu0
    %v5558 = vadd.f32 %v5474, %v5557
    %5559 = vdwg.mxu0
    %5560 = vmatprep.subr.mxu0 0.0
    %5561 = vmatpush1.msra.mxu0 0.0
    %5562 = vmatprep.subr.mxu0 0.0
    %5563 = vmatpush1.msra.mxu0 0.0
    %5564 = vmatprep.subr.mxu0 0.0
    %5565 = vmatpush1.msra.mxu0 0.0
    %5566 = vmatprep.subr.mxu0 0.0
    %5567 = vmatpush1.msra.mxu0 0.0
    %5568 = vmatprep.subr.mxu0 0.0
    %5569 = vmatpush1.msra.mxu0 0.0
    %5570 = vmatprep.subr.mxu0 0.0
    %5571 = vmatpush1.msra.mxu0 0.0
    %5572 = vmatprep.subr.mxu0 0.0
    %5573 = vmatpush1.msra.mxu0 0.0
    %5574 = vmatprep.subr.mxu0 0.0
    %5575 = vmatpush1.msra.mxu0 0.0
    %5576 = vmatprep.subr.mxu0 0.0
    %5577 = vmatpush1.msra.mxu0 0.0
    %5578 = vmatprep.subr.mxu0 0.0
    %5579 = vmatpush1.msra.mxu0 0.0
    %5580 = vmatprep.subr.mxu0 0.0
    %5581 = vmatpush1.msra.mxu0 0.0
    %5582 = vmatprep.subr.mxu0 0.0
    %5583 = vmatpush1.msra.mxu0 0.0
    %5584 = vmatprep.subr.mxu0 0.0
    %5585 = vmatpush1.msra.mxu0 0.0
    %5586 = vmatprep.subr.mxu0 1.0
    %5587 = vmatpush1.msra.mxu0 1.0
    %v5588 = vand.u32 %v4645, 4294901760
    %5589 = vmatprep.subr.mxu0 %v5588
    %v5590 = vand.u32 %v4646, 4294901760
    %5591 = vmatpush1.msra.mxu0 %v5590
    %v5592 = vand.u32 %v4636, 4294901760
    %5593 = vmatprep.subr.mxu0 %v5592
    %v5594 = vand.u32 %v4635, 4294901760
    %5595 = vmatpush1.msra.mxu0 %v5594
    %5596 = vmatprep.subr.mxu0 0.0
    %5597 = vmatpush2.msra.mxu0 0.0
    %5598 = vmatprep.subr.mxu0 0.0
    %5599 = vmatpush2.msra.mxu0 0.0
    %5600 = vmatprep.subr.mxu0 0.0
    %5601 = vmatpush2.msra.mxu0 0.0
    %5602 = vmatprep.subr.mxu0 0.0
    %5603 = vmatpush2.msra.mxu0 0.0
    %5604 = vmatprep.subr.mxu0 0.0
    %5605 = vmatpush2.msra.mxu0 0.0
    %5606 = vmatprep.subr.mxu0 0.0
    %5607 = vmatpush2.msra.mxu0 0.0
    %5608 = vmatprep.subr.mxu0 0.0
    %5609 = vmatpush2.msra.mxu0 0.0
    %5610 = vmatprep.subr.mxu0 0.0
    %5611 = vmatpush2.msra.mxu0 0.0
    %5612 = vmatprep.subr.mxu0 0.0
    %5613 = vmatpush2.msra.mxu0 0.0
    %5614 = vmatprep.subr.mxu0 0.0
    %5615 = vmatpush2.msra.mxu0 0.0
    %5616 = vmatprep.subr.mxu0 0.0
    %5617 = vmatpush2.msra.mxu0 0.0
    %5618 = vmatprep.subr.mxu0 0.0
    %5619 = vmatpush2.msra.mxu0 0.0
    %5620 = vmatprep.subr.mxu0 0.0
    %5621 = vmatpush2.msra.mxu0 0.0
    %5622 = vmatprep.subr.mxu0 0.0
    %5623 = vmatpush2.msra.mxu0 0.0
    %5624 = vmatprep.subr.mxu0 0.0
    %5625 = vmatpush2.msra.mxu0 0.0
    %5626 = vmatprep.subr.mxu0 0.0
    %5627 = vmatpush2.msra.mxu0 0.0
    %5628 = vmatprep.mubr.f32.mxu0 0.0
    %v5629 = vand.u32 %v4652, 4294901760
    %5630 = vmatmul.mubr.f32.gmra.mxu0 %v5629
    %v5631 = vpop.f32.mrf.mxu0
    %v5632 = vadd.f32 %v5556, %v5631
    %v5633 = vpop.f32.mrf.mxu0
    %v5634 = vadd.f32 %v5558, %v5633
    %5635 = vdwg.mxu0
    %v5636 = vmul.f32 %v5141, 0.5
    %v5637 = vmul.f32 %v5143, 0.5
    %v5638 = vmul.f32 %v5632, 0.5
    %v5639 = vmul.f32 %v5634, 0.5
    %v5640 = vmul.f32 %v5141, 0.70710677
    %v5641 = vmul.f32 %v5143, 0.70710677
    %v5642 = vmul.f32 %v5632, 0.70710677
    %v5643 = vmul.f32 %v5634, 0.70710677
    %vm5644 = vcmp.ge.f32.partialorder %v5640, 0.0
    %vm5645 = vcmp.ge.f32.partialorder %v5641, 0.0
    %vm5646 = vcmp.ge.f32.partialorder %v5642, 0.0
    %vm5647 = vcmp.ge.f32.partialorder %v5643, 0.0
    %v5648 = vsel %vm5644, 1.0, -1.0
    %v5649 = vsel %vm5645, 1.0, -1.0
    %v5650 = vsel %vm5646, 1.0, -1.0
    %v5651 = vsel %vm5647, 1.0, -1.0
    %v5652 = vand.u32 2147483647, %v5640
    %v5653 = vand.u32 2147483647, %v5641
    %v5654 = vand.u32 2147483647, %v5642
    %v5655 = vand.u32 2147483647, %v5643
    %v5656 = vmul.f32 %v5652, 0.3275911
    %v5657 = vmul.f32 %v5653, 0.3275911
    %v5658 = vmul.f32 %v5654, 0.3275911
    %v5659 = vmul.f32 %v5655, 0.3275911
    %v5660 = vadd.f32 %v5656, 1.0
    %v5661 = vadd.f32 %v5657, 1.0
    %v5662 = vadd.f32 %v5658, 1.0
    %v5663 = vadd.f32 %v5659, 1.0
    %v5664 = vrcp.pop %v5660
    %v5665 = vrcp.pop %v5661
    %v5666 = vrcp.pop %v5662
    %v5667 = vrcp.pop %v5663
    %v5668 = vmul.f32 %v5664, 1.0614054
    %v5669 = vmul.f32 %v5665, 1.0614054
    %v5670 = vmul.f32 %v5666, 1.0614054
    %v5671 = vmul.f32 %v5667, 1.0614054
    %v5672 = vadd.f32 %v5668, -1.4531521
    %v5673 = vadd.f32 %v5669, -1.4531521
    %v5674 = vadd.f32 %v5670, -1.4531521
    %v5675 = vadd.f32 %v5671, -1.4531521
    %v5676 = vmul.f32 %v5672, %v5664
    %v5677 = vmul.f32 %v5673, %v5665
    %v5678 = vmul.f32 %v5674, %v5666
    %v5679 = vmul.f32 %v5675, %v5667
    %v5680 = vadd.f32 %v5676, 1.4214138
    %v5681 = vadd.f32 %v5677, 1.4214138
    %v5682 = vadd.f32 %v5678, 1.4214138
    %v5683 = vadd.f32 %v5679, 1.4214138
    %v5684 = vmul.f32 %v5680, %v5664
    %v5685 = vmul.f32 %v5681, %v5665
    %v5686 = vmul.f32 %v5682, %v5666
    %v5687 = vmul.f32 %v5683, %v5667
    %v5688 = vadd.f32 %v5684, -0.28449672
    %v5689 = vadd.f32 %v5685, -0.28449672
    %v5690 = vadd.f32 %v5686, -0.28449672
    %v5691 = vadd.f32 %v5687, -0.28449672
    %v5692 = vmul.f32 %v5688, %v5664
    %v5693 = vmul.f32 %v5689, %v5665
    %v5694 = vmul.f32 %v5690, %v5666
    %v5695 = vmul.f32 %v5691, %v5667
    %v5696 = vadd.f32 %v5692, 0.2548296
    %v5697 = vadd.f32 %v5693, 0.2548296
    %v5698 = vadd.f32 %v5694, 0.2548296
    %v5699 = vadd.f32 %v5695, 0.2548296
    %v5700 = vmul.f32 %v5696, %v5664
    %v5701 = vmul.f32 %v5697, %v5665
    %v5702 = vmul.f32 %v5698, %v5666
    %v5703 = vmul.f32 %v5699, %v5667
    %v5704 = vsub.f32 0.0, %v5652
    %v5705 = vsub.f32 0.0, %v5653
    %v5706 = vsub.f32 0.0, %v5654
    %v5707 = vsub.f32 0.0, %v5655
    %v5708 = vmul.f32 %v5704, %v5652
    %v5709 = vmul.f32 %v5705, %v5653
    %v5710 = vmul.f32 %v5706, %v5654
    %v5711 = vmul.f32 %v5707, %v5655
    %v5712 = vmul.f32 %v5708, 1.442695
    %v5713 = vpow.pop %v5712
    %v5714 = vmul.f32 %v5709, 1.442695
    %v5715 = vpow.pop %v5714
    %v5716 = vmul.f32 %v5710, 1.442695
    %v5717 = vpow.pop %v5716
    %v5718 = vmul.f32 %v5711, 1.442695
    %v5719 = vpow.pop %v5718
    %v5720 = vmul.f32 %v5700, %v5713
    %v5721 = vmul.f32 %v5701, %v5715
    %v5722 = vmul.f32 %v5702, %v5717
    %v5723 = vmul.f32 %v5703, %v5719
    %v5724 = vsub.f32 1.0, %v5720
    %v5725 = vsub.f32 1.0, %v5721
    %v5726 = vsub.f32 1.0, %v5722
    %v5727 = vsub.f32 1.0, %v5723
    %v5728 = vmul.f32 %v5648, %v5724
    %v5729 = vmul.f32 %v5649, %v5725
    %v5730 = vmul.f32 %v5650, %v5726
    %v5731 = vmul.f32 %v5651, %v5727
    %v5732 = vadd.f32 %v5728, 1.0
    %v5733 = vadd.f32 %v5729, 1.0
    %v5734 = vadd.f32 %v5730, 1.0
    %v5735 = vadd.f32 %v5731, 1.0
    %v5736 = vmul.f32 %v5636, %v5732
    %v5737 = vmul.f32 %v5637, %v5733
    %v5738 = vmul.f32 %v5638, %v5734
    %v5739 = vmul.f32 %v5639, %v5735
    %v5744 = vcombine.low %v5736, %v5737
    %v5745 = vcombine.low %v5738, %v5739
    %v5747 = vunpack.c.l.s4 1983009808
    %v5748 = vunpack.c.0.s8 %v5747
    %v5749 = vlaneseq
    %v5750 = vshrl.u32 %v5749, 7
    %v5751 = vsub.s32 %v5748, %v5750
    %v5752 = vrot.slane %v5744, %v5751
    %v5754 = vunpack.c.l.s4 1983009808
    %v5755 = vunpack.c.0.s8 %v5754
    %v5756 = vlaneseq
    %v5757 = vshrl.u32 %v5756, 7
    %v5758 = vsub.s32 %v5755, %v5757
    %v5759 = vrot.slane %v5745, %v5758
    %v5760 = vcombine.low %v5752, %v5759
    %vm5762 = vcmask 1041408
    %vm5763 = vcmask 1043458
    %vm5764 = vmor %vm5763, %vm5762
    %vm5765 = vcmask 1045508
    %vm5766 = vmor %vm5765, %vm5764
    %vm5767 = vcmask 72710
    %vm5768 = vmor %vm5767, %vm5766
    %5769 = vst.msk [vmem:[#allocation5] sm:$0xff] %vm5768, %v5760
    // Predicated region
    $region26: #{model_forward.1} parent=1 // pred_check
      _
    $region27: #{model_forward.1} parent=1 // pred_check_branch
      %5771 = sbr.rel (0) target = $region29
    $region28: #{model_forward.1} parent=1 // pred_region
      %s5773 = ssub.s32 128, 128
      %5774 = vsyncadd [#allocation4], %s5773
      %s5776 = sshll.u32 [#allocation5], 4
      %s5777 = int_to_ptr.vmem [resolvable:$true] %s5776
      %5779 = dma.vmem_to_hbm [thread:$0]  %s5777, 128, %s5, [#allocation4]
    $region29: #{model_forward.1} parent=1 // pred_fallthru
      _
    // Predicated region
    $region30: #{model_forward.1} parent=1 // pred_check
      _
    $region31: #{model_forward.1} parent=1 // pred_check_branch
      %5781 = sbr.rel (0) target = $region33
    $region32: #{model_forward.1} parent=1 // pred_region
      %5782 = dma.done [#allocation4], 128
    $region33: #{model_forward.1} parent=1 // pred_fallthru
      _
    %5783 = vsyncpa [#allocation3], 1
    %5784 = vsyncpa [#allocation4], 1

</llo_original>
